<compile_context>
chip_gen: v5e
topology: v5e:2x2
jax: 0.10.0
libtpu: 0.0.40
codegen_flags: <defaults>
</compile_context>

<pallas_src>
import functools
import math

import jax
import jax.numpy as jnp
from jax import lax
from jax.experimental import pallas as pl
from jax.experimental.pallas import tpu as pltpu

_IN = 9
_HIDDEN = 180
_N_HIDDEN_LAYERS = 4
_INV_SQRT2 = 1.0 / math.sqrt(2.0)
_SQRT_2_OVER_PI = math.sqrt(2.0 / math.pi)


def _round_up(n, m):
    return (n + m - 1) // m * m


def _has_bf16_vpu():
    """bf16 elementwise is native on v6e/v7x; v2-v5 VPUs/EUPs are f32-only."""
    try:
        kind = jax.devices()[0].device_kind.lower()
    except Exception:
        return False
    return not any(t in kind for t in ("v2", "v3", "v4", "v5"))


def _gelu(x, approx):
    if approx:
        # tanh form: the transcendental goes to the EUP slot (off the VALU).
        return 0.5 * x * (1.0 + jnp.tanh(_SQRT_2_OVER_PI * (x + 0.044715 * x * x * x)))
    # exact erf GELU == torch.nn.GELU() default
    return 0.5 * x * (1.0 + lax.erf(x * _INV_SQRT2))


def _ffnn_kernel(x_ref, w0_ref, b0_ref, wh_ref, bh_ref, wo_ref, bo_ref, o_ref,
                 *, approx_gelu, bf16_elementwise, vpu_output):
    cd = w0_ref.dtype                      # MXU operand dtype (bf16 fast path / f32 exact)
    ad = jnp.bfloat16 if bf16_elementwise else jnp.float32

    # input_layer: contract the feature axis of w0 (180,9) and x (bm,9) -> (180, bm).
    # Feature-major activations keep the batch dimension on the lane axis (no transpose).
    x = x_ref[...].astype(cd)
    h = lax.dot_general(w0_ref[...], x, (((1,), (1,)), ((), ())),
                        preferred_element_type=jnp.float32)
    h = h + b0_ref[...]                    # no activation after input_layer (matches torch)

    # hidden_layers: 4 x (Linear + GELU); weights stacked (4,180,180), biases (4,180,1).
    for l in range(_N_HIDDEN_LAYERS):
        h = jnp.dot(wh_ref[l], h.astype(cd),
                    preferred_element_type=jnp.float32) + bh_ref[l]
        h = _gelu(h.astype(ad), approx_gelu)

    # output_layer (180 -> 1) -> lane-dense (1, bm) tile.
    if vpu_output:
        # Off-MXU path: broadcast-multiply (f32) + sublane reduce.  An M=1 matmul would
        # stream the full bm columns through the systolic array for 0.14% of the FLOPs.
        o = jnp.sum(wo_ref[...] * h, axis=0, keepdims=True) + bo_ref[...]
    else:
        o = lax.dot_general(wo_ref[...].astype(cd), h.astype(cd),
                            (((0,), (0,)), ((), ())),
                            preferred_element_type=jnp.float32) + bo_ref[...]
    o_ref[...] = o.astype(o_ref.dtype)


def positional_ffnn_forward(x, params, *, block_m=4096, use_bf16=True,
                            approx_gelu=True, bf16_elementwise=None,
                            vpu_output=None, vmem_limit_bytes=None):
    """x: (B, 9) float32.  params: PyTorch-layout weights (see init_params).
    Returns (B,) float32, matching PositionalFFNN.forward().

    Defaults are the fast path (bf16 MXU, tanh GELU); pass use_bf16=False,
    approx_gelu=False for exact fp32/erf PyTorch semantics."""
    B, f_in = x.shape
    assert f_in == _IN

    if bf16_elementwise is None:
        bf16_elementwise = use_bf16 and _has_bf16_vpu()
    if vpu_output is None:
        vpu_output = use_bf16           # only worth it once the kernel is MXU-bound
    if vmem_limit_bytes is None:
        # > v5e's 16 MiB scoped default, comfortably < v7x's 64 MiB physical VMEM.
        vmem_limit_bytes = 48 * 1024 * 1024

    # --- batch tile selection (no divisibility requirement on B) ---
    b8 = _round_up(B, 8)
    if block_m >= b8:
        bm = b8                                   # single tile covers the whole batch
    else:
        bm = max(128, (block_m // 128) * 128)     # lane-aligned multi-block tiles
    # v7x megacore: for large batches keep >= 2 "parallel" grid steps so both TCs get work.
    if B >= 1024:
        half = _round_up((B + 1) // 2, 128)
        bm = min(bm, half)
    b_pad = _round_up(B, bm)
    if b_pad != B:
        x = jnp.pad(x, ((0, b_pad - B), (0, 0)))  # cheap: 36 B/row, remainder rows only

    wt = jnp.bfloat16 if use_bf16 else jnp.float32
    w0 = params["w0"].astype(wt)                  # (180, 9)
    wh = params["wh"].astype(wt)                  # (4, 180, 180)
    wo = params["wo"].reshape(_HIDDEN, 1)         # (180, 1); stays f32 for the VPU reduce
    b0, bh, bo = params["b0"], params["bh"], params["bo"]   # biases stay f32

    grid = (b_pad // bm,)
    kernel = functools.partial(_ffnn_kernel, approx_gelu=approx_gelu,
                               bf16_elementwise=bf16_elementwise, vpu_output=vpu_output)

    flops = 2 * b_pad * (_IN * _HIDDEN + _N_HIDDEN_LAYERS * _HIDDEN * _HIDDEN + _HIDDEN)
    transc = _N_HIDDEN_LAYERS * _HIDDEN * b_pad
    wbytes = int(w0.size * w0.dtype.itemsize + wh.size * wh.dtype.itemsize
                 + (wo.size + b0.size + bh.size + bo.size) * 4)
    bytes_accessed = int(b_pad * _IN * 4 + b_pad * 4 + wbytes)

    out = pl.pallas_call(
        kernel,
        grid=grid,
        in_specs=[
            pl.BlockSpec((bm, _IN), lambda i: (i, 0)),                # x tile (streams)
            pl.BlockSpec((_HIDDEN, _IN), lambda i: (0, 0)),           # w0 (VMEM-resident)
            pl.BlockSpec((_HIDDEN, 1), lambda i: (0, 0)),             # b0
            pl.BlockSpec((_N_HIDDEN_LAYERS, _HIDDEN, _HIDDEN),
                         lambda i: (0, 0, 0)),                        # stacked hidden W
            pl.BlockSpec((_N_HIDDEN_LAYERS, _HIDDEN, 1),
                         lambda i: (0, 0, 0)),                        # stacked hidden b
            pl.BlockSpec((_HIDDEN, 1), lambda i: (0, 0)),             # wo (column, f32)
            pl.BlockSpec((1, 1), lambda i: (0, 0)),                   # bo
        ],
        out_specs=pl.BlockSpec((1, bm), lambda i: (0, i)),            # lane-dense output
        out_shape=jax.ShapeDtypeStruct((1, b_pad), jnp.float32),
        compiler_params=pltpu.CompilerParams(
            dimension_semantics=("parallel",),
            vmem_limit_bytes=vmem_limit_bytes),
        cost_estimate=pl.CostEstimate(flops=flops, transcendentals=transc,
                                      bytes_accessed=bytes_accessed),
    )(x, w0, b0, wh, bh, wo, bo)

    return out[0, :B]   # drop padding; == squeeze(1)


def init_params(key):
    """Deterministic synthetic parameters in PyTorch nn.Linear layout
    (weight: (out_features, in_features); bias reshaped to (out_features, 1))."""
    def linear(k, fan_in, fan_out):
        kw, kb = jax.random.split(k)
        bound = 1.0 / math.sqrt(fan_in)   # torch.nn.Linear default init range
        w = jax.random.uniform(kw, (fan_out, fan_in), jnp.float32, -bound, bound)
        b = jax.random.uniform(kb, (fan_out, 1), jnp.float32, -bound, bound)
        return w, b

    keys = jax.random.split(key, 6)
    w0, b0 = linear(keys[0], _IN, _HIDDEN)
    whs, bhs = [], []
    for l in range(_N_HIDDEN_LAYERS):
        w, b = linear(keys[1 + l], _HIDDEN, _HIDDEN)
        whs.append(w)
        bhs.append(b)
    wo, bo = linear(keys[5], _HIDDEN, 1)
    return {"w0": w0, "b0": b0,
            "wh": jnp.stack(whs), "bh": jnp.stack(bhs),
            "wo": wo, "bo": bo}


def _reference_forward(x, params):
    """Pure-JAX fp32 / exact-erf reference == PyTorch PositionalFFNN.forward()."""
    h = x @ params["w0"].T + params["b0"][:, 0]
    for l in range(_N_HIDDEN_LAYERS):
        h = h @ params["wh"][l].T + params["bh"][l, :, 0]
        h = 0.5 * h * (1.0 + lax.erf(h * _INV_SQRT2))
    o = h @ params["wo"].T + params["bo"][:, 0]
    return o[:, 0]


if __name__ == "__main__":
    key = jax.random.PRNGKey(0)
    k_params, k_x = jax.random.split(key)
    params = init_params(k_params)

    # B=300 is deliberately NOT a multiple of any tile size: exercises padding/remainder.
    B = 300
    x = jax.random.normal(k_x, (B, _IN), dtype=jnp.float32)

    y_ref = _reference_forward(x, params)

    # exact path: fp32 MXU + erf GELU == PyTorch semantics (multi-tile grid)
    y_exact = jax.block_until_ready(
        positional_ffnn_forward(x, params, block_m=128,
                                use_bf16=False, approx_gelu=False))
    assert y_exact.shape == (B,)
    assert jnp.allclose(y_exact, y_ref, atol=1e-4, rtol=1e-4), "exact path mismatch"

    # default fast path: bf16 MXU + tanh GELU (+ bf16 elementwise on v6e/v7x), single tile
    y_fast = jax.block_until_ready(positional_ffnn_forward(x, params))
    assert y_fast.shape == (B,)
    assert jnp.allclose(y_fast, y_ref, atol=8e-2, rtol=8e-2), "fast path mismatch"

    # fast path, multi-tile grid (exercises block streaming on the parallel grid axis)
    y_fast_mt = jax.block_until_ready(positional_ffnn_forward(x, params, block_m=128))
    assert jnp.allclose(y_fast_mt, y_ref, atol=8e-2, rtol=8e-2), "fast multi-tile mismatch"

    print("KERNEL_OK")
</pallas_src>

<mosaic_0001>
module attributes {stable_mosaic.version = 11 : i64} {
  func.func @_ffnn_kernel(%arg0: i32, %arg1: memref<128x9xf32, #tpu.memory_space<vmem>>, %arg2: memref<180x9xf32, #tpu.memory_space<vmem>>, %arg3: memref<180x1xf32, #tpu.memory_space<vmem>>, %arg4: memref<4x180x180xf32, #tpu.memory_space<vmem>>, %arg5: memref<4x180x1xf32, #tpu.memory_space<vmem>>, %arg6: memref<180x1xf32, #tpu.memory_space<vmem>>, %arg7: memref<1x1xf32, #tpu.memory_space<vmem>>, %arg8: memref<1x128xf32, #tpu.memory_space<vmem>>) attributes {dimension_semantics = [#tpu.dimension_semantics<parallel>], iteration_bounds = array<i64: 3>, scalar_prefetch = 0 : i64, scratch_operands = 0 : i64, tpu.core_type = #tpu.core_type<tc>, window_params = [{transform_indices = @transform_0, window_bounds = array<i64: 128, 9>}, {pipeline_mode = #tpu.pipeline_mode<synchronous>, transform_indices = @transform_1, window_bounds = array<i64: 180, 9>}, {pipeline_mode = #tpu.pipeline_mode<synchronous>, transform_indices = @transform_2, window_bounds = array<i64: 180, 1>}, {pipeline_mode = #tpu.pipeline_mode<synchronous>, transform_indices = @transform_3, window_bounds = array<i64: 4, 180, 180>}, {pipeline_mode = #tpu.pipeline_mode<synchronous>, transform_indices = @transform_4, window_bounds = array<i64: 4, 180, 1>}, {pipeline_mode = #tpu.pipeline_mode<synchronous>, transform_indices = @transform_5, window_bounds = array<i64: 180, 1>}, {pipeline_mode = #tpu.pipeline_mode<synchronous>, transform_indices = @transform_6, window_bounds = array<i64: 1, 1>}, {transform_indices = @transform_7, window_bounds = array<i64: 1, 128>}]} {
    %c0 = arith.constant 0 : index
    %c0_0 = arith.constant 0 : index
    %0 = vector.load %arg1[%c0, %c0_0] : memref<128x9xf32, #tpu.memory_space<vmem>>, vector<128x9xf32>
    %c0_1 = arith.constant 0 : index
    %c0_2 = arith.constant 0 : index
    %1 = vector.load %arg2[%c0_1, %c0_2] : memref<180x9xf32, #tpu.memory_space<vmem>>, vector<180x9xf32>
    %cst = arith.constant dense<0.000000e+00> : vector<180x128xf32>
    %2 = tpu.matmul %1, %0, %cst {dimension_numbers = #tpu.dot_dimension_numbers<[1], [1], [0], [0], [0, 0, 1, 0], [], []>} : vector<180x9xf32>, vector<128x9xf32>, vector<180x128xf32> -> vector<180x128xf32>
    %c0_3 = arith.constant 0 : index
    %c0_4 = arith.constant 0 : index
    %3 = vector.load %arg3[%c0_3, %c0_4] : memref<180x1xf32, #tpu.memory_space<vmem>>, vector<180x1xf32>
    %4 = vector.broadcast %3 : vector<180x1xf32> to vector<180x128xf32>
    %5 = arith.addf %2, %4 : vector<180x128xf32>
    %c0_5 = arith.constant 0 : index
    %c0_6 = arith.constant 0 : index
    %c0_7 = arith.constant 0 : index
    %6 = vector.load %arg4[%c0_5, %c0_6, %c0_7] : memref<4x180x180xf32, #tpu.memory_space<vmem>>, vector<1x180x180xf32>
    %7 = vector.shape_cast %6 : vector<1x180x180xf32> to vector<180x180xf32>
    %cst_8 = arith.constant dense<0.000000e+00> : vector<180x128xf32>
    %8 = tpu.matmul %7, %5, %cst_8 {dimension_numbers = #tpu.dot_dimension_numbers<[1], [0], [0], [1], [0, 0, 1, 1], [], []>} : vector<180x180xf32>, vector<180x128xf32>, vector<180x128xf32> -> vector<180x128xf32>
    %c0_9 = arith.constant 0 : index
    %c0_10 = arith.constant 0 : index
    %c0_11 = arith.constant 0 : index
    %9 = vector.load %arg5[%c0_9, %c0_10, %c0_11] : memref<4x180x1xf32, #tpu.memory_space<vmem>>, vector<1x180x1xf32>
    %10 = vector.shape_cast %9 : vector<1x180x1xf32> to vector<180x1xf32>
    %11 = vector.broadcast %10 : vector<180x1xf32> to vector<180x128xf32>
    %12 = arith.addf %8, %11 : vector<180x128xf32>
    %cst_12 = arith.constant 5.000000e-01 : f32
    %13 = vector.broadcast %cst_12 : f32 to vector<180x128xf32>
    %14 = arith.mulf %13, %12 : vector<180x128xf32>
    %cst_13 = arith.constant 0.707106769 : f32
    %15 = vector.broadcast %cst_13 : f32 to vector<180x128xf32>
    %16 = arith.mulf %12, %15 : vector<180x128xf32>
    %17 = math.erf %16 : vector<180x128xf32>
    %cst_14 = arith.constant 1.000000e+00 : f32
    %18 = vector.broadcast %cst_14 : f32 to vector<180x128xf32>
    %19 = arith.addf %18, %17 : vector<180x128xf32>
    %20 = arith.mulf %14, %19 : vector<180x128xf32>
    %c1 = arith.constant 1 : index
    %c0_15 = arith.constant 0 : index
    %c0_16 = arith.constant 0 : index
    %21 = vector.load %arg4[%c1, %c0_15, %c0_16] : memref<4x180x180xf32, #tpu.memory_space<vmem>>, vector<1x180x180xf32>
    %22 = vector.shape_cast %21 : vector<1x180x180xf32> to vector<180x180xf32>
    %cst_17 = arith.constant dense<0.000000e+00> : vector<180x128xf32>
    %23 = tpu.matmul %22, %20, %cst_17 {dimension_numbers = #tpu.dot_dimension_numbers<[1], [0], [0], [1], [0, 0, 1, 1], [], []>} : vector<180x180xf32>, vector<180x128xf32>, vector<180x128xf32> -> vector<180x128xf32>
    %c1_18 = arith.constant 1 : index
    %c0_19 = arith.constant 0 : index
    %c0_20 = arith.constant 0 : index
    %24 = vector.load %arg5[%c1_18, %c0_19, %c0_20] : memref<4x180x1xf32, #tpu.memory_space<vmem>>, vector<1x180x1xf32>
    %25 = vector.shape_cast %24 : vector<1x180x1xf32> to vector<180x1xf32>
    %26 = vector.broadcast %25 : vector<180x1xf32> to vector<180x128xf32>
    %27 = arith.addf %23, %26 : vector<180x128xf32>
    %cst_21 = arith.constant 5.000000e-01 : f32
    %28 = vector.broadcast %cst_21 : f32 to vector<180x128xf32>
    %29 = arith.mulf %28, %27 : vector<180x128xf32>
    %cst_22 = arith.constant 0.707106769 : f32
    %30 = vector.broadcast %cst_22 : f32 to vector<180x128xf32>
    %31 = arith.mulf %27, %30 : vector<180x128xf32>
    %32 = math.erf %31 : vector<180x128xf32>
    %cst_23 = arith.constant 1.000000e+00 : f32
    %33 = vector.broadcast %cst_23 : f32 to vector<180x128xf32>
    %34 = arith.addf %33, %32 : vector<180x128xf32>
    %35 = arith.mulf %29, %34 : vector<180x128xf32>
    %c2 = arith.constant 2 : index
    %c0_24 = arith.constant 0 : index
    %c0_25 = arith.constant 0 : index
    %36 = vector.load %arg4[%c2, %c0_24, %c0_25] : memref<4x180x180xf32, #tpu.memory_space<vmem>>, vector<1x180x180xf32>
    %37 = vector.shape_cast %36 : vector<1x180x180xf32> to vector<180x180xf32>
    %cst_26 = arith.constant dense<0.000000e+00> : vector<180x128xf32>
    %38 = tpu.matmul %37, %35, %cst_26 {dimension_numbers = #tpu.dot_dimension_numbers<[1], [0], [0], [1], [0, 0, 1, 1], [], []>} : vector<180x180xf32>, vector<180x128xf32>, vector<180x128xf32> -> vector<180x128xf32>
    %c2_27 = arith.constant 2 : index
    %c0_28 = arith.constant 0 : index
    %c0_29 = arith.constant 0 : index
    %39 = vector.load %arg5[%c2_27, %c0_28, %c0_29] : memref<4x180x1xf32, #tpu.memory_space<vmem>>, vector<1x180x1xf32>
    %40 = vector.shape_cast %39 : vector<1x180x1xf32> to vector<180x1xf32>
    %41 = vector.broadcast %40 : vector<180x1xf32> to vector<180x128xf32>
    %42 = arith.addf %38, %41 : vector<180x128xf32>
    %cst_30 = arith.constant 5.000000e-01 : f32
    %43 = vector.broadcast %cst_30 : f32 to vector<180x128xf32>
    %44 = arith.mulf %43, %42 : vector<180x128xf32>
    %cst_31 = arith.constant 0.707106769 : f32
    %45 = vector.broadcast %cst_31 : f32 to vector<180x128xf32>
    %46 = arith.mulf %42, %45 : vector<180x128xf32>
    %47 = math.erf %46 : vector<180x128xf32>
    %cst_32 = arith.constant 1.000000e+00 : f32
    %48 = vector.broadcast %cst_32 : f32 to vector<180x128xf32>
    %49 = arith.addf %48, %47 : vector<180x128xf32>
    %50 = arith.mulf %44, %49 : vector<180x128xf32>
    %c3 = arith.constant 3 : index
    %c0_33 = arith.constant 0 : index
    %c0_34 = arith.constant 0 : index
    %51 = vector.load %arg4[%c3, %c0_33, %c0_34] : memref<4x180x180xf32, #tpu.memory_space<vmem>>, vector<1x180x180xf32>
    %52 = vector.shape_cast %51 : vector<1x180x180xf32> to vector<180x180xf32>
    %cst_35 = arith.constant dense<0.000000e+00> : vector<180x128xf32>
    %53 = tpu.matmul %52, %50, %cst_35 {dimension_numbers = #tpu.dot_dimension_numbers<[1], [0], [0], [1], [0, 0, 1, 1], [], []>} : vector<180x180xf32>, vector<180x128xf32>, vector<180x128xf32> -> vector<180x128xf32>
    %c3_36 = arith.constant 3 : index
    %c0_37 = arith.constant 0 : index
    %c0_38 = arith.constant 0 : index
    %54 = vector.load %arg5[%c3_36, %c0_37, %c0_38] : memref<4x180x1xf32, #tpu.memory_space<vmem>>, vector<1x180x1xf32>
    %55 = vector.shape_cast %54 : vector<1x180x1xf32> to vector<180x1xf32>
    %56 = vector.broadcast %55 : vector<180x1xf32> to vector<180x128xf32>
    %57 = arith.addf %53, %56 : vector<180x128xf32>
    %cst_39 = arith.constant 5.000000e-01 : f32
    %58 = vector.broadcast %cst_39 : f32 to vector<180x128xf32>
    %59 = arith.mulf %58, %57 : vector<180x128xf32>
    %cst_40 = arith.constant 0.707106769 : f32
    %60 = vector.broadcast %cst_40 : f32 to vector<180x128xf32>
    %61 = arith.mulf %57, %60 : vector<180x128xf32>
    %62 = math.erf %61 : vector<180x128xf32>
    %cst_41 = arith.constant 1.000000e+00 : f32
    %63 = vector.broadcast %cst_41 : f32 to vector<180x128xf32>
    %64 = arith.addf %63, %62 : vector<180x128xf32>
    %65 = arith.mulf %59, %64 : vector<180x128xf32>
    %c0_42 = arith.constant 0 : index
    %c0_43 = arith.constant 0 : index
    %66 = vector.load %arg6[%c0_42, %c0_43] : memref<180x1xf32, #tpu.memory_space<vmem>>, vector<180x1xf32>
    %cst_44 = arith.constant dense<0.000000e+00> : vector<1x128xf32>
    %67 = tpu.matmul %66, %65, %cst_44 {dimension_numbers = #tpu.dot_dimension_numbers<[0], [0], [1], [1], [0, 1, 1, 1], [], []>} : vector<180x1xf32>, vector<180x128xf32>, vector<1x128xf32> -> vector<1x128xf32>
    %c0_45 = arith.constant 0 : index
    %c0_46 = arith.constant 0 : index
    %68 = vector.load %arg7[%c0_45, %c0_46] : memref<1x1xf32, #tpu.memory_space<vmem>>, vector<1x1xf32>
    %69 = vector.broadcast %68 : vector<1x1xf32> to vector<1x128xf32>
    %70 = arith.addf %67, %69 : vector<1x128xf32>
    %c0_47 = arith.constant 0 : index
    %c0_48 = arith.constant 0 : index
    %71 = vector.load %arg8[%c0_47, %c0_48] : memref<1x128xf32, #tpu.memory_space<vmem>>, vector<1x128xf32>
    tpu.vector_store %arg8[%c0_47, %c0_48], %70 {strides = array<i32>} : memref<1x128xf32, #tpu.memory_space<vmem>>, vector<1x128xf32>,
    return
  }
  func.func @transform_0(%arg0: i32) -> (i32, i32) {
    %c0_i32 = arith.constant 0 : i32
    %c0_i32_0 = arith.constant 0 : i32
    return %arg0, %c0_i32 : i32, i32
  }
  func.func @transform_1(%arg0: i32) -> (i32, i32) {
    %c0_i32 = arith.constant 0 : i32
    %c0_i32_0 = arith.constant 0 : i32
    %c0_i32_1 = arith.constant 0 : i32
    return %c0_i32, %c0_i32_0 : i32, i32
  }
  func.func @transform_2(%arg0: i32) -> (i32, i32) {
    %c0_i32 = arith.constant 0 : i32
    %c0_i32_0 = arith.constant 0 : i32
    %c0_i32_1 = arith.constant 0 : i32
    return %c0_i32, %c0_i32_0 : i32, i32
  }
  func.func @transform_3(%arg0: i32) -> (i32, i32, i32) {
    %c0_i32 = arith.constant 0 : i32
    %c0_i32_0 = arith.constant 0 : i32
    %c0_i32_1 = arith.constant 0 : i32
    %c0_i32_2 = arith.constant 0 : i32
    return %c0_i32, %c0_i32_0, %c0_i32_1 : i32, i32, i32
  }
  func.func @transform_4(%arg0: i32) -> (i32, i32, i32) {
    %c0_i32 = arith.constant 0 : i32
    %c0_i32_0 = arith.constant 0 : i32
    %c0_i32_1 = arith.constant 0 : i32
    %c0_i32_2 = arith.constant 0 : i32
    return %c0_i32, %c0_i32_0, %c0_i32_1 : i32, i32, i32
  }
  func.func @transform_5(%arg0: i32) -> (i32, i32) {
    %c0_i32 = arith.constant 0 : i32
    %c0_i32_0 = arith.constant 0 : i32
    %c0_i32_1 = arith.constant 0 : i32
    return %c0_i32, %c0_i32_0 : i32, i32
  }
  func.func @transform_6(%arg0: i32) -> (i32, i32) {
    %c0_i32 = arith.constant 0 : i32
    %c0_i32_0 = arith.constant 0 : i32
    %c0_i32_1 = arith.constant 0 : i32
    return %c0_i32, %c0_i32_0 : i32, i32
  }
  func.func @transform_7(%arg0: i32) -> (i32, i32) {
    %c0_i32 = arith.constant 0 : i32
    %c0_i32_0 = arith.constant 0 : i32
    return %c0_i32, %arg0 : i32, i32
  }
}

</mosaic_0001>

<llo_original>
// kernel: tpu_custom_call.1
$region0: #{tpu_custom_call.1}
  #allocation0 [shape = 'u32[]', space=smem, size = 0x4, offset = 0x4, fixed_abs, tag = 'smem constant byte address 0x4 - core index']
  #allocation1 [shape = 'u32[72,128]{1,0:T(1,128)}', space=vmem, size = 0x9000, scoped, tag = 'internal scratch']
  #allocation2 [shape = 'f32[1,1]{1,0:T(1,128)S(1)}', space=vmem, size = 0x200, scoped, tag = 'scoped memory for tpu_custom_call.1']
  %s0 = inlined_call_operand.vmem [shape: f32[384,9], index: 0, kind: input, shape index: {}]
  %s1 = inlined_call_operand.vmem [shape: f32[180,9], index: 1, kind: input, shape index: {}]
  %s2 = inlined_call_operand.vmem [shape: f32[180,1], index: 2, kind: input, shape index: {}]
  %s3 = inlined_call_operand.vmem [shape: f32[4,180,180], index: 3, kind: input, shape index: {}]
  %s4 = inlined_call_operand.vmem [shape: f32[4,180,1], index: 4, kind: input, shape index: {}]
  %s5 = inlined_call_operand.vmem [shape: f32[180,1], index: 5, kind: input, shape index: {}]
  %s6 = inlined_call_operand.<no memory space> [shape: f32[1,1], index: 6, kind: input, shape index: {}]
  %s7 = inlined_call_operand.hbm [shape: f32[1,384], index: 7, kind: output, shape index: {}]
  %s8 = sld [smem:[#allocation0]]
  $region61: #{tpu_custom_call.1} parent=0
    _
  %s10 = ssub.s32 1, %s8
  %s11 = scalar_select 0, %s10, %s8
  %v12 = vstv %s6
  %13 = vst [vmem:[#allocation2] sm:$0x1] %v12
  $region1: #{tpu_custom_call.1} parent=0
    #allocation3 [shape = 'u8[1024]{0}', space=vmem, size = 0x400, scoped, tag = 'output window, operand 0']
    #allocation4 [shape = 's32[2]{0}', space=sflag, size = 0x8, scoped, tag = 'scoped memory for tpu_custom_call.1']
    %14 = vsyncpa [#allocation4], 0
    %s15 = scalar_lea.sflag [#allocation4], 1
    %16 = vsyncpa %s15, 0
    loop: start=0, step=1, limit=5
    $region2: #{tpu_custom_call.1} parent=1 // loop_pre_header
      _
    $region3: #{tpu_custom_call.1} parent=1 // loop_header
      %s18 = sphi 0, %s22
      %p19 = scmp.ge.s32.totalorder %s18, 5
      %s28 = sphi 0, %s30
      %s31 = sphi 0, %s28
      %s32 = sphi 0, %s31
      %s48 = sphi 0, %s32
      %s52 = sphi 0, %s52
      %s54 = sphi 0, %s52
      %s55 = sphi 0, %s54
      %s69 = sphi 0, %s55
      %s73 = sphi 0, %s73
      %s75 = sphi 0, %s73
      %s76 = sphi 0, %s75
      %s90 = sphi 0, %s76
      %s94 = sphi 0, %s94
      %s96 = sphi 0, %s94
      %s97 = sphi 0, %s96
      %s111 = sphi 0, %s97
      %s115 = sphi 0, %s115
      %s117 = sphi 0, %s115
      %s118 = sphi 0, %s117
      %s132 = sphi 0, %s118
      %s136 = sphi 0, %s136
      %s138 = sphi 0, %s136
      %s139 = sphi 0, %s138
      %s153 = sphi 0, %s139
      %s157 = sphi 0, %s157
      %s159 = sphi 0, %s157
      %s160 = sphi 0, %s159
      %s174 = sphi 0, %s160
      %s180 = sphi 0, %s182
      %s183 = sphi 0, %s180
      %s184 = sphi 0, %s183
      %s200 = sphi 0, %s184
    $region4: #{tpu_custom_call.1} parent=1 // loop_header_branch
      %21 = sbr.rel (%p19) target = $region8
    $region5: #{tpu_custom_call.1} parent=1 // loop_body
      %s23 = ssub.s32 %s18, 1
      %s24 = ssub.s32 %s18, 2
      %s25 = sadd.s32 %s18, 1
      %s26 = ssub.s32 %s18, %s25
      %p27 = scmp.eq.s32.totalorder %s26, 0
      %s29 = sadd.s32 %s28, 1
      %s30 = scalar_select %p27, %s28, %s29
      %p33 = pneg %p27
      %p34 = scmp.eq.s32.totalorder %s18, 2
      %p35 = por %p33, %p34
      %p36 = scmp.ne.s32.totalorder %s28, %s31
      %p37 = scmp.eq.s32.totalorder %s18, 0
      %p38 = por %p36, %p37
      %p39 = scmp.ne.s32.totalorder %s28, %s31
      %p40 = scmp.eq.s32.totalorder %s23, 2
      %p41 = por %p39, %p40
      %p42 = scmp.ne.s32.totalorder %s31, %s32
      %p43 = scmp.eq.s32.totalorder %s23, 0
      %p44 = por %p42, %p43
      %p45 = scmp.ne.s32.totalorder %s31, %s32
      %p46 = scmp.eq.s32.totalorder %s24, 2
      %p47 = por %p45, %p46
      %p49 = scmp.ne.s32.totalorder %s32, %s48
      %p50 = scmp.eq.s32.totalorder %s24, 0
      %p51 = por %p49, %p50
      %s53 = sadd.s32 %s52, 1
      %p56 = scmp.eq.s32.totalorder %s18, 2
      %p57 = scmp.ne.s32.totalorder %s52, %s54
      %p58 = scmp.eq.s32.totalorder %s18, 0
      %p59 = por %p57, %p58
      %p60 = scmp.ne.s32.totalorder %s52, %s54
      %p61 = scmp.eq.s32.totalorder %s23, 2
      %p62 = por %p60, %p61
      %p63 = scmp.ne.s32.totalorder %s54, %s55
      %p64 = scmp.eq.s32.totalorder %s23, 0
      %p65 = por %p63, %p64
      %p66 = scmp.ne.s32.totalorder %s54, %s55
      %p67 = scmp.eq.s32.totalorder %s24, 2
      %p68 = por %p66, %p67
      %p70 = scmp.ne.s32.totalorder %s55, %s69
      %p71 = scmp.eq.s32.totalorder %s24, 0
      %p72 = por %p70, %p71
      %s74 = sadd.s32 %s73, 1
      %p77 = scmp.eq.s32.totalorder %s18, 2
      %p78 = scmp.ne.s32.totalorder %s73, %s75
      %p79 = scmp.eq.s32.totalorder %s18, 0
      %p80 = por %p78, %p79
      %p81 = scmp.ne.s32.totalorder %s73, %s75
      %p82 = scmp.eq.s32.totalorder %s23, 2
      %p83 = por %p81, %p82
      %p84 = scmp.ne.s32.totalorder %s75, %s76
      %p85 = scmp.eq.s32.totalorder %s23, 0
      %p86 = por %p84, %p85
      %p87 = scmp.ne.s32.totalorder %s75, %s76
      %p88 = scmp.eq.s32.totalorder %s24, 2
      %p89 = por %p87, %p88
      %p91 = scmp.ne.s32.totalorder %s76, %s90
      %p92 = scmp.eq.s32.totalorder %s24, 0
      %p93 = por %p91, %p92
      %s95 = sadd.s32 %s94, 1
      %p98 = scmp.eq.s32.totalorder %s18, 2
      %p99 = scmp.ne.s32.totalorder %s94, %s96
      %p100 = scmp.eq.s32.totalorder %s18, 0
      %p101 = por %p99, %p100
      %p102 = scmp.ne.s32.totalorder %s94, %s96
      %p103 = scmp.eq.s32.totalorder %s23, 2
      %p104 = por %p102, %p103
      %p105 = scmp.ne.s32.totalorder %s96, %s97
      %p106 = scmp.eq.s32.totalorder %s23, 0
      %p107 = por %p105, %p106
      %p108 = scmp.ne.s32.totalorder %s96, %s97
      %p109 = scmp.eq.s32.totalorder %s24, 2
      %p110 = por %p108, %p109
      %p112 = scmp.ne.s32.totalorder %s97, %s111
      %p113 = scmp.eq.s32.totalorder %s24, 0
      %p114 = por %p112, %p113
      %s116 = sadd.s32 %s115, 1
      %p119 = scmp.eq.s32.totalorder %s18, 2
      %p120 = scmp.ne.s32.totalorder %s115, %s117
      %p121 = scmp.eq.s32.totalorder %s18, 0
      %p122 = por %p120, %p121
      %p123 = scmp.ne.s32.totalorder %s115, %s117
      %p124 = scmp.eq.s32.totalorder %s23, 2
      %p125 = por %p123, %p124
      %p126 = scmp.ne.s32.totalorder %s117, %s118
      %p127 = scmp.eq.s32.totalorder %s23, 0
      %p128 = por %p126, %p127
      %p129 = scmp.ne.s32.totalorder %s117, %s118
      %p130 = scmp.eq.s32.totalorder %s24, 2
      %p131 = por %p129, %p130
      %p133 = scmp.ne.s32.totalorder %s118, %s132
      %p134 = scmp.eq.s32.totalorder %s24, 0
      %p135 = por %p133, %p134
      %s137 = sadd.s32 %s136, 1
      %p140 = scmp.eq.s32.totalorder %s18, 2
      %p141 = scmp.ne.s32.totalorder %s136, %s138
      %p142 = scmp.eq.s32.totalorder %s18, 0
      %p143 = por %p141, %p142
      %p144 = scmp.ne.s32.totalorder %s136, %s138
      %p145 = scmp.eq.s32.totalorder %s23, 2
      %p146 = por %p144, %p145
      %p147 = scmp.ne.s32.totalorder %s138, %s139
      %p148 = scmp.eq.s32.totalorder %s23, 0
      %p149 = por %p147, %p148
      %p150 = scmp.ne.s32.totalorder %s138, %s139
      %p151 = scmp.eq.s32.totalorder %s24, 2
      %p152 = por %p150, %p151
      %p154 = scmp.ne.s32.totalorder %s139, %s153
      %p155 = scmp.eq.s32.totalorder %s24, 0
      %p156 = por %p154, %p155
      %s158 = sadd.s32 %s157, 1
      %p161 = scmp.eq.s32.totalorder %s18, 2
      %p162 = scmp.ne.s32.totalorder %s157, %s159
      %p163 = scmp.eq.s32.totalorder %s18, 0
      %p164 = por %p162, %p163
      %p165 = scmp.ne.s32.totalorder %s157, %s159
      %p166 = scmp.eq.s32.totalorder %s23, 2
      %p167 = por %p165, %p166
      %p168 = scmp.ne.s32.totalorder %s159, %s160
      %p169 = scmp.eq.s32.totalorder %s23, 0
      %p170 = por %p168, %p169
      %p171 = scmp.ne.s32.totalorder %s159, %s160
      %p172 = scmp.eq.s32.totalorder %s24, 2
      %p173 = por %p171, %p172
      %p175 = scmp.ne.s32.totalorder %s160, %s174
      %p176 = scmp.eq.s32.totalorder %s24, 0
      %p177 = por %p175, %p176
      %s178 = ssub.s32 %s18, %s25
      %p179 = scmp.eq.s32.totalorder %s178, 0
      %s181 = sadd.s32 %s180, 1
      %s182 = scalar_select %p179, %s180, %s181
      %p185 = pneg %p179
      %p186 = scmp.eq.s32.totalorder %s18, 2
      %p187 = por %p185, %p186
      %p188 = scmp.ne.s32.totalorder %s180, %s183
      %p189 = scmp.eq.s32.totalorder %s18, 0
      %p190 = por %p188, %p189
      %p191 = scmp.ne.s32.totalorder %s180, %s183
      %p192 = scmp.eq.s32.totalorder %s23, 2
      %p193 = por %p191, %p192
      %p194 = scmp.ne.s32.totalorder %s183, %s184
      %p195 = scmp.eq.s32.totalorder %s23, 0
      %p196 = por %p194, %p195
      %p197 = scmp.ne.s32.totalorder %s183, %s184
      %p198 = scmp.eq.s32.totalorder %s24, 2
      %p199 = por %p197, %p198
      %p201 = scmp.ne.s32.totalorder %s184, %s200
      %p202 = scmp.eq.s32.totalorder %s24, 0
      %p203 = por %p201, %p202
      %p204 = scmp.le.s32.totalorder 1, %s18
      %p205 = scmp.lt.s32.totalorder %s18, 4
      %p206 = pnand %p204, %p205
      %p207 = pneg %p206
      // Predicated region
      $region9: #{tpu_custom_call.1} parent=5 // pred_check
        _
      $region10: #{tpu_custom_call.1} parent=5 // pred_check_branch
        %209 = sbr.rel (%p206) target = $region12
      $region11: #{tpu_custom_call.1} parent=5 // pred_region
        %s210 = ssub.s32 %s18, 1
        // Predicated region
        $region13: #{tpu_custom_call.1} parent=11 // pred_check
          %p211 = pneg %p65
        $region14: #{tpu_custom_call.1} parent=11 // pred_check_branch
          %213 = sbr.rel (%p211) target = $region16
        $region15: #{tpu_custom_call.1} parent=11 // pred_region
          _
        $region16: #{tpu_custom_call.1} parent=11 // pred_fallthru
          _
        // Predicated region
        $region17: #{tpu_custom_call.1} parent=11 // pred_check
          %p214 = pneg %p86
        $region18: #{tpu_custom_call.1} parent=11 // pred_check_branch
          %216 = sbr.rel (%p214) target = $region20
        $region19: #{tpu_custom_call.1} parent=11 // pred_region
          _
        $region20: #{tpu_custom_call.1} parent=11 // pred_fallthru
          _
        // Predicated region
        $region21: #{tpu_custom_call.1} parent=11 // pred_check
          %p217 = pneg %p107
        $region22: #{tpu_custom_call.1} parent=11 // pred_check_branch
          %219 = sbr.rel (%p217) target = $region24
        $region23: #{tpu_custom_call.1} parent=11 // pred_region
          _
        $region24: #{tpu_custom_call.1} parent=11 // pred_fallthru
          _
        // Predicated region
        $region25: #{tpu_custom_call.1} parent=11 // pred_check
          %p220 = pneg %p128
        $region26: #{tpu_custom_call.1} parent=11 // pred_check_branch
          %222 = sbr.rel (%p220) target = $region28
        $region27: #{tpu_custom_call.1} parent=11 // pred_region
          _
        $region28: #{tpu_custom_call.1} parent=11 // pred_fallthru
          _
        // Predicated region
        $region29: #{tpu_custom_call.1} parent=11 // pred_check
          %p223 = pneg %p149
        $region30: #{tpu_custom_call.1} parent=11 // pred_check_branch
          %225 = sbr.rel (%p223) target = $region32
        $region31: #{tpu_custom_call.1} parent=11 // pred_region
          _
        $region32: #{tpu_custom_call.1} parent=11 // pred_fallthru
          _
        // Predicated region
        $region33: #{tpu_custom_call.1} parent=11 // pred_check
          %p226 = pneg %p170
        $region34: #{tpu_custom_call.1} parent=11 // pred_check_branch
          %228 = sbr.rel (%p226) target = $region36
        $region35: #{tpu_custom_call.1} parent=11 // pred_region
          _
        $region36: #{tpu_custom_call.1} parent=11 // pred_fallthru
          _
      $region12: #{tpu_custom_call.1} parent=5 // pred_fallthru
        _
      %p229 = scmp.lt.s32.totalorder %s18, 3
      // Predicated region
      $region37: #{tpu_custom_call.1} parent=5 // pred_check
        %p230 = pneg %p229
      $region38: #{tpu_custom_call.1} parent=5 // pred_check_branch
        %232 = sbr.rel (%p230) target = $region40
      $region39: #{tpu_custom_call.1} parent=5 // pred_region
        // Predicated region
        $region41: #{tpu_custom_call.1} parent=39 // pred_check
          %p233 = pneg %p38
        $region42: #{tpu_custom_call.1} parent=39 // pred_check_branch
          %235 = sbr.rel (%p233) target = $region44
        $region43: #{tpu_custom_call.1} parent=39 // pred_region
          %s236 = smul.u32 16, %s18
          %p237 = scmp.lt.s32.totalorder %s236, 47
          %s238 = scalar_select %p237, %s236, 47
          %s239 = smul.addr %s238, 8
          %s240 = scalar_lea.vmem %s0, %s239
          %s241 = smul.u32 16, %s18
        $region44: #{tpu_custom_call.1} parent=39 // pred_fallthru
          _
      $region40: #{tpu_custom_call.1} parent=5 // pred_fallthru
        _
      %p242 = scmp.le.s32.totalorder 1, %s18
      %p243 = scmp.lt.s32.totalorder %s18, 4
      %p244 = pnand %p242, %p243
      %p245 = pneg %p244
      // Predicated region
      $region45: #{tpu_custom_call.1} parent=5 // pred_check
        _
      $region46: #{tpu_custom_call.1} parent=5 // pred_check_branch
        %247 = sbr.rel (%p244) target = $region48
      $region47: #{tpu_custom_call.1} parent=5 // pred_region
        %s248 = ssub.s32 %s18, 1
        %s249 = smul.u32 16, %s23
        %p250 = scmp.lt.s32.totalorder %s249, 47
        %s251 = scalar_select %p250, %s249, 47
        %s252 = smul.addr %s251, 8
        %s253 = scalar_lea.vmem %s0, %s252
        %p254 = pneg %p44
        %p255 = pneg %p41
        %p256 = pneg %p65
        %p257 = pneg %p62
        %p258 = pneg %p86
        %p259 = pneg %p83
        %p260 = pneg %p107
        %p261 = pneg %p104
        %p262 = pneg %p128
        %p263 = pneg %p125
        %p264 = pneg %p149
        %p265 = pneg %p146
        %p266 = pneg %p170
        %p267 = pneg %p167
        %p268 = pneg %p196
        %p269 = pneg %p193
        %s270 = sand.u32 %s183, 1
        %s271 = scalar_lea.sflag [#allocation4], %s270
        %s272 = sand.u32 %s183, 1
        %s273 = scalar_lea.vmem [#allocation3], %s272
        %s274 = smul.u32 16, %s23
        %p275 = scmp.lt.s32.totalorder %s274, 47
        %s276 = scalar_select %p275, %s274, 47
        %s277 = smul.addr %s276, 8
        %s278 = scalar_lea.vmem %s0, %s277
        %s279 = smul.u32 16, %s23
        %v280 = vld [vmem:[%s278] sm:$0xff]
        %v281 = vld [vmem:[%s278 + $0x8] sm:$0xff]
        %v282 = vld [vmem:[%s278 + $0x10] sm:$0xff]
        %v283 = vld [vmem:[%s278 + $0x18] sm:$0xff]
        %v284 = vld [vmem:[%s278 + $0x20] sm:$0xff]
        %v285 = vld [vmem:[%s278 + $0x28] sm:$0xff]
        %v286 = vld [vmem:[%s278 + $0x30] sm:$0xff]
        %v287 = vld [vmem:[%s278 + $0x38] sm:$0xff]
        %v288 = vld [vmem:[%s278 + $0x40] sm:$0xff]
        %v289 = vld [vmem:[%s278 + $0x48] sm:$0xff]
        %v290 = vld [vmem:[%s278 + $0x50] sm:$0xff]
        %v291 = vld [vmem:[%s278 + $0x58] sm:$0xff]
        %v292 = vld [vmem:[%s278 + $0x60] sm:$0xff]
        %v293 = vld [vmem:[%s278 + $0x68] sm:$0xff]
        %v294 = vld [vmem:[%s278 + $0x70] sm:$0xff]
        %v295 = vld [vmem:[%s278 + $0x78] sm:$0xff]
        %v296 = vld [vmem:[%s1] sm:$0xff]
        %v297 = vld [vmem:[%s1 + $0x8] sm:$0xff]
        %v298 = vld [vmem:[%s1 + $0x10] sm:$0xff]
        %v299 = vld [vmem:[%s1 + $0x18] sm:$0xff]
        %v300 = vld [vmem:[%s1 + $0x20] sm:$0xff]
        %v301 = vld [vmem:[%s1 + $0x28] sm:$0xff]
        %v302 = vld [vmem:[%s1 + $0x30] sm:$0xff]
        %v303 = vld [vmem:[%s1 + $0x38] sm:$0xff]
        %v304 = vld [vmem:[%s1 + $0x40] sm:$0xff]
        %v305 = vld [vmem:[%s1 + $0x48] sm:$0xff]
        %v306 = vld [vmem:[%s1 + $0x50] sm:$0xff]
        %v307 = vld [vmem:[%s1 + $0x58] sm:$0xff]
        %v308 = vld [vmem:[%s1 + $0x60] sm:$0xff]
        %v309 = vld [vmem:[%s1 + $0x68] sm:$0xff]
        %v310 = vld [vmem:[%s1 + $0x70] sm:$0xff]
        %v311 = vld [vmem:[%s1 + $0x78] sm:$0xff]
        %v312 = vld [vmem:[%s1 + $0x80] sm:$0xff]
        %v313 = vld [vmem:[%s1 + $0x88] sm:$0xff]
        %v314 = vld [vmem:[%s1 + $0x90] sm:$0xff]
        %v315 = vld [vmem:[%s1 + $0x98] sm:$0xff]
        %v316 = vld [vmem:[%s1 + $0xa0] sm:$0xff]
        %v317 = vld [vmem:[%s1 + $0xa8] sm:$0xff]
        %v318 = vld [vmem:[%s1 + $0xb0] sm:$0xf]
        %v319 = vld [vmem:[%s2] sm:$0xff]
        %v320 = vld [vmem:[%s2 + $0x8] sm:$0xff]
        %v321 = vld [vmem:[%s2 + $0x10] sm:$0xff]
        %v322 = vld [vmem:[%s2 + $0x18] sm:$0xff]
        %v323 = vld [vmem:[%s2 + $0x20] sm:$0xff]
        %v324 = vld [vmem:[%s2 + $0x28] sm:$0xff]
        %v325 = vld [vmem:[%s2 + $0x30] sm:$0xff]
        %v326 = vld [vmem:[%s2 + $0x38] sm:$0xff]
        %v327 = vld [vmem:[%s2 + $0x40] sm:$0xff]
        %v328 = vld [vmem:[%s2 + $0x48] sm:$0xff]
        %v329 = vld [vmem:[%s2 + $0x50] sm:$0xff]
        %v330 = vld [vmem:[%s2 + $0x58] sm:$0xff]
        %v331 = vld [vmem:[%s2 + $0x60] sm:$0xff]
        %v332 = vld [vmem:[%s2 + $0x68] sm:$0xff]
        %v333 = vld [vmem:[%s2 + $0x70] sm:$0xff]
        %v334 = vld [vmem:[%s2 + $0x78] sm:$0xff]
        %v335 = vld [vmem:[%s2 + $0x80] sm:$0xff]
        %v336 = vld [vmem:[%s2 + $0x88] sm:$0xff]
        %v337 = vld [vmem:[%s2 + $0x90] sm:$0xff]
        %v338 = vld [vmem:[%s2 + $0x98] sm:$0xff]
        %v339 = vld [vmem:[%s2 + $0xa0] sm:$0xff]
        %v340 = vld [vmem:[%s2 + $0xa8] sm:$0xff]
        %v341 = vld [vmem:[%s2 + $0xb0] sm:$0xf]
        %343 = vset.pattern.permute.xlu0 0
        %344 = vperm.xlu0 %343, %v319
        %v345 = vpop.permute.xlu0 %344
        %348 = vset.pattern.permute.xlu0 0
        %349 = vperm.xlu0 %348, %v320
        %v350 = vpop.permute.xlu0 %349
        %353 = vset.pattern.permute.xlu0 0
        %354 = vperm.xlu0 %353, %v321
        %v355 = vpop.permute.xlu0 %354
        %358 = vset.pattern.permute.xlu0 0
        %359 = vperm.xlu0 %358, %v322
        %v360 = vpop.permute.xlu0 %359
        %363 = vset.pattern.permute.xlu0 0
        %364 = vperm.xlu0 %363, %v323
        %v365 = vpop.permute.xlu0 %364
        %368 = vset.pattern.permute.xlu0 0
        %369 = vperm.xlu0 %368, %v324
        %v370 = vpop.permute.xlu0 %369
        %373 = vset.pattern.permute.xlu0 0
        %374 = vperm.xlu0 %373, %v325
        %v375 = vpop.permute.xlu0 %374
        %378 = vset.pattern.permute.xlu0 0
        %379 = vperm.xlu0 %378, %v326
        %v380 = vpop.permute.xlu0 %379
        %383 = vset.pattern.permute.xlu0 0
        %384 = vperm.xlu0 %383, %v327
        %v385 = vpop.permute.xlu0 %384
        %388 = vset.pattern.permute.xlu0 0
        %389 = vperm.xlu0 %388, %v328
        %v390 = vpop.permute.xlu0 %389
        %393 = vset.pattern.permute.xlu0 0
        %394 = vperm.xlu0 %393, %v329
        %v395 = vpop.permute.xlu0 %394
        %398 = vset.pattern.permute.xlu0 0
        %399 = vperm.xlu0 %398, %v330
        %v400 = vpop.permute.xlu0 %399
        %403 = vset.pattern.permute.xlu0 0
        %404 = vperm.xlu0 %403, %v331
        %v405 = vpop.permute.xlu0 %404
        %408 = vset.pattern.permute.xlu0 0
        %409 = vperm.xlu0 %408, %v332
        %v410 = vpop.permute.xlu0 %409
        %413 = vset.pattern.permute.xlu0 0
        %414 = vperm.xlu0 %413, %v333
        %v415 = vpop.permute.xlu0 %414
        %418 = vset.pattern.permute.xlu0 0
        %419 = vperm.xlu0 %418, %v334
        %v420 = vpop.permute.xlu0 %419
        %423 = vset.pattern.permute.xlu0 0
        %424 = vperm.xlu0 %423, %v335
        %v425 = vpop.permute.xlu0 %424
        %428 = vset.pattern.permute.xlu0 0
        %429 = vperm.xlu0 %428, %v336
        %v430 = vpop.permute.xlu0 %429
        %433 = vset.pattern.permute.xlu0 0
        %434 = vperm.xlu0 %433, %v337
        %v435 = vpop.permute.xlu0 %434
        %438 = vset.pattern.permute.xlu0 0
        %439 = vperm.xlu0 %438, %v338
        %v440 = vpop.permute.xlu0 %439
        %443 = vset.pattern.permute.xlu0 0
        %444 = vperm.xlu0 %443, %v339
        %v445 = vpop.permute.xlu0 %444
        %448 = vset.pattern.permute.xlu0 0
        %449 = vperm.xlu0 %448, %v340
        %v450 = vpop.permute.xlu0 %449
        %453 = vset.pattern.permute.xlu0 0
        %454 = vperm.xlu0 %453, %v341
        %v455 = vpop.permute.xlu0 %454
        %vm457 = vcmask 72704
        %v459 = vsel %vm457, %v296, 0
        %v462 = vsel %vm457, %v297, 0
        %v465 = vsel %vm457, %v298, 0
        %v468 = vsel %vm457, %v299, 0
        %v471 = vsel %vm457, %v300, 0
        %v474 = vsel %vm457, %v301, 0
        %v477 = vsel %vm457, %v302, 0
        %v480 = vsel %vm457, %v303, 0
        %v483 = vsel %vm457, %v304, 0
        %v486 = vsel %vm457, %v305, 0
        %v489 = vsel %vm457, %v306, 0
        %v492 = vsel %vm457, %v307, 0
        %v495 = vsel %vm457, %v308, 0
        %v498 = vsel %vm457, %v309, 0
        %v501 = vsel %vm457, %v310, 0
        %v504 = vsel %vm457, %v311, 0
        %v507 = vsel %vm457, %v312, 0
        %v510 = vsel %vm457, %v313, 0
        %v513 = vsel %vm457, %v314, 0
        %v516 = vsel %vm457, %v315, 0
        %v519 = vsel %vm457, %v316, 0
        %v522 = vsel %vm457, %v317, 0
        %v525 = vsel %vm457, %v318, 0
        %v528 = vsel %vm457, %v280, 0
        %v531 = vsel %vm457, %v281, 0
        %v534 = vsel %vm457, %v282, 0
        %v537 = vsel %vm457, %v283, 0
        %v540 = vsel %vm457, %v284, 0
        %v543 = vsel %vm457, %v285, 0
        %v546 = vsel %vm457, %v286, 0
        %v549 = vsel %vm457, %v287, 0
        %v552 = vsel %vm457, %v288, 0
        %v555 = vsel %vm457, %v289, 0
        %v558 = vsel %vm457, %v290, 0
        %v561 = vsel %vm457, %v291, 0
        %v564 = vsel %vm457, %v292, 0
        %v567 = vsel %vm457, %v293, 0
        %v570 = vsel %vm457, %v294, 0
        %v573 = vsel %vm457, %v295, 0
        %575 = vmatpush.xpose.msra.mxu0 %v573
        %576 = vmatpush.xpose.msra.mxu0 %v570
        %577 = vmatpush.xpose.msra.mxu0 %v567
        %578 = vmatpush.xpose.msra.mxu0 %v564
        %579 = vmatpush.xpose.msra.mxu0 %v561
        %580 = vmatpush.xpose.msra.mxu0 %v558
        %581 = vmatpush.xpose.msra.mxu0 %v555
        %582 = vmatpush.xpose.msra.mxu0 %v552
        %583 = vmatpush.xpose.msra.mxu0 %v549
        %584 = vmatpush.xpose.msra.mxu0 %v546
        %585 = vmatpush.xpose.msra.mxu0 %v543
        %586 = vmatpush.xpose.msra.mxu0 %v540
        %587 = vmatpush.xpose.msra.mxu0 %v537
        %588 = vmatpush.xpose.msra.mxu0 %v534
        %589 = vmatpush.xpose.msra.mxu0 %v531
        %590 = vmatpush.xpose.msra.mxu0 %v528
        %591 = vmatmul.f32.gmra.mxu0 %v459
        %v592 = vpop.f32.mrf.mxu0
        %v593 = vadd.f32 %v345, %v592
        %594 = vmatmul.f32.gmra.mxu0 %v462
        %v595 = vpop.f32.mrf.mxu0
        %v596 = vadd.f32 %v350, %v595
        %597 = vmatmul.f32.gmra.mxu0 %v465
        %v598 = vpop.f32.mrf.mxu0
        %v599 = vadd.f32 %v355, %v598
        %600 = vmatmul.f32.gmra.mxu0 %v468
        %v601 = vpop.f32.mrf.mxu0
        %v602 = vadd.f32 %v360, %v601
        %603 = vmatmul.f32.gmra.mxu0 %v471
        %v604 = vpop.f32.mrf.mxu0
        %v605 = vadd.f32 %v365, %v604
        %606 = vmatmul.f32.gmra.mxu0 %v474
        %v607 = vpop.f32.mrf.mxu0
        %v608 = vadd.f32 %v370, %v607
        %609 = vmatmul.f32.gmra.mxu0 %v477
        %v610 = vpop.f32.mrf.mxu0
        %v611 = vadd.f32 %v375, %v610
        %612 = vmatmul.f32.gmra.mxu0 %v480
        %v613 = vpop.f32.mrf.mxu0
        %v614 = vadd.f32 %v380, %v613
        %615 = vmatmul.f32.gmra.mxu0 %v483
        %v616 = vpop.f32.mrf.mxu0
        %v617 = vadd.f32 %v385, %v616
        %618 = vmatmul.f32.gmra.mxu0 %v486
        %v619 = vpop.f32.mrf.mxu0
        %v620 = vadd.f32 %v390, %v619
        %621 = vmatmul.f32.gmra.mxu0 %v489
        %v622 = vpop.f32.mrf.mxu0
        %v623 = vadd.f32 %v395, %v622
        %624 = vmatmul.f32.gmra.mxu0 %v492
        %v625 = vpop.f32.mrf.mxu0
        %v626 = vadd.f32 %v400, %v625
        %627 = vmatmul.f32.gmra.mxu0 %v495
        %v628 = vpop.f32.mrf.mxu0
        %v629 = vadd.f32 %v405, %v628
        %630 = vmatmul.f32.gmra.mxu0 %v498
        %v631 = vpop.f32.mrf.mxu0
        %v632 = vadd.f32 %v410, %v631
        %633 = vmatmul.f32.gmra.mxu0 %v501
        %v634 = vpop.f32.mrf.mxu0
        %v635 = vadd.f32 %v415, %v634
        %636 = vmatmul.f32.gmra.mxu0 %v504
        %v637 = vpop.f32.mrf.mxu0
        %v638 = vadd.f32 %v420, %v637
        %639 = vmatmul.f32.gmra.mxu0 %v507
        %v640 = vpop.f32.mrf.mxu0
        %v641 = vadd.f32 %v425, %v640
        %642 = vmatmul.f32.gmra.mxu0 %v510
        %v643 = vpop.f32.mrf.mxu0
        %v644 = vadd.f32 %v430, %v643
        %645 = vmatmul.f32.gmra.mxu0 %v513
        %v646 = vpop.f32.mrf.mxu0
        %v647 = vadd.f32 %v435, %v646
        %648 = vmatmul.f32.gmra.mxu0 %v516
        %v649 = vpop.f32.mrf.mxu0
        %v650 = vadd.f32 %v440, %v649
        %651 = vmatmul.f32.gmra.mxu0 %v519
        %v652 = vpop.f32.mrf.mxu0
        %v653 = vadd.f32 %v445, %v652
        %654 = vmatmul.f32.gmra.mxu0 %v522
        %v655 = vpop.f32.mrf.mxu0
        %v656 = vadd.f32 %v450, %v655
        %657 = vmatmul.f32.gmra.mxu0 %v525
        %v658 = vpop.f32.mrf.mxu0
        %v659 = vadd.f32 %v455, %v658
        %660 = vdwg.mxu0
        %v661 = vld [vmem:[%s3] sm:$0xff]
        %v662 = vld [vmem:[%s3 + $0x8] sm:$0xff]
        %v663 = vld [vmem:[%s3 + $0x10] sm:$0xff]
        %v664 = vld [vmem:[%s3 + $0x18] sm:$0xff]
        %v665 = vld [vmem:[%s3 + $0x20] sm:$0xff]
        %v666 = vld [vmem:[%s3 + $0x28] sm:$0xff]
        %v667 = vld [vmem:[%s3 + $0x30] sm:$0xff]
        %v668 = vld [vmem:[%s3 + $0x38] sm:$0xff]
        %v669 = vld [vmem:[%s3 + $0x40] sm:$0xff]
        %v670 = vld [vmem:[%s3 + $0x48] sm:$0xff]
        %v671 = vld [vmem:[%s3 + $0x50] sm:$0xff]
        %v672 = vld [vmem:[%s3 + $0x58] sm:$0xff]
        %v673 = vld [vmem:[%s3 + $0x60] sm:$0xff]
        %v674 = vld [vmem:[%s3 + $0x68] sm:$0xff]
        %v675 = vld [vmem:[%s3 + $0x70] sm:$0xff]
        %v676 = vld [vmem:[%s3 + $0x78] sm:$0xff]
        %v677 = vld [vmem:[%s3 + $0x80] sm:$0xff]
        %v678 = vld [vmem:[%s3 + $0x88] sm:$0xff]
        %v679 = vld [vmem:[%s3 + $0x90] sm:$0xff]
        %v680 = vld [vmem:[%s3 + $0x98] sm:$0xff]
        %v681 = vld [vmem:[%s3 + $0xa0] sm:$0xff]
        %v682 = vld [vmem:[%s3 + $0xa8] sm:$0xff]
        %v683 = vld [vmem:[%s3 + $0xb0] sm:$0xff]
        %v684 = vld [vmem:[%s3 + $0xb8] sm:$0xff]
        %v685 = vld [vmem:[%s3 + $0xc0] sm:$0xff]
        %v686 = vld [vmem:[%s3 + $0xc8] sm:$0xff]
        %v687 = vld [vmem:[%s3 + $0xd0] sm:$0xff]
        %v688 = vld [vmem:[%s3 + $0xd8] sm:$0xff]
        %v689 = vld [vmem:[%s3 + $0xe0] sm:$0xff]
        %v690 = vld [vmem:[%s3 + $0xe8] sm:$0xff]
        %v691 = vld [vmem:[%s3 + $0xf0] sm:$0xff]
        %v692 = vld [vmem:[%s3 + $0xf8] sm:$0xff]
        %v693 = vld [vmem:[%s3 + $0x100] sm:$0xff]
        %v694 = vld [vmem:[%s3 + $0x108] sm:$0xff]
        %v695 = vld [vmem:[%s3 + $0x110] sm:$0xff]
        %v696 = vld [vmem:[%s3 + $0x118] sm:$0xff]
        %v697 = vld [vmem:[%s3 + $0x120] sm:$0xff]
        %v698 = vld [vmem:[%s3 + $0x128] sm:$0xff]
        %v699 = vld [vmem:[%s3 + $0x130] sm:$0xff]
        %v700 = vld [vmem:[%s3 + $0x138] sm:$0xff]
        %v701 = vld [vmem:[%s3 + $0x140] sm:$0xff]
        %v702 = vld [vmem:[%s3 + $0x148] sm:$0xff]
        %v703 = vld [vmem:[%s3 + $0x150] sm:$0xff]
        %v704 = vld [vmem:[%s3 + $0x158] sm:$0xff]
        %v705 = vld [vmem:[%s3 + $0x160] sm:$0xf]
        %v706 = vld [vmem:[%s3 + $0x168] sm:$0xf]
        %v707 = vld [vmem:[%s4] sm:$0xff]
        %v708 = vld [vmem:[%s4 + $0x8] sm:$0xff]
        %v709 = vld [vmem:[%s4 + $0x10] sm:$0xff]
        %v710 = vld [vmem:[%s4 + $0x18] sm:$0xff]
        %v711 = vld [vmem:[%s4 + $0x20] sm:$0xff]
        %v712 = vld [vmem:[%s4 + $0x28] sm:$0xff]
        %v713 = vld [vmem:[%s4 + $0x30] sm:$0xff]
        %v714 = vld [vmem:[%s4 + $0x38] sm:$0xff]
        %v715 = vld [vmem:[%s4 + $0x40] sm:$0xff]
        %v716 = vld [vmem:[%s4 + $0x48] sm:$0xff]
        %v717 = vld [vmem:[%s4 + $0x50] sm:$0xff]
        %v718 = vld [vmem:[%s4 + $0x58] sm:$0xff]
        %v719 = vld [vmem:[%s4 + $0x60] sm:$0xff]
        %v720 = vld [vmem:[%s4 + $0x68] sm:$0xff]
        %v721 = vld [vmem:[%s4 + $0x70] sm:$0xff]
        %v722 = vld [vmem:[%s4 + $0x78] sm:$0xff]
        %v723 = vld [vmem:[%s4 + $0x80] sm:$0xff]
        %v724 = vld [vmem:[%s4 + $0x88] sm:$0xff]
        %v725 = vld [vmem:[%s4 + $0x90] sm:$0xff]
        %v726 = vld [vmem:[%s4 + $0x98] sm:$0xff]
        %v727 = vld [vmem:[%s4 + $0xa0] sm:$0xff]
        %v728 = vld [vmem:[%s4 + $0xa8] sm:$0xff]
        %v729 = vld [vmem:[%s4 + $0xb0] sm:$0xf]
        %731 = vset.pattern.permute.xlu0 0
        %732 = vperm.xlu0 %731, %v707
        %v733 = vpop.permute.xlu0 %732
        %736 = vset.pattern.permute.xlu0 0
        %737 = vperm.xlu0 %736, %v708
        %v738 = vpop.permute.xlu0 %737
        %741 = vset.pattern.permute.xlu0 0
        %742 = vperm.xlu0 %741, %v709
        %v743 = vpop.permute.xlu0 %742
        %746 = vset.pattern.permute.xlu0 0
        %747 = vperm.xlu0 %746, %v710
        %v748 = vpop.permute.xlu0 %747
        %751 = vset.pattern.permute.xlu0 0
        %752 = vperm.xlu0 %751, %v711
        %v753 = vpop.permute.xlu0 %752
        %756 = vset.pattern.permute.xlu0 0
        %757 = vperm.xlu0 %756, %v712
        %v758 = vpop.permute.xlu0 %757
        %761 = vset.pattern.permute.xlu0 0
        %762 = vperm.xlu0 %761, %v713
        %v763 = vpop.permute.xlu0 %762
        %766 = vset.pattern.permute.xlu0 0
        %767 = vperm.xlu0 %766, %v714
        %v768 = vpop.permute.xlu0 %767
        %771 = vset.pattern.permute.xlu0 0
        %772 = vperm.xlu0 %771, %v715
        %v773 = vpop.permute.xlu0 %772
        %776 = vset.pattern.permute.xlu0 0
        %777 = vperm.xlu0 %776, %v716
        %v778 = vpop.permute.xlu0 %777
        %781 = vset.pattern.permute.xlu0 0
        %782 = vperm.xlu0 %781, %v717
        %v783 = vpop.permute.xlu0 %782
        %786 = vset.pattern.permute.xlu0 0
        %787 = vperm.xlu0 %786, %v718
        %v788 = vpop.permute.xlu0 %787
        %791 = vset.pattern.permute.xlu0 0
        %792 = vperm.xlu0 %791, %v719
        %v793 = vpop.permute.xlu0 %792
        %796 = vset.pattern.permute.xlu0 0
        %797 = vperm.xlu0 %796, %v720
        %v798 = vpop.permute.xlu0 %797
        %801 = vset.pattern.permute.xlu0 0
        %802 = vperm.xlu0 %801, %v721
        %v803 = vpop.permute.xlu0 %802
        %806 = vset.pattern.permute.xlu0 0
        %807 = vperm.xlu0 %806, %v722
        %v808 = vpop.permute.xlu0 %807
        %811 = vset.pattern.permute.xlu0 0
        %812 = vperm.xlu0 %811, %v723
        %v813 = vpop.permute.xlu0 %812
        %816 = vset.pattern.permute.xlu0 0
        %817 = vperm.xlu0 %816, %v724
        %v818 = vpop.permute.xlu0 %817
        %821 = vset.pattern.permute.xlu0 0
        %822 = vperm.xlu0 %821, %v725
        %v823 = vpop.permute.xlu0 %822
        %826 = vset.pattern.permute.xlu0 0
        %827 = vperm.xlu0 %826, %v726
        %v828 = vpop.permute.xlu0 %827
        %831 = vset.pattern.permute.xlu0 0
        %832 = vperm.xlu0 %831, %v727
        %v833 = vpop.permute.xlu0 %832
        %836 = vset.pattern.permute.xlu0 0
        %837 = vperm.xlu0 %836, %v728
        %v838 = vpop.permute.xlu0 %837
        %841 = vset.pattern.permute.xlu0 0
        %842 = vperm.xlu0 %841, %v729
        %v843 = vpop.permute.xlu0 %842
        %vm845 = vcmask 424960
        %v847 = vsel %vm845, %v662, 0
        %v850 = vsel %vm845, %v664, 0
        %v853 = vsel %vm845, %v666, 0
        %v856 = vsel %vm845, %v668, 0
        %v859 = vsel %vm845, %v670, 0
        %v862 = vsel %vm845, %v672, 0
        %v865 = vsel %vm845, %v674, 0
        %v868 = vsel %vm845, %v676, 0
        %v871 = vsel %vm845, %v678, 0
        %v874 = vsel %vm845, %v680, 0
        %v877 = vsel %vm845, %v682, 0
        %v880 = vsel %vm845, %v684, 0
        %v883 = vsel %vm845, %v686, 0
        %v886 = vsel %vm845, %v688, 0
        %v889 = vsel %vm845, %v690, 0
        %v892 = vsel %vm845, %v692, 0
        %v895 = vsel %vm845, %v694, 0
        %v898 = vsel %vm845, %v696, 0
        %v901 = vsel %vm845, %v698, 0
        %v904 = vsel %vm845, %v700, 0
        %v907 = vsel %vm845, %v702, 0
        %v910 = vsel %vm845, %v704, 0
        %v913 = vsel %vm845, %v706, 0
        %vm915 = vcmask 1043456
        %v917 = vsel %vm915, %v659, 0
        %919 = vmatpush.msra.mxu0 %v638
        %920 = vmatpush.msra.mxu0 %v635
        %921 = vmatpush.msra.mxu0 %v632
        %922 = vmatpush.msra.mxu0 %v629
        %923 = vmatpush.msra.mxu0 %v626
        %924 = vmatpush.msra.mxu0 %v623
        %925 = vmatpush.msra.mxu0 %v620
        %926 = vmatpush.msra.mxu0 %v617
        %927 = vmatpush.msra.mxu0 %v614
        %928 = vmatpush.msra.mxu0 %v611
        %929 = vmatpush.msra.mxu0 %v608
        %930 = vmatpush.msra.mxu0 %v605
        %931 = vmatpush.msra.mxu0 %v602
        %932 = vmatpush.msra.mxu0 %v599
        %933 = vmatpush.msra.mxu0 %v596
        %934 = vmatpush.msra.mxu0 %v593
        %935 = vmatmul.f32.gmra.mxu0 %v661
        %v936 = vpop.f32.mrf.mxu0
        %v937 = vadd.f32 %v733, %v936
        %938 = vmatmul.f32.gmra.mxu0 %v663
        %v939 = vpop.f32.mrf.mxu0
        %v940 = vadd.f32 %v738, %v939
        %941 = vmatmul.f32.gmra.mxu0 %v665
        %v942 = vpop.f32.mrf.mxu0
        %v943 = vadd.f32 %v743, %v942
        %944 = vmatmul.f32.gmra.mxu0 %v667
        %v945 = vpop.f32.mrf.mxu0
        %v946 = vadd.f32 %v748, %v945
        %947 = vmatmul.f32.gmra.mxu0 %v669
        %v948 = vpop.f32.mrf.mxu0
        %v949 = vadd.f32 %v753, %v948
        %950 = vmatmul.f32.gmra.mxu0 %v671
        %v951 = vpop.f32.mrf.mxu0
        %v952 = vadd.f32 %v758, %v951
        %953 = vmatmul.f32.gmra.mxu0 %v673
        %v954 = vpop.f32.mrf.mxu0
        %v955 = vadd.f32 %v763, %v954
        %956 = vmatmul.f32.gmra.mxu0 %v675
        %v957 = vpop.f32.mrf.mxu0
        %v958 = vadd.f32 %v768, %v957
        %959 = vmatmul.f32.gmra.mxu0 %v677
        %v960 = vpop.f32.mrf.mxu0
        %v961 = vadd.f32 %v773, %v960
        %962 = vmatmul.f32.gmra.mxu0 %v679
        %v963 = vpop.f32.mrf.mxu0
        %v964 = vadd.f32 %v778, %v963
        %965 = vmatmul.f32.gmra.mxu0 %v681
        %v966 = vpop.f32.mrf.mxu0
        %v967 = vadd.f32 %v783, %v966
        %968 = vmatmul.f32.gmra.mxu0 %v683
        %v969 = vpop.f32.mrf.mxu0
        %v970 = vadd.f32 %v788, %v969
        %971 = vmatmul.f32.gmra.mxu0 %v685
        %v972 = vpop.f32.mrf.mxu0
        %v973 = vadd.f32 %v793, %v972
        %974 = vmatmul.f32.gmra.mxu0 %v687
        %v975 = vpop.f32.mrf.mxu0
        %v976 = vadd.f32 %v798, %v975
        %977 = vmatmul.f32.gmra.mxu0 %v689
        %v978 = vpop.f32.mrf.mxu0
        %v979 = vadd.f32 %v803, %v978
        %980 = vmatmul.f32.gmra.mxu0 %v691
        %v981 = vpop.f32.mrf.mxu0
        %v982 = vadd.f32 %v808, %v981
        %983 = vmatmul.f32.gmra.mxu0 %v693
        %v984 = vpop.f32.mrf.mxu0
        %v985 = vadd.f32 %v813, %v984
        %986 = vmatmul.f32.gmra.mxu0 %v695
        %v987 = vpop.f32.mrf.mxu0
        %v988 = vadd.f32 %v818, %v987
        %989 = vmatmul.f32.gmra.mxu0 %v697
        %v990 = vpop.f32.mrf.mxu0
        %v991 = vadd.f32 %v823, %v990
        %992 = vmatmul.f32.gmra.mxu0 %v699
        %v993 = vpop.f32.mrf.mxu0
        %v994 = vadd.f32 %v828, %v993
        %995 = vmatmul.f32.gmra.mxu0 %v701
        %v996 = vpop.f32.mrf.mxu0
        %v997 = vadd.f32 %v833, %v996
        %998 = vmatmul.f32.gmra.mxu0 %v703
        %v999 = vpop.f32.mrf.mxu0
        %v1000 = vadd.f32 %v838, %v999
        %1001 = vmatmul.f32.gmra.mxu0 %v705
        %v1002 = vpop.f32.mrf.mxu0
        %v1003 = vadd.f32 %v843, %v1002
        %1004 = vdwg.mxu0
        %1005 = vmatpush.msra.mxu0 0.0
        %1006 = vmatpush.msra.mxu0 0.0
        %1007 = vmatpush.msra.mxu0 0.0
        %1008 = vmatpush.msra.mxu0 0.0
        %1009 = vmatpush.msra.mxu0 0.0
        %1010 = vmatpush.msra.mxu0 0.0
        %1011 = vmatpush.msra.mxu0 0.0
        %1012 = vmatpush.msra.mxu0 0.0
        %1013 = vmatpush.msra.mxu0 0.0
        %1014 = vmatpush.msra.mxu0 %v917
        %1015 = vmatpush.msra.mxu0 %v656
        %1016 = vmatpush.msra.mxu0 %v653
        %1017 = vmatpush.msra.mxu0 %v650
        %1018 = vmatpush.msra.mxu0 %v647
        %1019 = vmatpush.msra.mxu0 %v644
        %1020 = vmatpush.msra.mxu0 %v641
        %1021 = vmatmul.f32.gmra.mxu0 %v847
        %v1022 = vpop.f32.mrf.mxu0
        %v1023 = vadd.f32 %v937, %v1022
        %1024 = vmatmul.f32.gmra.mxu0 %v850
        %v1025 = vpop.f32.mrf.mxu0
        %v1026 = vadd.f32 %v940, %v1025
        %1027 = vmatmul.f32.gmra.mxu0 %v853
        %v1028 = vpop.f32.mrf.mxu0
        %v1029 = vadd.f32 %v943, %v1028
        %1030 = vmatmul.f32.gmra.mxu0 %v856
        %v1031 = vpop.f32.mrf.mxu0
        %v1032 = vadd.f32 %v946, %v1031
        %1033 = vmatmul.f32.gmra.mxu0 %v859
        %v1034 = vpop.f32.mrf.mxu0
        %v1035 = vadd.f32 %v949, %v1034
        %1036 = vmatmul.f32.gmra.mxu0 %v862
        %v1037 = vpop.f32.mrf.mxu0
        %v1038 = vadd.f32 %v952, %v1037
        %1039 = vmatmul.f32.gmra.mxu0 %v865
        %v1040 = vpop.f32.mrf.mxu0
        %v1041 = vadd.f32 %v955, %v1040
        %1042 = vmatmul.f32.gmra.mxu0 %v868
        %v1043 = vpop.f32.mrf.mxu0
        %v1044 = vadd.f32 %v958, %v1043
        %1045 = vmatmul.f32.gmra.mxu0 %v871
        %v1046 = vpop.f32.mrf.mxu0
        %v1047 = vadd.f32 %v961, %v1046
        %1048 = vmatmul.f32.gmra.mxu0 %v874
        %v1049 = vpop.f32.mrf.mxu0
        %v1050 = vadd.f32 %v964, %v1049
        %1051 = vmatmul.f32.gmra.mxu0 %v877
        %v1052 = vpop.f32.mrf.mxu0
        %v1053 = vadd.f32 %v967, %v1052
        %1054 = vmatmul.f32.gmra.mxu0 %v880
        %v1055 = vpop.f32.mrf.mxu0
        %v1056 = vadd.f32 %v970, %v1055
        %1057 = vmatmul.f32.gmra.mxu0 %v883
        %v1058 = vpop.f32.mrf.mxu0
        %v1059 = vadd.f32 %v973, %v1058
        %1060 = vmatmul.f32.gmra.mxu0 %v886
        %v1061 = vpop.f32.mrf.mxu0
        %v1062 = vadd.f32 %v976, %v1061
        %1063 = vmatmul.f32.gmra.mxu0 %v889
        %v1064 = vpop.f32.mrf.mxu0
        %v1065 = vadd.f32 %v979, %v1064
        %1066 = vmatmul.f32.gmra.mxu0 %v892
        %v1067 = vpop.f32.mrf.mxu0
        %v1068 = vadd.f32 %v982, %v1067
        %1069 = vmatmul.f32.gmra.mxu0 %v895
        %v1070 = vpop.f32.mrf.mxu0
        %v1071 = vadd.f32 %v985, %v1070
        %1072 = vmatmul.f32.gmra.mxu0 %v898
        %v1073 = vpop.f32.mrf.mxu0
        %v1074 = vadd.f32 %v988, %v1073
        %1075 = vmatmul.f32.gmra.mxu0 %v901
        %v1076 = vpop.f32.mrf.mxu0
        %v1077 = vadd.f32 %v991, %v1076
        %1078 = vmatmul.f32.gmra.mxu0 %v904
        %v1079 = vpop.f32.mrf.mxu0
        %v1080 = vadd.f32 %v994, %v1079
        %1081 = vmatmul.f32.gmra.mxu0 %v907
        %v1082 = vpop.f32.mrf.mxu0
        %v1083 = vadd.f32 %v997, %v1082
        %1084 = vmatmul.f32.gmra.mxu0 %v910
        %v1085 = vpop.f32.mrf.mxu0
        %v1086 = vadd.f32 %v1000, %v1085
        %1087 = vmatmul.f32.gmra.mxu0 %v913
        %v1088 = vpop.f32.mrf.mxu0
        %v1089 = vadd.f32 %v1003, %v1088
        %1090 = vdwg.mxu0
        %v1091 = vmul.f32 %v1023, 0.5
        %v1092 = vmul.f32 %v1026, 0.5
        %v1093 = vmul.f32 %v1029, 0.5
        %v1094 = vmul.f32 %v1032, 0.5
        %v1095 = vmul.f32 %v1035, 0.5
        %v1096 = vmul.f32 %v1038, 0.5
        %v1097 = vmul.f32 %v1041, 0.5
        %v1098 = vmul.f32 %v1044, 0.5
        %v1099 = vmul.f32 %v1047, 0.5
        %v1100 = vmul.f32 %v1050, 0.5
        %v1101 = vmul.f32 %v1053, 0.5
        %v1102 = vmul.f32 %v1056, 0.5
        %v1103 = vmul.f32 %v1059, 0.5
        %v1104 = vmul.f32 %v1062, 0.5
        %v1105 = vmul.f32 %v1065, 0.5
        %v1106 = vmul.f32 %v1068, 0.5
        %v1107 = vmul.f32 %v1071, 0.5
        %v1108 = vmul.f32 %v1074, 0.5
        %v1109 = vmul.f32 %v1077, 0.5
        %v1110 = vmul.f32 %v1080, 0.5
        %v1111 = vmul.f32 %v1083, 0.5
        %v1112 = vmul.f32 %v1086, 0.5
        %v1113 = vmul.f32 %v1089, 0.5
        %v1114 = vmul.f32 %v1023, 0.70710677
        %v1115 = vmul.f32 %v1026, 0.70710677
        %v1116 = vmul.f32 %v1029, 0.70710677
        %v1117 = vmul.f32 %v1032, 0.70710677
        %v1118 = vmul.f32 %v1035, 0.70710677
        %v1119 = vmul.f32 %v1038, 0.70710677
        %v1120 = vmul.f32 %v1041, 0.70710677
        %v1121 = vmul.f32 %v1044, 0.70710677
        %v1122 = vmul.f32 %v1047, 0.70710677
        %v1123 = vmul.f32 %v1050, 0.70710677
        %v1124 = vmul.f32 %v1053, 0.70710677
        %v1125 = vmul.f32 %v1056, 0.70710677
        %v1126 = vmul.f32 %v1059, 0.70710677
        %v1127 = vmul.f32 %v1062, 0.70710677
        %v1128 = vmul.f32 %v1065, 0.70710677
        %v1129 = vmul.f32 %v1068, 0.70710677
        %v1130 = vmul.f32 %v1071, 0.70710677
        %v1131 = vmul.f32 %v1074, 0.70710677
        %v1132 = vmul.f32 %v1077, 0.70710677
        %v1133 = vmul.f32 %v1080, 0.70710677
        %v1134 = vmul.f32 %v1083, 0.70710677
        %v1135 = vmul.f32 %v1086, 0.70710677
        %v1136 = vmul.f32 %v1089, 0.70710677
        %v1137 = vmul.f32 %v1114, %v1114
        %v1138 = vmin.f32 16.0, %v1137
        %v1139 = vmul.f32 %v1138, 2.1237322e-06
        %v1140 = vadd.f32 %v1139, 0.00028619796
        %v1141 = vmul.f32 %v1138, %v1140
        %v1142 = vadd.f32 %v1141, 0.0036580483
        %v1143 = vmul.f32 %v1138, %v1142
        %v1144 = vadd.f32 %v1143, 0.05243302
        %v1145 = vmul.f32 %v1138, %v1144
        %v1146 = vadd.f32 %v1145, 0.18741608
        %v1147 = vmul.f32 %v1138, %v1146
        %v1148 = vadd.f32 %v1147, 1.1283791
        %v1149 = vmul.f32 %v1114, %v1148
        %v1150 = vmul.f32 %v1138, 3.8918573e-05
        %v1151 = vadd.f32 %v1150, 0.001143296
        %v1152 = vmul.f32 %v1138, %v1151
        %v1153 = vadd.f32 %v1152, 0.014752088
        %v1154 = vmul.f32 %v1138, %v1153
        %v1155 = vadd.f32 %v1154, 0.112945676
        %v1156 = vmul.f32 %v1138, %v1155
        %v1157 = vadd.f32 %v1156, 0.4994258
        %v1158 = vmul.f32 %v1138, %v1157
        %v1159 = vadd.f32 %v1158, 1.0
        %v1160 = vrcp.pop %v1159
        %v1161 = vmul.f32 %v1159, %v1160
        %v1162 = vsub.f32 1.0, %v1161
        %v1163 = vmul.f32 %v1160, %v1162
        %v1164 = vadd.f32 %v1160, %v1163
        %vm1165 = vweird.f32 %v1159
        %vm1166 = vweird.f32 %v1160
        %vm1167 = vmor %vm1165, %vm1166
        %v1168 = vsel %vm1167, %v1160, %v1164
        %v1169 = vand.u32 2147483647, %v1159
        %vm1170 = vcmp.eq.f32.partialorder %v1169, 8.507059e+37
        %v1171 = vand.u32 %v1159, 2147483648
        %v1172 = vor.u32 1.1754944e-38, %v1171
        %v1173 = vsel %vm1170, %v1172, %v1168
        %v1174 = vmul.f32 %v1149, %v1173
        %v1175 = vmin.f32 %v1174, 1.0
        %v1176 = vmax.f32 %v1175, -1.0
        %v1177 = vmul.f32 %v1115, %v1115
        %v1178 = vmin.f32 16.0, %v1177
        %v1179 = vmul.f32 %v1178, 2.1237322e-06
        %v1180 = vadd.f32 %v1179, 0.00028619796
        %v1181 = vmul.f32 %v1178, %v1180
        %v1182 = vadd.f32 %v1181, 0.0036580483
        %v1183 = vmul.f32 %v1178, %v1182
        %v1184 = vadd.f32 %v1183, 0.05243302
        %v1185 = vmul.f32 %v1178, %v1184
        %v1186 = vadd.f32 %v1185, 0.18741608
        %v1187 = vmul.f32 %v1178, %v1186
        %v1188 = vadd.f32 %v1187, 1.1283791
        %v1189 = vmul.f32 %v1115, %v1188
        %v1190 = vmul.f32 %v1178, 3.8918573e-05
        %v1191 = vadd.f32 %v1190, 0.001143296
        %v1192 = vmul.f32 %v1178, %v1191
        %v1193 = vadd.f32 %v1192, 0.014752088
        %v1194 = vmul.f32 %v1178, %v1193
        %v1195 = vadd.f32 %v1194, 0.112945676
        %v1196 = vmul.f32 %v1178, %v1195
        %v1197 = vadd.f32 %v1196, 0.4994258
        %v1198 = vmul.f32 %v1178, %v1197
        %v1199 = vadd.f32 %v1198, 1.0
        %v1200 = vrcp.pop %v1199
        %v1201 = vmul.f32 %v1199, %v1200
        %v1202 = vsub.f32 1.0, %v1201
        %v1203 = vmul.f32 %v1200, %v1202
        %v1204 = vadd.f32 %v1200, %v1203
        %vm1205 = vweird.f32 %v1199
        %vm1206 = vweird.f32 %v1200
        %vm1207 = vmor %vm1205, %vm1206
        %v1208 = vsel %vm1207, %v1200, %v1204
        %v1209 = vand.u32 2147483647, %v1199
        %vm1210 = vcmp.eq.f32.partialorder %v1209, 8.507059e+37
        %v1211 = vand.u32 %v1199, 2147483648
        %v1212 = vor.u32 1.1754944e-38, %v1211
        %v1213 = vsel %vm1210, %v1212, %v1208
        %v1214 = vmul.f32 %v1189, %v1213
        %v1215 = vmin.f32 %v1214, 1.0
        %v1216 = vmax.f32 %v1215, -1.0
        %v1217 = vmul.f32 %v1116, %v1116
        %v1218 = vmin.f32 16.0, %v1217
        %v1219 = vmul.f32 %v1218, 2.1237322e-06
        %v1220 = vadd.f32 %v1219, 0.00028619796
        %v1221 = vmul.f32 %v1218, %v1220
        %v1222 = vadd.f32 %v1221, 0.0036580483
        %v1223 = vmul.f32 %v1218, %v1222
        %v1224 = vadd.f32 %v1223, 0.05243302
        %v1225 = vmul.f32 %v1218, %v1224
        %v1226 = vadd.f32 %v1225, 0.18741608
        %v1227 = vmul.f32 %v1218, %v1226
        %v1228 = vadd.f32 %v1227, 1.1283791
        %v1229 = vmul.f32 %v1116, %v1228
        %v1230 = vmul.f32 %v1218, 3.8918573e-05
        %v1231 = vadd.f32 %v1230, 0.001143296
        %v1232 = vmul.f32 %v1218, %v1231
        %v1233 = vadd.f32 %v1232, 0.014752088
        %v1234 = vmul.f32 %v1218, %v1233
        %v1235 = vadd.f32 %v1234, 0.112945676
        %v1236 = vmul.f32 %v1218, %v1235
        %v1237 = vadd.f32 %v1236, 0.4994258
        %v1238 = vmul.f32 %v1218, %v1237
        %v1239 = vadd.f32 %v1238, 1.0
        %v1240 = vrcp.pop %v1239
        %v1241 = vmul.f32 %v1239, %v1240
        %v1242 = vsub.f32 1.0, %v1241
        %v1243 = vmul.f32 %v1240, %v1242
        %v1244 = vadd.f32 %v1240, %v1243
        %vm1245 = vweird.f32 %v1239
        %vm1246 = vweird.f32 %v1240
        %vm1247 = vmor %vm1245, %vm1246
        %v1248 = vsel %vm1247, %v1240, %v1244
        %v1249 = vand.u32 2147483647, %v1239
        %vm1250 = vcmp.eq.f32.partialorder %v1249, 8.507059e+37
        %v1251 = vand.u32 %v1239, 2147483648
        %v1252 = vor.u32 1.1754944e-38, %v1251
        %v1253 = vsel %vm1250, %v1252, %v1248
        %v1254 = vmul.f32 %v1229, %v1253
        %v1255 = vmin.f32 %v1254, 1.0
        %v1256 = vmax.f32 %v1255, -1.0
        %v1257 = vmul.f32 %v1117, %v1117
        %v1258 = vmin.f32 16.0, %v1257
        %v1259 = vmul.f32 %v1258, 2.1237322e-06
        %v1260 = vadd.f32 %v1259, 0.00028619796
        %v1261 = vmul.f32 %v1258, %v1260
        %v1262 = vadd.f32 %v1261, 0.0036580483
        %v1263 = vmul.f32 %v1258, %v1262
        %v1264 = vadd.f32 %v1263, 0.05243302
        %v1265 = vmul.f32 %v1258, %v1264
        %v1266 = vadd.f32 %v1265, 0.18741608
        %v1267 = vmul.f32 %v1258, %v1266
        %v1268 = vadd.f32 %v1267, 1.1283791
        %v1269 = vmul.f32 %v1117, %v1268
        %v1270 = vmul.f32 %v1258, 3.8918573e-05
        %v1271 = vadd.f32 %v1270, 0.001143296
        %v1272 = vmul.f32 %v1258, %v1271
        %v1273 = vadd.f32 %v1272, 0.014752088
        %v1274 = vmul.f32 %v1258, %v1273
        %v1275 = vadd.f32 %v1274, 0.112945676
        %v1276 = vmul.f32 %v1258, %v1275
        %v1277 = vadd.f32 %v1276, 0.4994258
        %v1278 = vmul.f32 %v1258, %v1277
        %v1279 = vadd.f32 %v1278, 1.0
        %v1280 = vrcp.pop %v1279
        %v1281 = vmul.f32 %v1279, %v1280
        %v1282 = vsub.f32 1.0, %v1281
        %v1283 = vmul.f32 %v1280, %v1282
        %v1284 = vadd.f32 %v1280, %v1283
        %vm1285 = vweird.f32 %v1279
        %vm1286 = vweird.f32 %v1280
        %vm1287 = vmor %vm1285, %vm1286
        %v1288 = vsel %vm1287, %v1280, %v1284
        %v1289 = vand.u32 2147483647, %v1279
        %vm1290 = vcmp.eq.f32.partialorder %v1289, 8.507059e+37
        %v1291 = vand.u32 %v1279, 2147483648
        %v1292 = vor.u32 1.1754944e-38, %v1291
        %v1293 = vsel %vm1290, %v1292, %v1288
        %v1294 = vmul.f32 %v1269, %v1293
        %v1295 = vmin.f32 %v1294, 1.0
        %v1296 = vmax.f32 %v1295, -1.0
        %v1297 = vmul.f32 %v1118, %v1118
        %v1298 = vmin.f32 16.0, %v1297
        %v1299 = vmul.f32 %v1298, 2.1237322e-06
        %v1300 = vadd.f32 %v1299, 0.00028619796
        %v1301 = vmul.f32 %v1298, %v1300
        %v1302 = vadd.f32 %v1301, 0.0036580483
        %v1303 = vmul.f32 %v1298, %v1302
        %v1304 = vadd.f32 %v1303, 0.05243302
        %v1305 = vmul.f32 %v1298, %v1304
        %v1306 = vadd.f32 %v1305, 0.18741608
        %v1307 = vmul.f32 %v1298, %v1306
        %v1308 = vadd.f32 %v1307, 1.1283791
        %v1309 = vmul.f32 %v1118, %v1308
        %v1310 = vmul.f32 %v1298, 3.8918573e-05
        %v1311 = vadd.f32 %v1310, 0.001143296
        %v1312 = vmul.f32 %v1298, %v1311
        %v1313 = vadd.f32 %v1312, 0.014752088
        %v1314 = vmul.f32 %v1298, %v1313
        %v1315 = vadd.f32 %v1314, 0.112945676
        %v1316 = vmul.f32 %v1298, %v1315
        %v1317 = vadd.f32 %v1316, 0.4994258
        %v1318 = vmul.f32 %v1298, %v1317
        %v1319 = vadd.f32 %v1318, 1.0
        %v1320 = vrcp.pop %v1319
        %v1321 = vmul.f32 %v1319, %v1320
        %v1322 = vsub.f32 1.0, %v1321
        %v1323 = vmul.f32 %v1320, %v1322
        %v1324 = vadd.f32 %v1320, %v1323
        %vm1325 = vweird.f32 %v1319
        %vm1326 = vweird.f32 %v1320
        %vm1327 = vmor %vm1325, %vm1326
        %v1328 = vsel %vm1327, %v1320, %v1324
        %v1329 = vand.u32 2147483647, %v1319
        %vm1330 = vcmp.eq.f32.partialorder %v1329, 8.507059e+37
        %v1331 = vand.u32 %v1319, 2147483648
        %v1332 = vor.u32 1.1754944e-38, %v1331
        %v1333 = vsel %vm1330, %v1332, %v1328
        %v1334 = vmul.f32 %v1309, %v1333
        %v1335 = vmin.f32 %v1334, 1.0
        %v1336 = vmax.f32 %v1335, -1.0
        %v1337 = vmul.f32 %v1119, %v1119
        %v1338 = vmin.f32 16.0, %v1337
        %v1339 = vmul.f32 %v1338, 2.1237322e-06
        %v1340 = vadd.f32 %v1339, 0.00028619796
        %v1341 = vmul.f32 %v1338, %v1340
        %v1342 = vadd.f32 %v1341, 0.0036580483
        %v1343 = vmul.f32 %v1338, %v1342
        %v1344 = vadd.f32 %v1343, 0.05243302
        %v1345 = vmul.f32 %v1338, %v1344
        %v1346 = vadd.f32 %v1345, 0.18741608
        %v1347 = vmul.f32 %v1338, %v1346
        %v1348 = vadd.f32 %v1347, 1.1283791
        %v1349 = vmul.f32 %v1119, %v1348
        %v1350 = vmul.f32 %v1338, 3.8918573e-05
        %v1351 = vadd.f32 %v1350, 0.001143296
        %v1352 = vmul.f32 %v1338, %v1351
        %v1353 = vadd.f32 %v1352, 0.014752088
        %v1354 = vmul.f32 %v1338, %v1353
        %v1355 = vadd.f32 %v1354, 0.112945676
        %v1356 = vmul.f32 %v1338, %v1355
        %v1357 = vadd.f32 %v1356, 0.4994258
        %v1358 = vmul.f32 %v1338, %v1357
        %v1359 = vadd.f32 %v1358, 1.0
        %v1360 = vrcp.pop %v1359
        %v1361 = vmul.f32 %v1359, %v1360
        %v1362 = vsub.f32 1.0, %v1361
        %v1363 = vmul.f32 %v1360, %v1362
        %v1364 = vadd.f32 %v1360, %v1363
        %vm1365 = vweird.f32 %v1359
        %vm1366 = vweird.f32 %v1360
        %vm1367 = vmor %vm1365, %vm1366
        %v1368 = vsel %vm1367, %v1360, %v1364
        %v1369 = vand.u32 2147483647, %v1359
        %vm1370 = vcmp.eq.f32.partialorder %v1369, 8.507059e+37
        %v1371 = vand.u32 %v1359, 2147483648
        %v1372 = vor.u32 1.1754944e-38, %v1371
        %v1373 = vsel %vm1370, %v1372, %v1368
        %v1374 = vmul.f32 %v1349, %v1373
        %v1375 = vmin.f32 %v1374, 1.0
        %v1376 = vmax.f32 %v1375, -1.0
        %v1377 = vmul.f32 %v1120, %v1120
        %v1378 = vmin.f32 16.0, %v1377
        %v1379 = vmul.f32 %v1378, 2.1237322e-06
        %v1380 = vadd.f32 %v1379, 0.00028619796
        %v1381 = vmul.f32 %v1378, %v1380
        %v1382 = vadd.f32 %v1381, 0.0036580483
        %v1383 = vmul.f32 %v1378, %v1382
        %v1384 = vadd.f32 %v1383, 0.05243302
        %v1385 = vmul.f32 %v1378, %v1384
        %v1386 = vadd.f32 %v1385, 0.18741608
        %v1387 = vmul.f32 %v1378, %v1386
        %v1388 = vadd.f32 %v1387, 1.1283791
        %v1389 = vmul.f32 %v1120, %v1388
        %v1390 = vmul.f32 %v1378, 3.8918573e-05
        %v1391 = vadd.f32 %v1390, 0.001143296
        %v1392 = vmul.f32 %v1378, %v1391
        %v1393 = vadd.f32 %v1392, 0.014752088
        %v1394 = vmul.f32 %v1378, %v1393
        %v1395 = vadd.f32 %v1394, 0.112945676
        %v1396 = vmul.f32 %v1378, %v1395
        %v1397 = vadd.f32 %v1396, 0.4994258
        %v1398 = vmul.f32 %v1378, %v1397
        %v1399 = vadd.f32 %v1398, 1.0
        %v1400 = vrcp.pop %v1399
        %v1401 = vmul.f32 %v1399, %v1400
        %v1402 = vsub.f32 1.0, %v1401
        %v1403 = vmul.f32 %v1400, %v1402
        %v1404 = vadd.f32 %v1400, %v1403
        %vm1405 = vweird.f32 %v1399
        %vm1406 = vweird.f32 %v1400
        %vm1407 = vmor %vm1405, %vm1406
        %v1408 = vsel %vm1407, %v1400, %v1404
        %v1409 = vand.u32 2147483647, %v1399
        %vm1410 = vcmp.eq.f32.partialorder %v1409, 8.507059e+37
        %v1411 = vand.u32 %v1399, 2147483648
        %v1412 = vor.u32 1.1754944e-38, %v1411
        %v1413 = vsel %vm1410, %v1412, %v1408
        %v1414 = vmul.f32 %v1389, %v1413
        %v1415 = vmin.f32 %v1414, 1.0
        %v1416 = vmax.f32 %v1415, -1.0
        %v1417 = vmul.f32 %v1121, %v1121
        %v1418 = vmin.f32 16.0, %v1417
        %v1419 = vmul.f32 %v1418, 2.1237322e-06
        %v1420 = vadd.f32 %v1419, 0.00028619796
        %v1421 = vmul.f32 %v1418, %v1420
        %v1422 = vadd.f32 %v1421, 0.0036580483
        %v1423 = vmul.f32 %v1418, %v1422
        %v1424 = vadd.f32 %v1423, 0.05243302
        %v1425 = vmul.f32 %v1418, %v1424
        %v1426 = vadd.f32 %v1425, 0.18741608
        %v1427 = vmul.f32 %v1418, %v1426
        %v1428 = vadd.f32 %v1427, 1.1283791
        %v1429 = vmul.f32 %v1121, %v1428
        %v1430 = vmul.f32 %v1418, 3.8918573e-05
        %v1431 = vadd.f32 %v1430, 0.001143296
        %v1432 = vmul.f32 %v1418, %v1431
        %v1433 = vadd.f32 %v1432, 0.014752088
        %v1434 = vmul.f32 %v1418, %v1433
        %v1435 = vadd.f32 %v1434, 0.112945676
        %v1436 = vmul.f32 %v1418, %v1435
        %v1437 = vadd.f32 %v1436, 0.4994258
        %v1438 = vmul.f32 %v1418, %v1437
        %v1439 = vadd.f32 %v1438, 1.0
        %v1440 = vrcp.pop %v1439
        %v1441 = vmul.f32 %v1439, %v1440
        %v1442 = vsub.f32 1.0, %v1441
        %v1443 = vmul.f32 %v1440, %v1442
        %v1444 = vadd.f32 %v1440, %v1443
        %vm1445 = vweird.f32 %v1439
        %vm1446 = vweird.f32 %v1440
        %vm1447 = vmor %vm1445, %vm1446
        %v1448 = vsel %vm1447, %v1440, %v1444
        %v1449 = vand.u32 2147483647, %v1439
        %vm1450 = vcmp.eq.f32.partialorder %v1449, 8.507059e+37
        %v1451 = vand.u32 %v1439, 2147483648
        %v1452 = vor.u32 1.1754944e-38, %v1451
        %v1453 = vsel %vm1450, %v1452, %v1448
        %v1454 = vmul.f32 %v1429, %v1453
        %v1455 = vmin.f32 %v1454, 1.0
        %v1456 = vmax.f32 %v1455, -1.0
        %v1457 = vmul.f32 %v1122, %v1122
        %v1458 = vmin.f32 16.0, %v1457
        %v1459 = vmul.f32 %v1458, 2.1237322e-06
        %v1460 = vadd.f32 %v1459, 0.00028619796
        %v1461 = vmul.f32 %v1458, %v1460
        %v1462 = vadd.f32 %v1461, 0.0036580483
        %v1463 = vmul.f32 %v1458, %v1462
        %v1464 = vadd.f32 %v1463, 0.05243302
        %v1465 = vmul.f32 %v1458, %v1464
        %v1466 = vadd.f32 %v1465, 0.18741608
        %v1467 = vmul.f32 %v1458, %v1466
        %v1468 = vadd.f32 %v1467, 1.1283791
        %v1469 = vmul.f32 %v1122, %v1468
        %v1470 = vmul.f32 %v1458, 3.8918573e-05
        %v1471 = vadd.f32 %v1470, 0.001143296
        %v1472 = vmul.f32 %v1458, %v1471
        %v1473 = vadd.f32 %v1472, 0.014752088
        %v1474 = vmul.f32 %v1458, %v1473
        %v1475 = vadd.f32 %v1474, 0.112945676
        %v1476 = vmul.f32 %v1458, %v1475
        %v1477 = vadd.f32 %v1476, 0.4994258
        %v1478 = vmul.f32 %v1458, %v1477
        %v1479 = vadd.f32 %v1478, 1.0
        %v1480 = vrcp.pop %v1479
        %v1481 = vmul.f32 %v1479, %v1480
        %v1482 = vsub.f32 1.0, %v1481
        %v1483 = vmul.f32 %v1480, %v1482
        %v1484 = vadd.f32 %v1480, %v1483
        %vm1485 = vweird.f32 %v1479
        %vm1486 = vweird.f32 %v1480
        %vm1487 = vmor %vm1485, %vm1486
        %v1488 = vsel %vm1487, %v1480, %v1484
        %v1489 = vand.u32 2147483647, %v1479
        %vm1490 = vcmp.eq.f32.partialorder %v1489, 8.507059e+37
        %v1491 = vand.u32 %v1479, 2147483648
        %v1492 = vor.u32 1.1754944e-38, %v1491
        %v1493 = vsel %vm1490, %v1492, %v1488
        %v1494 = vmul.f32 %v1469, %v1493
        %v1495 = vmin.f32 %v1494, 1.0
        %v1496 = vmax.f32 %v1495, -1.0
        %v1497 = vmul.f32 %v1123, %v1123
        %v1498 = vmin.f32 16.0, %v1497
        %v1499 = vmul.f32 %v1498, 2.1237322e-06
        %v1500 = vadd.f32 %v1499, 0.00028619796
        %v1501 = vmul.f32 %v1498, %v1500
        %v1502 = vadd.f32 %v1501, 0.0036580483
        %v1503 = vmul.f32 %v1498, %v1502
        %v1504 = vadd.f32 %v1503, 0.05243302
        %v1505 = vmul.f32 %v1498, %v1504
        %v1506 = vadd.f32 %v1505, 0.18741608
        %v1507 = vmul.f32 %v1498, %v1506
        %v1508 = vadd.f32 %v1507, 1.1283791
        %v1509 = vmul.f32 %v1123, %v1508
        %v1510 = vmul.f32 %v1498, 3.8918573e-05
        %v1511 = vadd.f32 %v1510, 0.001143296
        %v1512 = vmul.f32 %v1498, %v1511
        %v1513 = vadd.f32 %v1512, 0.014752088
        %v1514 = vmul.f32 %v1498, %v1513
        %v1515 = vadd.f32 %v1514, 0.112945676
        %v1516 = vmul.f32 %v1498, %v1515
        %v1517 = vadd.f32 %v1516, 0.4994258
        %v1518 = vmul.f32 %v1498, %v1517
        %v1519 = vadd.f32 %v1518, 1.0
        %v1520 = vrcp.pop %v1519
        %v1521 = vmul.f32 %v1519, %v1520
        %v1522 = vsub.f32 1.0, %v1521
        %v1523 = vmul.f32 %v1520, %v1522
        %v1524 = vadd.f32 %v1520, %v1523
        %vm1525 = vweird.f32 %v1519
        %vm1526 = vweird.f32 %v1520
        %vm1527 = vmor %vm1525, %vm1526
        %v1528 = vsel %vm1527, %v1520, %v1524
        %v1529 = vand.u32 2147483647, %v1519
        %vm1530 = vcmp.eq.f32.partialorder %v1529, 8.507059e+37
        %v1531 = vand.u32 %v1519, 2147483648
        %v1532 = vor.u32 1.1754944e-38, %v1531
        %v1533 = vsel %vm1530, %v1532, %v1528
        %v1534 = vmul.f32 %v1509, %v1533
        %v1535 = vmin.f32 %v1534, 1.0
        %v1536 = vmax.f32 %v1535, -1.0
        %v1537 = vmul.f32 %v1124, %v1124
        %v1538 = vmin.f32 16.0, %v1537
        %v1539 = vmul.f32 %v1538, 2.1237322e-06
        %v1540 = vadd.f32 %v1539, 0.00028619796
        %v1541 = vmul.f32 %v1538, %v1540
        %v1542 = vadd.f32 %v1541, 0.0036580483
        %v1543 = vmul.f32 %v1538, %v1542
        %v1544 = vadd.f32 %v1543, 0.05243302
        %v1545 = vmul.f32 %v1538, %v1544
        %v1546 = vadd.f32 %v1545, 0.18741608
        %v1547 = vmul.f32 %v1538, %v1546
        %v1548 = vadd.f32 %v1547, 1.1283791
        %v1549 = vmul.f32 %v1124, %v1548
        %v1550 = vmul.f32 %v1538, 3.8918573e-05
        %v1551 = vadd.f32 %v1550, 0.001143296
        %v1552 = vmul.f32 %v1538, %v1551
        %v1553 = vadd.f32 %v1552, 0.014752088
        %v1554 = vmul.f32 %v1538, %v1553
        %v1555 = vadd.f32 %v1554, 0.112945676
        %v1556 = vmul.f32 %v1538, %v1555
        %v1557 = vadd.f32 %v1556, 0.4994258
        %v1558 = vmul.f32 %v1538, %v1557
        %v1559 = vadd.f32 %v1558, 1.0
        %v1560 = vrcp.pop %v1559
        %v1561 = vmul.f32 %v1559, %v1560
        %v1562 = vsub.f32 1.0, %v1561
        %v1563 = vmul.f32 %v1560, %v1562
        %v1564 = vadd.f32 %v1560, %v1563
        %vm1565 = vweird.f32 %v1559
        %vm1566 = vweird.f32 %v1560
        %vm1567 = vmor %vm1565, %vm1566
        %v1568 = vsel %vm1567, %v1560, %v1564
        %v1569 = vand.u32 2147483647, %v1559
        %vm1570 = vcmp.eq.f32.partialorder %v1569, 8.507059e+37
        %v1571 = vand.u32 %v1559, 2147483648
        %v1572 = vor.u32 1.1754944e-38, %v1571
        %v1573 = vsel %vm1570, %v1572, %v1568
        %v1574 = vmul.f32 %v1549, %v1573
        %v1575 = vmin.f32 %v1574, 1.0
        %v1576 = vmax.f32 %v1575, -1.0
        %v1577 = vmul.f32 %v1125, %v1125
        %v1578 = vmin.f32 16.0, %v1577
        %v1579 = vmul.f32 %v1578, 2.1237322e-06
        %v1580 = vadd.f32 %v1579, 0.00028619796
        %v1581 = vmul.f32 %v1578, %v1580
        %v1582 = vadd.f32 %v1581, 0.0036580483
        %v1583 = vmul.f32 %v1578, %v1582
        %v1584 = vadd.f32 %v1583, 0.05243302
        %v1585 = vmul.f32 %v1578, %v1584
        %v1586 = vadd.f32 %v1585, 0.18741608
        %v1587 = vmul.f32 %v1578, %v1586
        %v1588 = vadd.f32 %v1587, 1.1283791
        %v1589 = vmul.f32 %v1125, %v1588
        %v1590 = vmul.f32 %v1578, 3.8918573e-05
        %v1591 = vadd.f32 %v1590, 0.001143296
        %v1592 = vmul.f32 %v1578, %v1591
        %v1593 = vadd.f32 %v1592, 0.014752088
        %v1594 = vmul.f32 %v1578, %v1593
        %v1595 = vadd.f32 %v1594, 0.112945676
        %v1596 = vmul.f32 %v1578, %v1595
        %v1597 = vadd.f32 %v1596, 0.4994258
        %v1598 = vmul.f32 %v1578, %v1597
        %v1599 = vadd.f32 %v1598, 1.0
        %v1600 = vrcp.pop %v1599
        %v1601 = vmul.f32 %v1599, %v1600
        %v1602 = vsub.f32 1.0, %v1601
        %v1603 = vmul.f32 %v1600, %v1602
        %v1604 = vadd.f32 %v1600, %v1603
        %vm1605 = vweird.f32 %v1599
        %vm1606 = vweird.f32 %v1600
        %vm1607 = vmor %vm1605, %vm1606
        %v1608 = vsel %vm1607, %v1600, %v1604
        %v1609 = vand.u32 2147483647, %v1599
        %vm1610 = vcmp.eq.f32.partialorder %v1609, 8.507059e+37
        %v1611 = vand.u32 %v1599, 2147483648
        %v1612 = vor.u32 1.1754944e-38, %v1611
        %v1613 = vsel %vm1610, %v1612, %v1608
        %v1614 = vmul.f32 %v1589, %v1613
        %v1615 = vmin.f32 %v1614, 1.0
        %v1616 = vmax.f32 %v1615, -1.0
        %v1617 = vmul.f32 %v1126, %v1126
        %v1618 = vmin.f32 16.0, %v1617
        %v1619 = vmul.f32 %v1618, 2.1237322e-06
        %v1620 = vadd.f32 %v1619, 0.00028619796
        %v1621 = vmul.f32 %v1618, %v1620
        %v1622 = vadd.f32 %v1621, 0.0036580483
        %v1623 = vmul.f32 %v1618, %v1622
        %v1624 = vadd.f32 %v1623, 0.05243302
        %v1625 = vmul.f32 %v1618, %v1624
        %v1626 = vadd.f32 %v1625, 0.18741608
        %v1627 = vmul.f32 %v1618, %v1626
        %v1628 = vadd.f32 %v1627, 1.1283791
        %v1629 = vmul.f32 %v1126, %v1628
        %v1630 = vmul.f32 %v1618, 3.8918573e-05
        %v1631 = vadd.f32 %v1630, 0.001143296
        %v1632 = vmul.f32 %v1618, %v1631
        %v1633 = vadd.f32 %v1632, 0.014752088
        %v1634 = vmul.f32 %v1618, %v1633
        %v1635 = vadd.f32 %v1634, 0.112945676
        %v1636 = vmul.f32 %v1618, %v1635
        %v1637 = vadd.f32 %v1636, 0.4994258
        %v1638 = vmul.f32 %v1618, %v1637
        %v1639 = vadd.f32 %v1638, 1.0
        %v1640 = vrcp.pop %v1639
        %v1641 = vmul.f32 %v1639, %v1640
        %v1642 = vsub.f32 1.0, %v1641
        %v1643 = vmul.f32 %v1640, %v1642
        %v1644 = vadd.f32 %v1640, %v1643
        %vm1645 = vweird.f32 %v1639
        %vm1646 = vweird.f32 %v1640
        %vm1647 = vmor %vm1645, %vm1646
        %v1648 = vsel %vm1647, %v1640, %v1644
        %v1649 = vand.u32 2147483647, %v1639
        %vm1650 = vcmp.eq.f32.partialorder %v1649, 8.507059e+37
        %v1651 = vand.u32 %v1639, 2147483648
        %v1652 = vor.u32 1.1754944e-38, %v1651
        %v1653 = vsel %vm1650, %v1652, %v1648
        %v1654 = vmul.f32 %v1629, %v1653
        %v1655 = vmin.f32 %v1654, 1.0
        %v1656 = vmax.f32 %v1655, -1.0
        %v1657 = vmul.f32 %v1127, %v1127
        %v1658 = vmin.f32 16.0, %v1657
        %v1659 = vmul.f32 %v1658, 2.1237322e-06
        %v1660 = vadd.f32 %v1659, 0.00028619796
        %v1661 = vmul.f32 %v1658, %v1660
        %v1662 = vadd.f32 %v1661, 0.0036580483
        %v1663 = vmul.f32 %v1658, %v1662
        %v1664 = vadd.f32 %v1663, 0.05243302
        %v1665 = vmul.f32 %v1658, %v1664
        %v1666 = vadd.f32 %v1665, 0.18741608
        %v1667 = vmul.f32 %v1658, %v1666
        %v1668 = vadd.f32 %v1667, 1.1283791
        %v1669 = vmul.f32 %v1127, %v1668
        %v1670 = vmul.f32 %v1658, 3.8918573e-05
        %v1671 = vadd.f32 %v1670, 0.001143296
        %v1672 = vmul.f32 %v1658, %v1671
        %v1673 = vadd.f32 %v1672, 0.014752088
        %v1674 = vmul.f32 %v1658, %v1673
        %v1675 = vadd.f32 %v1674, 0.112945676
        %v1676 = vmul.f32 %v1658, %v1675
        %v1677 = vadd.f32 %v1676, 0.4994258
        %v1678 = vmul.f32 %v1658, %v1677
        %v1679 = vadd.f32 %v1678, 1.0
        %v1680 = vrcp.pop %v1679
        %v1681 = vmul.f32 %v1679, %v1680
        %v1682 = vsub.f32 1.0, %v1681
        %v1683 = vmul.f32 %v1680, %v1682
        %v1684 = vadd.f32 %v1680, %v1683
        %vm1685 = vweird.f32 %v1679
        %vm1686 = vweird.f32 %v1680
        %vm1687 = vmor %vm1685, %vm1686
        %v1688 = vsel %vm1687, %v1680, %v1684
        %v1689 = vand.u32 2147483647, %v1679
        %vm1690 = vcmp.eq.f32.partialorder %v1689, 8.507059e+37
        %v1691 = vand.u32 %v1679, 2147483648
        %v1692 = vor.u32 1.1754944e-38, %v1691
        %v1693 = vsel %vm1690, %v1692, %v1688
        %v1694 = vmul.f32 %v1669, %v1693
        %v1695 = vmin.f32 %v1694, 1.0
        %v1696 = vmax.f32 %v1695, -1.0
        %v1697 = vmul.f32 %v1128, %v1128
        %v1698 = vmin.f32 16.0, %v1697
        %v1699 = vmul.f32 %v1698, 2.1237322e-06
        %v1700 = vadd.f32 %v1699, 0.00028619796
        %v1701 = vmul.f32 %v1698, %v1700
        %v1702 = vadd.f32 %v1701, 0.0036580483
        %v1703 = vmul.f32 %v1698, %v1702
        %v1704 = vadd.f32 %v1703, 0.05243302
        %v1705 = vmul.f32 %v1698, %v1704
        %v1706 = vadd.f32 %v1705, 0.18741608
        %v1707 = vmul.f32 %v1698, %v1706
        %v1708 = vadd.f32 %v1707, 1.1283791
        %v1709 = vmul.f32 %v1128, %v1708
        %v1710 = vmul.f32 %v1698, 3.8918573e-05
        %v1711 = vadd.f32 %v1710, 0.001143296
        %v1712 = vmul.f32 %v1698, %v1711
        %v1713 = vadd.f32 %v1712, 0.014752088
        %v1714 = vmul.f32 %v1698, %v1713
        %v1715 = vadd.f32 %v1714, 0.112945676
        %v1716 = vmul.f32 %v1698, %v1715
        %v1717 = vadd.f32 %v1716, 0.4994258
        %v1718 = vmul.f32 %v1698, %v1717
        %v1719 = vadd.f32 %v1718, 1.0
        %v1720 = vrcp.pop %v1719
        %v1721 = vmul.f32 %v1719, %v1720
        %v1722 = vsub.f32 1.0, %v1721
        %v1723 = vmul.f32 %v1720, %v1722
        %v1724 = vadd.f32 %v1720, %v1723
        %vm1725 = vweird.f32 %v1719
        %vm1726 = vweird.f32 %v1720
        %vm1727 = vmor %vm1725, %vm1726
        %v1728 = vsel %vm1727, %v1720, %v1724
        %v1729 = vand.u32 2147483647, %v1719
        %vm1730 = vcmp.eq.f32.partialorder %v1729, 8.507059e+37
        %v1731 = vand.u32 %v1719, 2147483648
        %v1732 = vor.u32 1.1754944e-38, %v1731
        %v1733 = vsel %vm1730, %v1732, %v1728
        %v1734 = vmul.f32 %v1709, %v1733
        %v1735 = vmin.f32 %v1734, 1.0
        %v1736 = vmax.f32 %v1735, -1.0
        %v1737 = vmul.f32 %v1129, %v1129
        %v1738 = vmin.f32 16.0, %v1737
        %v1739 = vmul.f32 %v1738, 2.1237322e-06
        %v1740 = vadd.f32 %v1739, 0.00028619796
        %v1741 = vmul.f32 %v1738, %v1740
        %v1742 = vadd.f32 %v1741, 0.0036580483
        %v1743 = vmul.f32 %v1738, %v1742
        %v1744 = vadd.f32 %v1743, 0.05243302
        %v1745 = vmul.f32 %v1738, %v1744
        %v1746 = vadd.f32 %v1745, 0.18741608
        %v1747 = vmul.f32 %v1738, %v1746
        %v1748 = vadd.f32 %v1747, 1.1283791
        %v1749 = vmul.f32 %v1129, %v1748
        %v1750 = vmul.f32 %v1738, 3.8918573e-05
        %v1751 = vadd.f32 %v1750, 0.001143296
        %v1752 = vmul.f32 %v1738, %v1751
        %v1753 = vadd.f32 %v1752, 0.014752088
        %v1754 = vmul.f32 %v1738, %v1753
        %v1755 = vadd.f32 %v1754, 0.112945676
        %v1756 = vmul.f32 %v1738, %v1755
        %v1757 = vadd.f32 %v1756, 0.4994258
        %v1758 = vmul.f32 %v1738, %v1757
        %v1759 = vadd.f32 %v1758, 1.0
        %v1760 = vrcp.pop %v1759
        %v1761 = vmul.f32 %v1759, %v1760
        %v1762 = vsub.f32 1.0, %v1761
        %v1763 = vmul.f32 %v1760, %v1762
        %v1764 = vadd.f32 %v1760, %v1763
        %vm1765 = vweird.f32 %v1759
        %vm1766 = vweird.f32 %v1760
        %vm1767 = vmor %vm1765, %vm1766
        %v1768 = vsel %vm1767, %v1760, %v1764
        %v1769 = vand.u32 2147483647, %v1759
        %vm1770 = vcmp.eq.f32.partialorder %v1769, 8.507059e+37
        %v1771 = vand.u32 %v1759, 2147483648
        %v1772 = vor.u32 1.1754944e-38, %v1771
        %v1773 = vsel %vm1770, %v1772, %v1768
        %v1774 = vmul.f32 %v1749, %v1773
        %v1775 = vmin.f32 %v1774, 1.0
        %v1776 = vmax.f32 %v1775, -1.0
        %v1777 = vmul.f32 %v1130, %v1130
        %v1778 = vmin.f32 16.0, %v1777
        %v1779 = vmul.f32 %v1778, 2.1237322e-06
        %v1780 = vadd.f32 %v1779, 0.00028619796
        %v1781 = vmul.f32 %v1778, %v1780
        %v1782 = vadd.f32 %v1781, 0.0036580483
        %v1783 = vmul.f32 %v1778, %v1782
        %v1784 = vadd.f32 %v1783, 0.05243302
        %v1785 = vmul.f32 %v1778, %v1784
        %v1786 = vadd.f32 %v1785, 0.18741608
        %v1787 = vmul.f32 %v1778, %v1786
        %v1788 = vadd.f32 %v1787, 1.1283791
        %v1789 = vmul.f32 %v1130, %v1788
        %v1790 = vmul.f32 %v1778, 3.8918573e-05
        %v1791 = vadd.f32 %v1790, 0.001143296
        %v1792 = vmul.f32 %v1778, %v1791
        %v1793 = vadd.f32 %v1792, 0.014752088
        %v1794 = vmul.f32 %v1778, %v1793
        %v1795 = vadd.f32 %v1794, 0.112945676
        %v1796 = vmul.f32 %v1778, %v1795
        %v1797 = vadd.f32 %v1796, 0.4994258
        %v1798 = vmul.f32 %v1778, %v1797
        %v1799 = vadd.f32 %v1798, 1.0
        %v1800 = vrcp.pop %v1799
        %v1801 = vmul.f32 %v1799, %v1800
        %v1802 = vsub.f32 1.0, %v1801
        %v1803 = vmul.f32 %v1800, %v1802
        %v1804 = vadd.f32 %v1800, %v1803
        %vm1805 = vweird.f32 %v1799
        %vm1806 = vweird.f32 %v1800
        %vm1807 = vmor %vm1805, %vm1806
        %v1808 = vsel %vm1807, %v1800, %v1804
        %v1809 = vand.u32 2147483647, %v1799
        %vm1810 = vcmp.eq.f32.partialorder %v1809, 8.507059e+37
        %v1811 = vand.u32 %v1799, 2147483648
        %v1812 = vor.u32 1.1754944e-38, %v1811
        %v1813 = vsel %vm1810, %v1812, %v1808
        %v1814 = vmul.f32 %v1789, %v1813
        %v1815 = vmin.f32 %v1814, 1.0
        %v1816 = vmax.f32 %v1815, -1.0
        %v1817 = vmul.f32 %v1131, %v1131
        %v1818 = vmin.f32 16.0, %v1817
        %v1819 = vmul.f32 %v1818, 2.1237322e-06
        %v1820 = vadd.f32 %v1819, 0.00028619796
        %v1821 = vmul.f32 %v1818, %v1820
        %v1822 = vadd.f32 %v1821, 0.0036580483
        %v1823 = vmul.f32 %v1818, %v1822
        %v1824 = vadd.f32 %v1823, 0.05243302
        %v1825 = vmul.f32 %v1818, %v1824
        %v1826 = vadd.f32 %v1825, 0.18741608
        %v1827 = vmul.f32 %v1818, %v1826
        %v1828 = vadd.f32 %v1827, 1.1283791
        %v1829 = vmul.f32 %v1131, %v1828
        %v1830 = vmul.f32 %v1818, 3.8918573e-05
        %v1831 = vadd.f32 %v1830, 0.001143296
        %v1832 = vmul.f32 %v1818, %v1831
        %v1833 = vadd.f32 %v1832, 0.014752088
        %v1834 = vmul.f32 %v1818, %v1833
        %v1835 = vadd.f32 %v1834, 0.112945676
        %v1836 = vmul.f32 %v1818, %v1835
        %v1837 = vadd.f32 %v1836, 0.4994258
        %v1838 = vmul.f32 %v1818, %v1837
        %v1839 = vadd.f32 %v1838, 1.0
        %v1840 = vrcp.pop %v1839
        %v1841 = vmul.f32 %v1839, %v1840
        %v1842 = vsub.f32 1.0, %v1841
        %v1843 = vmul.f32 %v1840, %v1842
        %v1844 = vadd.f32 %v1840, %v1843
        %vm1845 = vweird.f32 %v1839
        %vm1846 = vweird.f32 %v1840
        %vm1847 = vmor %vm1845, %vm1846
        %v1848 = vsel %vm1847, %v1840, %v1844
        %v1849 = vand.u32 2147483647, %v1839
        %vm1850 = vcmp.eq.f32.partialorder %v1849, 8.507059e+37
        %v1851 = vand.u32 %v1839, 2147483648
        %v1852 = vor.u32 1.1754944e-38, %v1851
        %v1853 = vsel %vm1850, %v1852, %v1848
        %v1854 = vmul.f32 %v1829, %v1853
        %v1855 = vmin.f32 %v1854, 1.0
        %v1856 = vmax.f32 %v1855, -1.0
        %v1857 = vmul.f32 %v1132, %v1132
        %v1858 = vmin.f32 16.0, %v1857
        %v1859 = vmul.f32 %v1858, 2.1237322e-06
        %v1860 = vadd.f32 %v1859, 0.00028619796
        %v1861 = vmul.f32 %v1858, %v1860
        %v1862 = vadd.f32 %v1861, 0.0036580483
        %v1863 = vmul.f32 %v1858, %v1862
        %v1864 = vadd.f32 %v1863, 0.05243302
        %v1865 = vmul.f32 %v1858, %v1864
        %v1866 = vadd.f32 %v1865, 0.18741608
        %v1867 = vmul.f32 %v1858, %v1866
        %v1868 = vadd.f32 %v1867, 1.1283791
        %v1869 = vmul.f32 %v1132, %v1868
        %v1870 = vmul.f32 %v1858, 3.8918573e-05
        %v1871 = vadd.f32 %v1870, 0.001143296
        %v1872 = vmul.f32 %v1858, %v1871
        %v1873 = vadd.f32 %v1872, 0.014752088
        %v1874 = vmul.f32 %v1858, %v1873
        %v1875 = vadd.f32 %v1874, 0.112945676
        %v1876 = vmul.f32 %v1858, %v1875
        %v1877 = vadd.f32 %v1876, 0.4994258
        %v1878 = vmul.f32 %v1858, %v1877
        %v1879 = vadd.f32 %v1878, 1.0
        %v1880 = vrcp.pop %v1879
        %v1881 = vmul.f32 %v1879, %v1880
        %v1882 = vsub.f32 1.0, %v1881
        %v1883 = vmul.f32 %v1880, %v1882
        %v1884 = vadd.f32 %v1880, %v1883
        %vm1885 = vweird.f32 %v1879
        %vm1886 = vweird.f32 %v1880
        %vm1887 = vmor %vm1885, %vm1886
        %v1888 = vsel %vm1887, %v1880, %v1884
        %v1889 = vand.u32 2147483647, %v1879
        %vm1890 = vcmp.eq.f32.partialorder %v1889, 8.507059e+37
        %v1891 = vand.u32 %v1879, 2147483648
        %v1892 = vor.u32 1.1754944e-38, %v1891
        %v1893 = vsel %vm1890, %v1892, %v1888
        %v1894 = vmul.f32 %v1869, %v1893
        %v1895 = vmin.f32 %v1894, 1.0
        %v1896 = vmax.f32 %v1895, -1.0
        %v1897 = vmul.f32 %v1133, %v1133
        %v1898 = vmin.f32 16.0, %v1897
        %v1899 = vmul.f32 %v1898, 2.1237322e-06
        %v1900 = vadd.f32 %v1899, 0.00028619796
        %v1901 = vmul.f32 %v1898, %v1900
        %v1902 = vadd.f32 %v1901, 0.0036580483
        %v1903 = vmul.f32 %v1898, %v1902
        %v1904 = vadd.f32 %v1903, 0.05243302
        %v1905 = vmul.f32 %v1898, %v1904
        %v1906 = vadd.f32 %v1905, 0.18741608
        %v1907 = vmul.f32 %v1898, %v1906
        %v1908 = vadd.f32 %v1907, 1.1283791
        %v1909 = vmul.f32 %v1133, %v1908
        %v1910 = vmul.f32 %v1898, 3.8918573e-05
        %v1911 = vadd.f32 %v1910, 0.001143296
        %v1912 = vmul.f32 %v1898, %v1911
        %v1913 = vadd.f32 %v1912, 0.014752088
        %v1914 = vmul.f32 %v1898, %v1913
        %v1915 = vadd.f32 %v1914, 0.112945676
        %v1916 = vmul.f32 %v1898, %v1915
        %v1917 = vadd.f32 %v1916, 0.4994258
        %v1918 = vmul.f32 %v1898, %v1917
        %v1919 = vadd.f32 %v1918, 1.0
        %v1920 = vrcp.pop %v1919
        %v1921 = vmul.f32 %v1919, %v1920
        %v1922 = vsub.f32 1.0, %v1921
        %v1923 = vmul.f32 %v1920, %v1922
        %v1924 = vadd.f32 %v1920, %v1923
        %vm1925 = vweird.f32 %v1919
        %vm1926 = vweird.f32 %v1920
        %vm1927 = vmor %vm1925, %vm1926
        %v1928 = vsel %vm1927, %v1920, %v1924
        %v1929 = vand.u32 2147483647, %v1919
        %vm1930 = vcmp.eq.f32.partialorder %v1929, 8.507059e+37
        %v1931 = vand.u32 %v1919, 2147483648
        %v1932 = vor.u32 1.1754944e-38, %v1931
        %v1933 = vsel %vm1930, %v1932, %v1928
        %v1934 = vmul.f32 %v1909, %v1933
        %v1935 = vmin.f32 %v1934, 1.0
        %v1936 = vmax.f32 %v1935, -1.0
        %v1937 = vmul.f32 %v1134, %v1134
        %v1938 = vmin.f32 16.0, %v1937
        %v1939 = vmul.f32 %v1938, 2.1237322e-06
        %v1940 = vadd.f32 %v1939, 0.00028619796
        %v1941 = vmul.f32 %v1938, %v1940
        %v1942 = vadd.f32 %v1941, 0.0036580483
        %v1943 = vmul.f32 %v1938, %v1942
        %v1944 = vadd.f32 %v1943, 0.05243302
        %v1945 = vmul.f32 %v1938, %v1944
        %v1946 = vadd.f32 %v1945, 0.18741608
        %v1947 = vmul.f32 %v1938, %v1946
        %v1948 = vadd.f32 %v1947, 1.1283791
        %v1949 = vmul.f32 %v1134, %v1948
        %v1950 = vmul.f32 %v1938, 3.8918573e-05
        %v1951 = vadd.f32 %v1950, 0.001143296
        %v1952 = vmul.f32 %v1938, %v1951
        %v1953 = vadd.f32 %v1952, 0.014752088
        %v1954 = vmul.f32 %v1938, %v1953
        %v1955 = vadd.f32 %v1954, 0.112945676
        %v1956 = vmul.f32 %v1938, %v1955
        %v1957 = vadd.f32 %v1956, 0.4994258
        %v1958 = vmul.f32 %v1938, %v1957
        %v1959 = vadd.f32 %v1958, 1.0
        %v1960 = vrcp.pop %v1959
        %v1961 = vmul.f32 %v1959, %v1960
        %v1962 = vsub.f32 1.0, %v1961
        %v1963 = vmul.f32 %v1960, %v1962
        %v1964 = vadd.f32 %v1960, %v1963
        %vm1965 = vweird.f32 %v1959
        %vm1966 = vweird.f32 %v1960
        %vm1967 = vmor %vm1965, %vm1966
        %v1968 = vsel %vm1967, %v1960, %v1964
        %v1969 = vand.u32 2147483647, %v1959
        %vm1970 = vcmp.eq.f32.partialorder %v1969, 8.507059e+37
        %v1971 = vand.u32 %v1959, 2147483648
        %v1972 = vor.u32 1.1754944e-38, %v1971
        %v1973 = vsel %vm1970, %v1972, %v1968
        %v1974 = vmul.f32 %v1949, %v1973
        %v1975 = vmin.f32 %v1974, 1.0
        %v1976 = vmax.f32 %v1975, -1.0
        %v1977 = vmul.f32 %v1135, %v1135
        %v1978 = vmin.f32 16.0, %v1977
        %v1979 = vmul.f32 %v1978, 2.1237322e-06
        %v1980 = vadd.f32 %v1979, 0.00028619796
        %v1981 = vmul.f32 %v1978, %v1980
        %v1982 = vadd.f32 %v1981, 0.0036580483
        %v1983 = vmul.f32 %v1978, %v1982
        %v1984 = vadd.f32 %v1983, 0.05243302
        %v1985 = vmul.f32 %v1978, %v1984
        %v1986 = vadd.f32 %v1985, 0.18741608
        %v1987 = vmul.f32 %v1978, %v1986
        %v1988 = vadd.f32 %v1987, 1.1283791
        %v1989 = vmul.f32 %v1135, %v1988
        %v1990 = vmul.f32 %v1978, 3.8918573e-05
        %v1991 = vadd.f32 %v1990, 0.001143296
        %v1992 = vmul.f32 %v1978, %v1991
        %v1993 = vadd.f32 %v1992, 0.014752088
        %v1994 = vmul.f32 %v1978, %v1993
        %v1995 = vadd.f32 %v1994, 0.112945676
        %v1996 = vmul.f32 %v1978, %v1995
        %v1997 = vadd.f32 %v1996, 0.4994258
        %v1998 = vmul.f32 %v1978, %v1997
        %v1999 = vadd.f32 %v1998, 1.0
        %v2000 = vrcp.pop %v1999
        %v2001 = vmul.f32 %v1999, %v2000
        %v2002 = vsub.f32 1.0, %v2001
        %v2003 = vmul.f32 %v2000, %v2002
        %v2004 = vadd.f32 %v2000, %v2003
        %vm2005 = vweird.f32 %v1999
        %vm2006 = vweird.f32 %v2000
        %vm2007 = vmor %vm2005, %vm2006
        %v2008 = vsel %vm2007, %v2000, %v2004
        %v2009 = vand.u32 2147483647, %v1999
        %vm2010 = vcmp.eq.f32.partialorder %v2009, 8.507059e+37
        %v2011 = vand.u32 %v1999, 2147483648
        %v2012 = vor.u32 1.1754944e-38, %v2011
        %v2013 = vsel %vm2010, %v2012, %v2008
        %v2014 = vmul.f32 %v1989, %v2013
        %v2015 = vmin.f32 %v2014, 1.0
        %v2016 = vmax.f32 %v2015, -1.0
        %v2017 = vmul.f32 %v1136, %v1136
        %v2018 = vmin.f32 16.0, %v2017
        %v2019 = vmul.f32 %v2018, 2.1237322e-06
        %v2020 = vadd.f32 %v2019, 0.00028619796
        %v2021 = vmul.f32 %v2018, %v2020
        %v2022 = vadd.f32 %v2021, 0.0036580483
        %v2023 = vmul.f32 %v2018, %v2022
        %v2024 = vadd.f32 %v2023, 0.05243302
        %v2025 = vmul.f32 %v2018, %v2024
        %v2026 = vadd.f32 %v2025, 0.18741608
        %v2027 = vmul.f32 %v2018, %v2026
        %v2028 = vadd.f32 %v2027, 1.1283791
        %v2029 = vmul.f32 %v1136, %v2028
        %v2030 = vmul.f32 %v2018, 3.8918573e-05
        %v2031 = vadd.f32 %v2030, 0.001143296
        %v2032 = vmul.f32 %v2018, %v2031
        %v2033 = vadd.f32 %v2032, 0.014752088
        %v2034 = vmul.f32 %v2018, %v2033
        %v2035 = vadd.f32 %v2034, 0.112945676
        %v2036 = vmul.f32 %v2018, %v2035
        %v2037 = vadd.f32 %v2036, 0.4994258
        %v2038 = vmul.f32 %v2018, %v2037
        %v2039 = vadd.f32 %v2038, 1.0
        %v2040 = vrcp.pop %v2039
        %v2041 = vmul.f32 %v2039, %v2040
        %v2042 = vsub.f32 1.0, %v2041
        %v2043 = vmul.f32 %v2040, %v2042
        %v2044 = vadd.f32 %v2040, %v2043
        %vm2045 = vweird.f32 %v2039
        %vm2046 = vweird.f32 %v2040
        %vm2047 = vmor %vm2045, %vm2046
        %v2048 = vsel %vm2047, %v2040, %v2044
        %v2049 = vand.u32 2147483647, %v2039
        %vm2050 = vcmp.eq.f32.partialorder %v2049, 8.507059e+37
        %v2051 = vand.u32 %v2039, 2147483648
        %v2052 = vor.u32 1.1754944e-38, %v2051
        %v2053 = vsel %vm2050, %v2052, %v2048
        %v2054 = vmul.f32 %v2029, %v2053
        %v2055 = vmin.f32 %v2054, 1.0
        %v2056 = vmax.f32 %v2055, -1.0
        %v2057 = vadd.f32 %v1176, 1.0
        %v2058 = vadd.f32 %v1216, 1.0
        %v2059 = vadd.f32 %v1256, 1.0
        %v2060 = vadd.f32 %v1296, 1.0
        %v2061 = vadd.f32 %v1336, 1.0
        %v2062 = vadd.f32 %v1376, 1.0
        %v2063 = vadd.f32 %v1416, 1.0
        %v2064 = vadd.f32 %v1456, 1.0
        %v2065 = vadd.f32 %v1496, 1.0
        %v2066 = vadd.f32 %v1536, 1.0
        %v2067 = vadd.f32 %v1576, 1.0
        %v2068 = vadd.f32 %v1616, 1.0
        %v2069 = vadd.f32 %v1656, 1.0
        %v2070 = vadd.f32 %v1696, 1.0
        %v2071 = vadd.f32 %v1736, 1.0
        %v2072 = vadd.f32 %v1776, 1.0
        %v2073 = vadd.f32 %v1816, 1.0
        %v2074 = vadd.f32 %v1856, 1.0
        %v2075 = vadd.f32 %v1896, 1.0
        %v2076 = vadd.f32 %v1936, 1.0
        %v2077 = vadd.f32 %v1976, 1.0
        %v2078 = vadd.f32 %v2016, 1.0
        %v2079 = vadd.f32 %v2056, 1.0
        %v2080 = vmul.f32 %v1091, %v2057
        %v2081 = vmul.f32 %v1092, %v2058
        %v2082 = vmul.f32 %v1093, %v2059
        %v2083 = vmul.f32 %v1094, %v2060
        %v2084 = vmul.f32 %v1095, %v2061
        %v2085 = vmul.f32 %v1096, %v2062
        %v2086 = vmul.f32 %v1097, %v2063
        %v2087 = vmul.f32 %v1098, %v2064
        %v2088 = vmul.f32 %v1099, %v2065
        %v2089 = vmul.f32 %v1100, %v2066
        %v2090 = vmul.f32 %v1101, %v2067
        %v2091 = vmul.f32 %v1102, %v2068
        %v2092 = vmul.f32 %v1103, %v2069
        %v2093 = vmul.f32 %v1104, %v2070
        %v2094 = vmul.f32 %v1105, %v2071
        %v2095 = vmul.f32 %v1106, %v2072
        %v2096 = vmul.f32 %v1107, %v2073
        %v2097 = vmul.f32 %v1108, %v2074
        %v2098 = vmul.f32 %v1109, %v2075
        %v2099 = vmul.f32 %v1110, %v2076
        %v2100 = vmul.f32 %v1111, %v2077
        %v2101 = vmul.f32 %v1112, %v2078
        %v2102 = vmul.f32 %v1113, %v2079
        %s2103 = scalar_lea.vmem %s3, 368
        %v2104 = vld [vmem:[%s2103] sm:$0xff]
        %v2105 = vld [vmem:[%s2103 + $0x8] sm:$0xff]
        %v2106 = vld [vmem:[%s2103 + $0x10] sm:$0xff]
        %v2107 = vld [vmem:[%s2103 + $0x18] sm:$0xff]
        %v2108 = vld [vmem:[%s2103 + $0x20] sm:$0xff]
        %v2109 = vld [vmem:[%s2103 + $0x28] sm:$0xff]
        %v2110 = vld [vmem:[%s2103 + $0x30] sm:$0xff]
        %v2111 = vld [vmem:[%s2103 + $0x38] sm:$0xff]
        %v2112 = vld [vmem:[%s2103 + $0x40] sm:$0xff]
        %v2113 = vld [vmem:[%s2103 + $0x48] sm:$0xff]
        %v2114 = vld [vmem:[%s2103 + $0x50] sm:$0xff]
        %v2115 = vld [vmem:[%s2103 + $0x58] sm:$0xff]
        %v2116 = vld [vmem:[%s2103 + $0x60] sm:$0xff]
        %v2117 = vld [vmem:[%s2103 + $0x68] sm:$0xff]
        %v2118 = vld [vmem:[%s2103 + $0x70] sm:$0xff]
        %v2119 = vld [vmem:[%s2103 + $0x78] sm:$0xff]
        %v2120 = vld [vmem:[%s2103 + $0x80] sm:$0xff]
        %v2121 = vld [vmem:[%s2103 + $0x88] sm:$0xff]
        %v2122 = vld [vmem:[%s2103 + $0x90] sm:$0xff]
        %v2123 = vld [vmem:[%s2103 + $0x98] sm:$0xff]
        %v2124 = vld [vmem:[%s2103 + $0xa0] sm:$0xff]
        %v2125 = vld [vmem:[%s2103 + $0xa8] sm:$0xff]
        %v2126 = vld [vmem:[%s2103 + $0xb0] sm:$0xff]
        %v2127 = vld [vmem:[%s2103 + $0xb8] sm:$0xff]
        %v2128 = vld [vmem:[%s2103 + $0xc0] sm:$0xff]
        %v2129 = vld [vmem:[%s2103 + $0xc8] sm:$0xff]
        %v2130 = vld [vmem:[%s2103 + $0xd0] sm:$0xff]
        %v2131 = vld [vmem:[%s2103 + $0xd8] sm:$0xff]
        %v2132 = vld [vmem:[%s2103 + $0xe0] sm:$0xff]
        %v2133 = vld [vmem:[%s2103 + $0xe8] sm:$0xff]
        %v2134 = vld [vmem:[%s2103 + $0xf0] sm:$0xff]
        %v2135 = vld [vmem:[%s2103 + $0xf8] sm:$0xff]
        %v2136 = vld [vmem:[%s2103 + $0x100] sm:$0xff]
        %v2137 = vld [vmem:[%s2103 + $0x108] sm:$0xff]
        %v2138 = vld [vmem:[%s2103 + $0x110] sm:$0xff]
        %v2139 = vld [vmem:[%s2103 + $0x118] sm:$0xff]
        %v2140 = vld [vmem:[%s2103 + $0x120] sm:$0xff]
        %v2141 = vld [vmem:[%s2103 + $0x128] sm:$0xff]
        %v2142 = vld [vmem:[%s2103 + $0x130] sm:$0xff]
        %v2143 = vld [vmem:[%s2103 + $0x138] sm:$0xff]
        %v2144 = vld [vmem:[%s2103 + $0x140] sm:$0xff]
        %v2145 = vld [vmem:[%s2103 + $0x148] sm:$0xff]
        %v2146 = vld [vmem:[%s2103 + $0x150] sm:$0xff]
        %v2147 = vld [vmem:[%s2103 + $0x158] sm:$0xff]
        %v2148 = vld [vmem:[%s2103 + $0x160] sm:$0xf]
        %v2149 = vld [vmem:[%s2103 + $0x168] sm:$0xf]
        %s2150 = scalar_lea.vmem %s4, 184
        %v2151 = vld [vmem:[%s2150] sm:$0xff]
        %v2152 = vld [vmem:[%s2150 + $0x8] sm:$0xff]
        %v2153 = vld [vmem:[%s2150 + $0x10] sm:$0xff]
        %v2154 = vld [vmem:[%s2150 + $0x18] sm:$0xff]
        %v2155 = vld [vmem:[%s2150 + $0x20] sm:$0xff]
        %v2156 = vld [vmem:[%s2150 + $0x28] sm:$0xff]
        %v2157 = vld [vmem:[%s2150 + $0x30] sm:$0xff]
        %v2158 = vld [vmem:[%s2150 + $0x38] sm:$0xff]
        %v2159 = vld [vmem:[%s2150 + $0x40] sm:$0xff]
        %v2160 = vld [vmem:[%s2150 + $0x48] sm:$0xff]
        %v2161 = vld [vmem:[%s2150 + $0x50] sm:$0xff]
        %v2162 = vld [vmem:[%s2150 + $0x58] sm:$0xff]
        %v2163 = vld [vmem:[%s2150 + $0x60] sm:$0xff]
        %v2164 = vld [vmem:[%s2150 + $0x68] sm:$0xff]
        %v2165 = vld [vmem:[%s2150 + $0x70] sm:$0xff]
        %v2166 = vld [vmem:[%s2150 + $0x78] sm:$0xff]
        %v2167 = vld [vmem:[%s2150 + $0x80] sm:$0xff]
        %v2168 = vld [vmem:[%s2150 + $0x88] sm:$0xff]
        %v2169 = vld [vmem:[%s2150 + $0x90] sm:$0xff]
        %v2170 = vld [vmem:[%s2150 + $0x98] sm:$0xff]
        %v2171 = vld [vmem:[%s2150 + $0xa0] sm:$0xff]
        %v2172 = vld [vmem:[%s2150 + $0xa8] sm:$0xff]
        %v2173 = vld [vmem:[%s2150 + $0xb0] sm:$0xf]
        %2175 = vset.pattern.permute.xlu0 0
        %2176 = vperm.xlu0 %2175, %v2151
        %v2177 = vpop.permute.xlu0 %2176
        %2180 = vset.pattern.permute.xlu0 0
        %2181 = vperm.xlu0 %2180, %v2152
        %v2182 = vpop.permute.xlu0 %2181
        %2185 = vset.pattern.permute.xlu0 0
        %2186 = vperm.xlu0 %2185, %v2153
        %v2187 = vpop.permute.xlu0 %2186
        %2190 = vset.pattern.permute.xlu0 0
        %2191 = vperm.xlu0 %2190, %v2154
        %v2192 = vpop.permute.xlu0 %2191
        %2195 = vset.pattern.permute.xlu0 0
        %2196 = vperm.xlu0 %2195, %v2155
        %v2197 = vpop.permute.xlu0 %2196
        %2200 = vset.pattern.permute.xlu0 0
        %2201 = vperm.xlu0 %2200, %v2156
        %v2202 = vpop.permute.xlu0 %2201
        %2205 = vset.pattern.permute.xlu0 0
        %2206 = vperm.xlu0 %2205, %v2157
        %v2207 = vpop.permute.xlu0 %2206
        %2210 = vset.pattern.permute.xlu0 0
        %2211 = vperm.xlu0 %2210, %v2158
        %v2212 = vpop.permute.xlu0 %2211
        %2215 = vset.pattern.permute.xlu0 0
        %2216 = vperm.xlu0 %2215, %v2159
        %v2217 = vpop.permute.xlu0 %2216
        %2220 = vset.pattern.permute.xlu0 0
        %2221 = vperm.xlu0 %2220, %v2160
        %v2222 = vpop.permute.xlu0 %2221
        %2225 = vset.pattern.permute.xlu0 0
        %2226 = vperm.xlu0 %2225, %v2161
        %v2227 = vpop.permute.xlu0 %2226
        %2230 = vset.pattern.permute.xlu0 0
        %2231 = vperm.xlu0 %2230, %v2162
        %v2232 = vpop.permute.xlu0 %2231
        %2235 = vset.pattern.permute.xlu0 0
        %2236 = vperm.xlu0 %2235, %v2163
        %v2237 = vpop.permute.xlu0 %2236
        %2240 = vset.pattern.permute.xlu0 0
        %2241 = vperm.xlu0 %2240, %v2164
        %v2242 = vpop.permute.xlu0 %2241
        %2245 = vset.pattern.permute.xlu0 0
        %2246 = vperm.xlu0 %2245, %v2165
        %v2247 = vpop.permute.xlu0 %2246
        %2250 = vset.pattern.permute.xlu0 0
        %2251 = vperm.xlu0 %2250, %v2166
        %v2252 = vpop.permute.xlu0 %2251
        %2255 = vset.pattern.permute.xlu0 0
        %2256 = vperm.xlu0 %2255, %v2167
        %v2257 = vpop.permute.xlu0 %2256
        %2260 = vset.pattern.permute.xlu0 0
        %2261 = vperm.xlu0 %2260, %v2168
        %v2262 = vpop.permute.xlu0 %2261
        %2265 = vset.pattern.permute.xlu0 0
        %2266 = vperm.xlu0 %2265, %v2169
        %v2267 = vpop.permute.xlu0 %2266
        %2270 = vset.pattern.permute.xlu0 0
        %2271 = vperm.xlu0 %2270, %v2170
        %v2272 = vpop.permute.xlu0 %2271
        %2275 = vset.pattern.permute.xlu0 0
        %2276 = vperm.xlu0 %2275, %v2171
        %v2277 = vpop.permute.xlu0 %2276
        %2280 = vset.pattern.permute.xlu0 0
        %2281 = vperm.xlu0 %2280, %v2172
        %v2282 = vpop.permute.xlu0 %2281
        %2285 = vset.pattern.permute.xlu0 0
        %2286 = vperm.xlu0 %2285, %v2173
        %v2287 = vpop.permute.xlu0 %2286
        %v2290 = vsel %vm845, %v2105, 0
        %v2293 = vsel %vm845, %v2107, 0
        %v2296 = vsel %vm845, %v2109, 0
        %v2299 = vsel %vm845, %v2111, 0
        %v2302 = vsel %vm845, %v2113, 0
        %v2305 = vsel %vm845, %v2115, 0
        %v2308 = vsel %vm845, %v2117, 0
        %v2311 = vsel %vm845, %v2119, 0
        %v2314 = vsel %vm845, %v2121, 0
        %v2317 = vsel %vm845, %v2123, 0
        %v2320 = vsel %vm845, %v2125, 0
        %v2323 = vsel %vm845, %v2127, 0
        %v2326 = vsel %vm845, %v2129, 0
        %v2329 = vsel %vm845, %v2131, 0
        %v2332 = vsel %vm845, %v2133, 0
        %v2335 = vsel %vm845, %v2135, 0
        %v2338 = vsel %vm845, %v2137, 0
        %v2341 = vsel %vm845, %v2139, 0
        %v2344 = vsel %vm845, %v2141, 0
        %v2347 = vsel %vm845, %v2143, 0
        %v2350 = vsel %vm845, %v2145, 0
        %v2353 = vsel %vm845, %v2147, 0
        %v2356 = vsel %vm845, %v2149, 0
        %v2359 = vsel %vm915, %v2102, 0
        %2361 = vmatpush.msra.mxu0 %v2095
        %2362 = vmatpush.msra.mxu0 %v2094
        %2363 = vmatpush.msra.mxu0 %v2093
        %2364 = vmatpush.msra.mxu0 %v2092
        %2365 = vmatpush.msra.mxu0 %v2091
        %2366 = vmatpush.msra.mxu0 %v2090
        %2367 = vmatpush.msra.mxu0 %v2089
        %2368 = vmatpush.msra.mxu0 %v2088
        %2369 = vmatpush.msra.mxu0 %v2087
        %2370 = vmatpush.msra.mxu0 %v2086
        %2371 = vmatpush.msra.mxu0 %v2085
        %2372 = vmatpush.msra.mxu0 %v2084
        %2373 = vmatpush.msra.mxu0 %v2083
        %2374 = vmatpush.msra.mxu0 %v2082
        %2375 = vmatpush.msra.mxu0 %v2081
        %2376 = vmatpush.msra.mxu0 %v2080
        %2377 = vmatmul.f32.gmra.mxu0 %v2104
        %v2378 = vpop.f32.mrf.mxu0
        %v2379 = vadd.f32 %v2177, %v2378
        %2380 = vmatmul.f32.gmra.mxu0 %v2106
        %v2381 = vpop.f32.mrf.mxu0
        %v2382 = vadd.f32 %v2182, %v2381
        %2383 = vmatmul.f32.gmra.mxu0 %v2108
        %v2384 = vpop.f32.mrf.mxu0
        %v2385 = vadd.f32 %v2187, %v2384
        %2386 = vmatmul.f32.gmra.mxu0 %v2110
        %v2387 = vpop.f32.mrf.mxu0
        %v2388 = vadd.f32 %v2192, %v2387
        %2389 = vmatmul.f32.gmra.mxu0 %v2112
        %v2390 = vpop.f32.mrf.mxu0
        %v2391 = vadd.f32 %v2197, %v2390
        %2392 = vmatmul.f32.gmra.mxu0 %v2114
        %v2393 = vpop.f32.mrf.mxu0
        %v2394 = vadd.f32 %v2202, %v2393
        %2395 = vmatmul.f32.gmra.mxu0 %v2116
        %v2396 = vpop.f32.mrf.mxu0
        %v2397 = vadd.f32 %v2207, %v2396
        %2398 = vmatmul.f32.gmra.mxu0 %v2118
        %v2399 = vpop.f32.mrf.mxu0
        %v2400 = vadd.f32 %v2212, %v2399
        %2401 = vmatmul.f32.gmra.mxu0 %v2120
        %v2402 = vpop.f32.mrf.mxu0
        %v2403 = vadd.f32 %v2217, %v2402
        %2404 = vmatmul.f32.gmra.mxu0 %v2122
        %v2405 = vpop.f32.mrf.mxu0
        %v2406 = vadd.f32 %v2222, %v2405
        %2407 = vmatmul.f32.gmra.mxu0 %v2124
        %v2408 = vpop.f32.mrf.mxu0
        %v2409 = vadd.f32 %v2227, %v2408
        %2410 = vmatmul.f32.gmra.mxu0 %v2126
        %v2411 = vpop.f32.mrf.mxu0
        %v2412 = vadd.f32 %v2232, %v2411
        %2413 = vmatmul.f32.gmra.mxu0 %v2128
        %v2414 = vpop.f32.mrf.mxu0
        %v2415 = vadd.f32 %v2237, %v2414
        %2416 = vmatmul.f32.gmra.mxu0 %v2130
        %v2417 = vpop.f32.mrf.mxu0
        %v2418 = vadd.f32 %v2242, %v2417
        %2419 = vmatmul.f32.gmra.mxu0 %v2132
        %v2420 = vpop.f32.mrf.mxu0
        %v2421 = vadd.f32 %v2247, %v2420
        %2422 = vmatmul.f32.gmra.mxu0 %v2134
        %v2423 = vpop.f32.mrf.mxu0
        %v2424 = vadd.f32 %v2252, %v2423
        %2425 = vmatmul.f32.gmra.mxu0 %v2136
        %v2426 = vpop.f32.mrf.mxu0
        %v2427 = vadd.f32 %v2257, %v2426
        %2428 = vmatmul.f32.gmra.mxu0 %v2138
        %v2429 = vpop.f32.mrf.mxu0
        %v2430 = vadd.f32 %v2262, %v2429
        %2431 = vmatmul.f32.gmra.mxu0 %v2140
        %v2432 = vpop.f32.mrf.mxu0
        %v2433 = vadd.f32 %v2267, %v2432
        %2434 = vmatmul.f32.gmra.mxu0 %v2142
        %v2435 = vpop.f32.mrf.mxu0
        %v2436 = vadd.f32 %v2272, %v2435
        %2437 = vmatmul.f32.gmra.mxu0 %v2144
        %v2438 = vpop.f32.mrf.mxu0
        %v2439 = vadd.f32 %v2277, %v2438
        %2440 = vmatmul.f32.gmra.mxu0 %v2146
        %v2441 = vpop.f32.mrf.mxu0
        %v2442 = vadd.f32 %v2282, %v2441
        %2443 = vmatmul.f32.gmra.mxu0 %v2148
        %v2444 = vpop.f32.mrf.mxu0
        %v2445 = vadd.f32 %v2287, %v2444
        %2446 = vdwg.mxu0
        %2447 = vmatpush.msra.mxu0 0.0
        %2448 = vmatpush.msra.mxu0 0.0
        %2449 = vmatpush.msra.mxu0 0.0
        %2450 = vmatpush.msra.mxu0 0.0
        %2451 = vmatpush.msra.mxu0 0.0
        %2452 = vmatpush.msra.mxu0 0.0
        %2453 = vmatpush.msra.mxu0 0.0
        %2454 = vmatpush.msra.mxu0 0.0
        %2455 = vmatpush.msra.mxu0 0.0
        %2456 = vmatpush.msra.mxu0 %v2359
        %2457 = vmatpush.msra.mxu0 %v2101
        %2458 = vmatpush.msra.mxu0 %v2100
        %2459 = vmatpush.msra.mxu0 %v2099
        %2460 = vmatpush.msra.mxu0 %v2098
        %2461 = vmatpush.msra.mxu0 %v2097
        %2462 = vmatpush.msra.mxu0 %v2096
        %2463 = vmatmul.f32.gmra.mxu0 %v2290
        %v2464 = vpop.f32.mrf.mxu0
        %v2465 = vadd.f32 %v2379, %v2464
        %2466 = vmatmul.f32.gmra.mxu0 %v2293
        %v2467 = vpop.f32.mrf.mxu0
        %v2468 = vadd.f32 %v2382, %v2467
        %2469 = vmatmul.f32.gmra.mxu0 %v2296
        %v2470 = vpop.f32.mrf.mxu0
        %v2471 = vadd.f32 %v2385, %v2470
        %2472 = vmatmul.f32.gmra.mxu0 %v2299
        %v2473 = vpop.f32.mrf.mxu0
        %v2474 = vadd.f32 %v2388, %v2473
        %2475 = vmatmul.f32.gmra.mxu0 %v2302
        %v2476 = vpop.f32.mrf.mxu0
        %v2477 = vadd.f32 %v2391, %v2476
        %2478 = vmatmul.f32.gmra.mxu0 %v2305
        %v2479 = vpop.f32.mrf.mxu0
        %v2480 = vadd.f32 %v2394, %v2479
        %2481 = vmatmul.f32.gmra.mxu0 %v2308
        %v2482 = vpop.f32.mrf.mxu0
        %v2483 = vadd.f32 %v2397, %v2482
        %2484 = vmatmul.f32.gmra.mxu0 %v2311
        %v2485 = vpop.f32.mrf.mxu0
        %v2486 = vadd.f32 %v2400, %v2485
        %2487 = vmatmul.f32.gmra.mxu0 %v2314
        %v2488 = vpop.f32.mrf.mxu0
        %v2489 = vadd.f32 %v2403, %v2488
        %2490 = vmatmul.f32.gmra.mxu0 %v2317
        %v2491 = vpop.f32.mrf.mxu0
        %v2492 = vadd.f32 %v2406, %v2491
        %2493 = vmatmul.f32.gmra.mxu0 %v2320
        %v2494 = vpop.f32.mrf.mxu0
        %v2495 = vadd.f32 %v2409, %v2494
        %2496 = vmatmul.f32.gmra.mxu0 %v2323
        %v2497 = vpop.f32.mrf.mxu0
        %v2498 = vadd.f32 %v2412, %v2497
        %2499 = vmatmul.f32.gmra.mxu0 %v2326
        %v2500 = vpop.f32.mrf.mxu0
        %v2501 = vadd.f32 %v2415, %v2500
        %2502 = vmatmul.f32.gmra.mxu0 %v2329
        %v2503 = vpop.f32.mrf.mxu0
        %v2504 = vadd.f32 %v2418, %v2503
        %2505 = vmatmul.f32.gmra.mxu0 %v2332
        %v2506 = vpop.f32.mrf.mxu0
        %v2507 = vadd.f32 %v2421, %v2506
        %2508 = vmatmul.f32.gmra.mxu0 %v2335
        %v2509 = vpop.f32.mrf.mxu0
        %v2510 = vadd.f32 %v2424, %v2509
        %2511 = vmatmul.f32.gmra.mxu0 %v2338
        %v2512 = vpop.f32.mrf.mxu0
        %v2513 = vadd.f32 %v2427, %v2512
        %2514 = vmatmul.f32.gmra.mxu0 %v2341
        %v2515 = vpop.f32.mrf.mxu0
        %v2516 = vadd.f32 %v2430, %v2515
        %2517 = vmatmul.f32.gmra.mxu0 %v2344
        %v2518 = vpop.f32.mrf.mxu0
        %v2519 = vadd.f32 %v2433, %v2518
        %2520 = vmatmul.f32.gmra.mxu0 %v2347
        %v2521 = vpop.f32.mrf.mxu0
        %v2522 = vadd.f32 %v2436, %v2521
        %2523 = vmatmul.f32.gmra.mxu0 %v2350
        %v2524 = vpop.f32.mrf.mxu0
        %v2525 = vadd.f32 %v2439, %v2524
        %2526 = vmatmul.f32.gmra.mxu0 %v2353
        %v2527 = vpop.f32.mrf.mxu0
        %v2528 = vadd.f32 %v2442, %v2527
        %2529 = vmatmul.f32.gmra.mxu0 %v2356
        %v2530 = vpop.f32.mrf.mxu0
        %v2531 = vadd.f32 %v2445, %v2530
        %2532 = vdwg.mxu0
        %v2533 = vmul.f32 %v2465, 0.5
        %v2534 = vmul.f32 %v2468, 0.5
        %v2535 = vmul.f32 %v2471, 0.5
        %v2536 = vmul.f32 %v2474, 0.5
        %v2537 = vmul.f32 %v2477, 0.5
        %v2538 = vmul.f32 %v2480, 0.5
        %v2539 = vmul.f32 %v2483, 0.5
        %v2540 = vmul.f32 %v2486, 0.5
        %v2541 = vmul.f32 %v2489, 0.5
        %v2542 = vmul.f32 %v2492, 0.5
        %v2543 = vmul.f32 %v2495, 0.5
        %v2544 = vmul.f32 %v2498, 0.5
        %v2545 = vmul.f32 %v2501, 0.5
        %v2546 = vmul.f32 %v2504, 0.5
        %v2547 = vmul.f32 %v2507, 0.5
        %v2548 = vmul.f32 %v2510, 0.5
        %v2549 = vmul.f32 %v2513, 0.5
        %v2550 = vmul.f32 %v2516, 0.5
        %v2551 = vmul.f32 %v2519, 0.5
        %v2552 = vmul.f32 %v2522, 0.5
        %v2553 = vmul.f32 %v2525, 0.5
        %v2554 = vmul.f32 %v2528, 0.5
        %v2555 = vmul.f32 %v2531, 0.5
        %v2556 = vmul.f32 %v2465, 0.70710677
        %v2557 = vmul.f32 %v2468, 0.70710677
        %v2558 = vmul.f32 %v2471, 0.70710677
        %v2559 = vmul.f32 %v2474, 0.70710677
        %v2560 = vmul.f32 %v2477, 0.70710677
        %v2561 = vmul.f32 %v2480, 0.70710677
        %v2562 = vmul.f32 %v2483, 0.70710677
        %v2563 = vmul.f32 %v2486, 0.70710677
        %v2564 = vmul.f32 %v2489, 0.70710677
        %v2565 = vmul.f32 %v2492, 0.70710677
        %v2566 = vmul.f32 %v2495, 0.70710677
        %v2567 = vmul.f32 %v2498, 0.70710677
        %v2568 = vmul.f32 %v2501, 0.70710677
        %v2569 = vmul.f32 %v2504, 0.70710677
        %v2570 = vmul.f32 %v2507, 0.70710677
        %v2571 = vmul.f32 %v2510, 0.70710677
        %v2572 = vmul.f32 %v2513, 0.70710677
        %v2573 = vmul.f32 %v2516, 0.70710677
        %v2574 = vmul.f32 %v2519, 0.70710677
        %v2575 = vmul.f32 %v2522, 0.70710677
        %v2576 = vmul.f32 %v2525, 0.70710677
        %v2577 = vmul.f32 %v2528, 0.70710677
        %v2578 = vmul.f32 %v2531, 0.70710677
        %v2579 = vmul.f32 %v2556, %v2556
        %v2580 = vmin.f32 16.0, %v2579
        %v2581 = vmul.f32 %v2580, 2.1237322e-06
        %v2582 = vadd.f32 %v2581, 0.00028619796
        %v2583 = vmul.f32 %v2580, %v2582
        %v2584 = vadd.f32 %v2583, 0.0036580483
        %v2585 = vmul.f32 %v2580, %v2584
        %v2586 = vadd.f32 %v2585, 0.05243302
        %v2587 = vmul.f32 %v2580, %v2586
        %v2588 = vadd.f32 %v2587, 0.18741608
        %v2589 = vmul.f32 %v2580, %v2588
        %v2590 = vadd.f32 %v2589, 1.1283791
        %v2591 = vmul.f32 %v2556, %v2590
        %v2592 = vmul.f32 %v2580, 3.8918573e-05
        %v2593 = vadd.f32 %v2592, 0.001143296
        %v2594 = vmul.f32 %v2580, %v2593
        %v2595 = vadd.f32 %v2594, 0.014752088
        %v2596 = vmul.f32 %v2580, %v2595
        %v2597 = vadd.f32 %v2596, 0.112945676
        %v2598 = vmul.f32 %v2580, %v2597
        %v2599 = vadd.f32 %v2598, 0.4994258
        %v2600 = vmul.f32 %v2580, %v2599
        %v2601 = vadd.f32 %v2600, 1.0
        %v2602 = vrcp.pop %v2601
        %v2603 = vmul.f32 %v2601, %v2602
        %v2604 = vsub.f32 1.0, %v2603
        %v2605 = vmul.f32 %v2602, %v2604
        %v2606 = vadd.f32 %v2602, %v2605
        %vm2607 = vweird.f32 %v2601
        %vm2608 = vweird.f32 %v2602
        %vm2609 = vmor %vm2607, %vm2608
        %v2610 = vsel %vm2609, %v2602, %v2606
        %v2611 = vand.u32 2147483647, %v2601
        %vm2612 = vcmp.eq.f32.partialorder %v2611, 8.507059e+37
        %v2613 = vand.u32 %v2601, 2147483648
        %v2614 = vor.u32 1.1754944e-38, %v2613
        %v2615 = vsel %vm2612, %v2614, %v2610
        %v2616 = vmul.f32 %v2591, %v2615
        %v2617 = vmin.f32 %v2616, 1.0
        %v2618 = vmax.f32 %v2617, -1.0
        %v2619 = vmul.f32 %v2557, %v2557
        %v2620 = vmin.f32 16.0, %v2619
        %v2621 = vmul.f32 %v2620, 2.1237322e-06
        %v2622 = vadd.f32 %v2621, 0.00028619796
        %v2623 = vmul.f32 %v2620, %v2622
        %v2624 = vadd.f32 %v2623, 0.0036580483
        %v2625 = vmul.f32 %v2620, %v2624
        %v2626 = vadd.f32 %v2625, 0.05243302
        %v2627 = vmul.f32 %v2620, %v2626
        %v2628 = vadd.f32 %v2627, 0.18741608
        %v2629 = vmul.f32 %v2620, %v2628
        %v2630 = vadd.f32 %v2629, 1.1283791
        %v2631 = vmul.f32 %v2557, %v2630
        %v2632 = vmul.f32 %v2620, 3.8918573e-05
        %v2633 = vadd.f32 %v2632, 0.001143296
        %v2634 = vmul.f32 %v2620, %v2633
        %v2635 = vadd.f32 %v2634, 0.014752088
        %v2636 = vmul.f32 %v2620, %v2635
        %v2637 = vadd.f32 %v2636, 0.112945676
        %v2638 = vmul.f32 %v2620, %v2637
        %v2639 = vadd.f32 %v2638, 0.4994258
        %v2640 = vmul.f32 %v2620, %v2639
        %v2641 = vadd.f32 %v2640, 1.0
        %v2642 = vrcp.pop %v2641
        %v2643 = vmul.f32 %v2641, %v2642
        %v2644 = vsub.f32 1.0, %v2643
        %v2645 = vmul.f32 %v2642, %v2644
        %v2646 = vadd.f32 %v2642, %v2645
        %vm2647 = vweird.f32 %v2641
        %vm2648 = vweird.f32 %v2642
        %vm2649 = vmor %vm2647, %vm2648
        %v2650 = vsel %vm2649, %v2642, %v2646
        %v2651 = vand.u32 2147483647, %v2641
        %vm2652 = vcmp.eq.f32.partialorder %v2651, 8.507059e+37
        %v2653 = vand.u32 %v2641, 2147483648
        %v2654 = vor.u32 1.1754944e-38, %v2653
        %v2655 = vsel %vm2652, %v2654, %v2650
        %v2656 = vmul.f32 %v2631, %v2655
        %v2657 = vmin.f32 %v2656, 1.0
        %v2658 = vmax.f32 %v2657, -1.0
        %v2659 = vmul.f32 %v2558, %v2558
        %v2660 = vmin.f32 16.0, %v2659
        %v2661 = vmul.f32 %v2660, 2.1237322e-06
        %v2662 = vadd.f32 %v2661, 0.00028619796
        %v2663 = vmul.f32 %v2660, %v2662
        %v2664 = vadd.f32 %v2663, 0.0036580483
        %v2665 = vmul.f32 %v2660, %v2664
        %v2666 = vadd.f32 %v2665, 0.05243302
        %v2667 = vmul.f32 %v2660, %v2666
        %v2668 = vadd.f32 %v2667, 0.18741608
        %v2669 = vmul.f32 %v2660, %v2668
        %v2670 = vadd.f32 %v2669, 1.1283791
        %v2671 = vmul.f32 %v2558, %v2670
        %v2672 = vmul.f32 %v2660, 3.8918573e-05
        %v2673 = vadd.f32 %v2672, 0.001143296
        %v2674 = vmul.f32 %v2660, %v2673
        %v2675 = vadd.f32 %v2674, 0.014752088
        %v2676 = vmul.f32 %v2660, %v2675
        %v2677 = vadd.f32 %v2676, 0.112945676
        %v2678 = vmul.f32 %v2660, %v2677
        %v2679 = vadd.f32 %v2678, 0.4994258
        %v2680 = vmul.f32 %v2660, %v2679
        %v2681 = vadd.f32 %v2680, 1.0
        %v2682 = vrcp.pop %v2681
        %v2683 = vmul.f32 %v2681, %v2682
        %v2684 = vsub.f32 1.0, %v2683
        %v2685 = vmul.f32 %v2682, %v2684
        %v2686 = vadd.f32 %v2682, %v2685
        %vm2687 = vweird.f32 %v2681
        %vm2688 = vweird.f32 %v2682
        %vm2689 = vmor %vm2687, %vm2688
        %v2690 = vsel %vm2689, %v2682, %v2686
        %v2691 = vand.u32 2147483647, %v2681
        %vm2692 = vcmp.eq.f32.partialorder %v2691, 8.507059e+37
        %v2693 = vand.u32 %v2681, 2147483648
        %v2694 = vor.u32 1.1754944e-38, %v2693
        %v2695 = vsel %vm2692, %v2694, %v2690
        %v2696 = vmul.f32 %v2671, %v2695
        %v2697 = vmin.f32 %v2696, 1.0
        %v2698 = vmax.f32 %v2697, -1.0
        %v2699 = vmul.f32 %v2559, %v2559
        %v2700 = vmin.f32 16.0, %v2699
        %v2701 = vmul.f32 %v2700, 2.1237322e-06
        %v2702 = vadd.f32 %v2701, 0.00028619796
        %v2703 = vmul.f32 %v2700, %v2702
        %v2704 = vadd.f32 %v2703, 0.0036580483
        %v2705 = vmul.f32 %v2700, %v2704
        %v2706 = vadd.f32 %v2705, 0.05243302
        %v2707 = vmul.f32 %v2700, %v2706
        %v2708 = vadd.f32 %v2707, 0.18741608
        %v2709 = vmul.f32 %v2700, %v2708
        %v2710 = vadd.f32 %v2709, 1.1283791
        %v2711 = vmul.f32 %v2559, %v2710
        %v2712 = vmul.f32 %v2700, 3.8918573e-05
        %v2713 = vadd.f32 %v2712, 0.001143296
        %v2714 = vmul.f32 %v2700, %v2713
        %v2715 = vadd.f32 %v2714, 0.014752088
        %v2716 = vmul.f32 %v2700, %v2715
        %v2717 = vadd.f32 %v2716, 0.112945676
        %v2718 = vmul.f32 %v2700, %v2717
        %v2719 = vadd.f32 %v2718, 0.4994258
        %v2720 = vmul.f32 %v2700, %v2719
        %v2721 = vadd.f32 %v2720, 1.0
        %v2722 = vrcp.pop %v2721
        %v2723 = vmul.f32 %v2721, %v2722
        %v2724 = vsub.f32 1.0, %v2723
        %v2725 = vmul.f32 %v2722, %v2724
        %v2726 = vadd.f32 %v2722, %v2725
        %vm2727 = vweird.f32 %v2721
        %vm2728 = vweird.f32 %v2722
        %vm2729 = vmor %vm2727, %vm2728
        %v2730 = vsel %vm2729, %v2722, %v2726
        %v2731 = vand.u32 2147483647, %v2721
        %vm2732 = vcmp.eq.f32.partialorder %v2731, 8.507059e+37
        %v2733 = vand.u32 %v2721, 2147483648
        %v2734 = vor.u32 1.1754944e-38, %v2733
        %v2735 = vsel %vm2732, %v2734, %v2730
        %v2736 = vmul.f32 %v2711, %v2735
        %v2737 = vmin.f32 %v2736, 1.0
        %v2738 = vmax.f32 %v2737, -1.0
        %v2739 = vmul.f32 %v2560, %v2560
        %v2740 = vmin.f32 16.0, %v2739
        %v2741 = vmul.f32 %v2740, 2.1237322e-06
        %v2742 = vadd.f32 %v2741, 0.00028619796
        %v2743 = vmul.f32 %v2740, %v2742
        %v2744 = vadd.f32 %v2743, 0.0036580483
        %v2745 = vmul.f32 %v2740, %v2744
        %v2746 = vadd.f32 %v2745, 0.05243302
        %v2747 = vmul.f32 %v2740, %v2746
        %v2748 = vadd.f32 %v2747, 0.18741608
        %v2749 = vmul.f32 %v2740, %v2748
        %v2750 = vadd.f32 %v2749, 1.1283791
        %v2751 = vmul.f32 %v2560, %v2750
        %v2752 = vmul.f32 %v2740, 3.8918573e-05
        %v2753 = vadd.f32 %v2752, 0.001143296
        %v2754 = vmul.f32 %v2740, %v2753
        %v2755 = vadd.f32 %v2754, 0.014752088
        %v2756 = vmul.f32 %v2740, %v2755
        %v2757 = vadd.f32 %v2756, 0.112945676
        %v2758 = vmul.f32 %v2740, %v2757
        %v2759 = vadd.f32 %v2758, 0.4994258
        %v2760 = vmul.f32 %v2740, %v2759
        %v2761 = vadd.f32 %v2760, 1.0
        %v2762 = vrcp.pop %v2761
        %v2763 = vmul.f32 %v2761, %v2762
        %v2764 = vsub.f32 1.0, %v2763
        %v2765 = vmul.f32 %v2762, %v2764
        %v2766 = vadd.f32 %v2762, %v2765
        %vm2767 = vweird.f32 %v2761
        %vm2768 = vweird.f32 %v2762
        %vm2769 = vmor %vm2767, %vm2768
        %v2770 = vsel %vm2769, %v2762, %v2766
        %v2771 = vand.u32 2147483647, %v2761
        %vm2772 = vcmp.eq.f32.partialorder %v2771, 8.507059e+37
        %v2773 = vand.u32 %v2761, 2147483648
        %v2774 = vor.u32 1.1754944e-38, %v2773
        %v2775 = vsel %vm2772, %v2774, %v2770
        %v2776 = vmul.f32 %v2751, %v2775
        %v2777 = vmin.f32 %v2776, 1.0
        %v2778 = vmax.f32 %v2777, -1.0
        %v2779 = vmul.f32 %v2561, %v2561
        %v2780 = vmin.f32 16.0, %v2779
        %v2781 = vmul.f32 %v2780, 2.1237322e-06
        %v2782 = vadd.f32 %v2781, 0.00028619796
        %v2783 = vmul.f32 %v2780, %v2782
        %v2784 = vadd.f32 %v2783, 0.0036580483
        %v2785 = vmul.f32 %v2780, %v2784
        %v2786 = vadd.f32 %v2785, 0.05243302
        %v2787 = vmul.f32 %v2780, %v2786
        %v2788 = vadd.f32 %v2787, 0.18741608
        %v2789 = vmul.f32 %v2780, %v2788
        %v2790 = vadd.f32 %v2789, 1.1283791
        %v2791 = vmul.f32 %v2561, %v2790
        %v2792 = vmul.f32 %v2780, 3.8918573e-05
        %v2793 = vadd.f32 %v2792, 0.001143296
        %v2794 = vmul.f32 %v2780, %v2793
        %v2795 = vadd.f32 %v2794, 0.014752088
        %v2796 = vmul.f32 %v2780, %v2795
        %v2797 = vadd.f32 %v2796, 0.112945676
        %v2798 = vmul.f32 %v2780, %v2797
        %v2799 = vadd.f32 %v2798, 0.4994258
        %v2800 = vmul.f32 %v2780, %v2799
        %v2801 = vadd.f32 %v2800, 1.0
        %v2802 = vrcp.pop %v2801
        %v2803 = vmul.f32 %v2801, %v2802
        %v2804 = vsub.f32 1.0, %v2803
        %v2805 = vmul.f32 %v2802, %v2804
        %v2806 = vadd.f32 %v2802, %v2805
        %vm2807 = vweird.f32 %v2801
        %vm2808 = vweird.f32 %v2802
        %vm2809 = vmor %vm2807, %vm2808
        %v2810 = vsel %vm2809, %v2802, %v2806
        %v2811 = vand.u32 2147483647, %v2801
        %vm2812 = vcmp.eq.f32.partialorder %v2811, 8.507059e+37
        %v2813 = vand.u32 %v2801, 2147483648
        %v2814 = vor.u32 1.1754944e-38, %v2813
        %v2815 = vsel %vm2812, %v2814, %v2810
        %v2816 = vmul.f32 %v2791, %v2815
        %v2817 = vmin.f32 %v2816, 1.0
        %v2818 = vmax.f32 %v2817, -1.0
        %v2819 = vmul.f32 %v2562, %v2562
        %v2820 = vmin.f32 16.0, %v2819
        %v2821 = vmul.f32 %v2820, 2.1237322e-06
        %v2822 = vadd.f32 %v2821, 0.00028619796
        %v2823 = vmul.f32 %v2820, %v2822
        %v2824 = vadd.f32 %v2823, 0.0036580483
        %v2825 = vmul.f32 %v2820, %v2824
        %v2826 = vadd.f32 %v2825, 0.05243302
        %v2827 = vmul.f32 %v2820, %v2826
        %v2828 = vadd.f32 %v2827, 0.18741608
        %v2829 = vmul.f32 %v2820, %v2828
        %v2830 = vadd.f32 %v2829, 1.1283791
        %v2831 = vmul.f32 %v2562, %v2830
        %v2832 = vmul.f32 %v2820, 3.8918573e-05
        %v2833 = vadd.f32 %v2832, 0.001143296
        %v2834 = vmul.f32 %v2820, %v2833
        %v2835 = vadd.f32 %v2834, 0.014752088
        %v2836 = vmul.f32 %v2820, %v2835
        %v2837 = vadd.f32 %v2836, 0.112945676
        %v2838 = vmul.f32 %v2820, %v2837
        %v2839 = vadd.f32 %v2838, 0.4994258
        %v2840 = vmul.f32 %v2820, %v2839
        %v2841 = vadd.f32 %v2840, 1.0
        %v2842 = vrcp.pop %v2841
        %v2843 = vmul.f32 %v2841, %v2842
        %v2844 = vsub.f32 1.0, %v2843
        %v2845 = vmul.f32 %v2842, %v2844
        %v2846 = vadd.f32 %v2842, %v2845
        %vm2847 = vweird.f32 %v2841
        %vm2848 = vweird.f32 %v2842
        %vm2849 = vmor %vm2847, %vm2848
        %v2850 = vsel %vm2849, %v2842, %v2846
        %v2851 = vand.u32 2147483647, %v2841
        %vm2852 = vcmp.eq.f32.partialorder %v2851, 8.507059e+37
        %v2853 = vand.u32 %v2841, 2147483648
        %v2854 = vor.u32 1.1754944e-38, %v2853
        %v2855 = vsel %vm2852, %v2854, %v2850
        %v2856 = vmul.f32 %v2831, %v2855
        %v2857 = vmin.f32 %v2856, 1.0
        %v2858 = vmax.f32 %v2857, -1.0
        %v2859 = vmul.f32 %v2563, %v2563
        %v2860 = vmin.f32 16.0, %v2859
        %v2861 = vmul.f32 %v2860, 2.1237322e-06
        %v2862 = vadd.f32 %v2861, 0.00028619796
        %v2863 = vmul.f32 %v2860, %v2862
        %v2864 = vadd.f32 %v2863, 0.0036580483
        %v2865 = vmul.f32 %v2860, %v2864
        %v2866 = vadd.f32 %v2865, 0.05243302
        %v2867 = vmul.f32 %v2860, %v2866
        %v2868 = vadd.f32 %v2867, 0.18741608
        %v2869 = vmul.f32 %v2860, %v2868
        %v2870 = vadd.f32 %v2869, 1.1283791
        %v2871 = vmul.f32 %v2563, %v2870
        %v2872 = vmul.f32 %v2860, 3.8918573e-05
        %v2873 = vadd.f32 %v2872, 0.001143296
        %v2874 = vmul.f32 %v2860, %v2873
        %v2875 = vadd.f32 %v2874, 0.014752088
        %v2876 = vmul.f32 %v2860, %v2875
        %v2877 = vadd.f32 %v2876, 0.112945676
        %v2878 = vmul.f32 %v2860, %v2877
        %v2879 = vadd.f32 %v2878, 0.4994258
        %v2880 = vmul.f32 %v2860, %v2879
        %v2881 = vadd.f32 %v2880, 1.0
        %v2882 = vrcp.pop %v2881
        %v2883 = vmul.f32 %v2881, %v2882
        %v2884 = vsub.f32 1.0, %v2883
        %v2885 = vmul.f32 %v2882, %v2884
        %v2886 = vadd.f32 %v2882, %v2885
        %vm2887 = vweird.f32 %v2881
        %vm2888 = vweird.f32 %v2882
        %vm2889 = vmor %vm2887, %vm2888
        %v2890 = vsel %vm2889, %v2882, %v2886
        %v2891 = vand.u32 2147483647, %v2881
        %vm2892 = vcmp.eq.f32.partialorder %v2891, 8.507059e+37
        %v2893 = vand.u32 %v2881, 2147483648
        %v2894 = vor.u32 1.1754944e-38, %v2893
        %v2895 = vsel %vm2892, %v2894, %v2890
        %v2896 = vmul.f32 %v2871, %v2895
        %v2897 = vmin.f32 %v2896, 1.0
        %v2898 = vmax.f32 %v2897, -1.0
        %v2899 = vmul.f32 %v2564, %v2564
        %v2900 = vmin.f32 16.0, %v2899
        %v2901 = vmul.f32 %v2900, 2.1237322e-06
        %v2902 = vadd.f32 %v2901, 0.00028619796
        %v2903 = vmul.f32 %v2900, %v2902
        %v2904 = vadd.f32 %v2903, 0.0036580483
        %v2905 = vmul.f32 %v2900, %v2904
        %v2906 = vadd.f32 %v2905, 0.05243302
        %v2907 = vmul.f32 %v2900, %v2906
        %v2908 = vadd.f32 %v2907, 0.18741608
        %v2909 = vmul.f32 %v2900, %v2908
        %v2910 = vadd.f32 %v2909, 1.1283791
        %v2911 = vmul.f32 %v2564, %v2910
        %v2912 = vmul.f32 %v2900, 3.8918573e-05
        %v2913 = vadd.f32 %v2912, 0.001143296
        %v2914 = vmul.f32 %v2900, %v2913
        %v2915 = vadd.f32 %v2914, 0.014752088
        %v2916 = vmul.f32 %v2900, %v2915
        %v2917 = vadd.f32 %v2916, 0.112945676
        %v2918 = vmul.f32 %v2900, %v2917
        %v2919 = vadd.f32 %v2918, 0.4994258
        %v2920 = vmul.f32 %v2900, %v2919
        %v2921 = vadd.f32 %v2920, 1.0
        %v2922 = vrcp.pop %v2921
        %v2923 = vmul.f32 %v2921, %v2922
        %v2924 = vsub.f32 1.0, %v2923
        %v2925 = vmul.f32 %v2922, %v2924
        %v2926 = vadd.f32 %v2922, %v2925
        %vm2927 = vweird.f32 %v2921
        %vm2928 = vweird.f32 %v2922
        %vm2929 = vmor %vm2927, %vm2928
        %v2930 = vsel %vm2929, %v2922, %v2926
        %v2931 = vand.u32 2147483647, %v2921
        %vm2932 = vcmp.eq.f32.partialorder %v2931, 8.507059e+37
        %v2933 = vand.u32 %v2921, 2147483648
        %v2934 = vor.u32 1.1754944e-38, %v2933
        %v2935 = vsel %vm2932, %v2934, %v2930
        %v2936 = vmul.f32 %v2911, %v2935
        %v2937 = vmin.f32 %v2936, 1.0
        %v2938 = vmax.f32 %v2937, -1.0
        %v2939 = vmul.f32 %v2565, %v2565
        %v2940 = vmin.f32 16.0, %v2939
        %v2941 = vmul.f32 %v2940, 2.1237322e-06
        %v2942 = vadd.f32 %v2941, 0.00028619796
        %v2943 = vmul.f32 %v2940, %v2942
        %v2944 = vadd.f32 %v2943, 0.0036580483
        %v2945 = vmul.f32 %v2940, %v2944
        %v2946 = vadd.f32 %v2945, 0.05243302
        %v2947 = vmul.f32 %v2940, %v2946
        %v2948 = vadd.f32 %v2947, 0.18741608
        %v2949 = vmul.f32 %v2940, %v2948
        %v2950 = vadd.f32 %v2949, 1.1283791
        %v2951 = vmul.f32 %v2565, %v2950
        %v2952 = vmul.f32 %v2940, 3.8918573e-05
        %v2953 = vadd.f32 %v2952, 0.001143296
        %v2954 = vmul.f32 %v2940, %v2953
        %v2955 = vadd.f32 %v2954, 0.014752088
        %v2956 = vmul.f32 %v2940, %v2955
        %v2957 = vadd.f32 %v2956, 0.112945676
        %v2958 = vmul.f32 %v2940, %v2957
        %v2959 = vadd.f32 %v2958, 0.4994258
        %v2960 = vmul.f32 %v2940, %v2959
        %v2961 = vadd.f32 %v2960, 1.0
        %v2962 = vrcp.pop %v2961
        %v2963 = vmul.f32 %v2961, %v2962
        %v2964 = vsub.f32 1.0, %v2963
        %v2965 = vmul.f32 %v2962, %v2964
        %v2966 = vadd.f32 %v2962, %v2965
        %vm2967 = vweird.f32 %v2961
        %vm2968 = vweird.f32 %v2962
        %vm2969 = vmor %vm2967, %vm2968
        %v2970 = vsel %vm2969, %v2962, %v2966
        %v2971 = vand.u32 2147483647, %v2961
        %vm2972 = vcmp.eq.f32.partialorder %v2971, 8.507059e+37
        %v2973 = vand.u32 %v2961, 2147483648
        %v2974 = vor.u32 1.1754944e-38, %v2973
        %v2975 = vsel %vm2972, %v2974, %v2970
        %v2976 = vmul.f32 %v2951, %v2975
        %v2977 = vmin.f32 %v2976, 1.0
        %v2978 = vmax.f32 %v2977, -1.0
        %v2979 = vmul.f32 %v2566, %v2566
        %v2980 = vmin.f32 16.0, %v2979
        %v2981 = vmul.f32 %v2980, 2.1237322e-06
        %v2982 = vadd.f32 %v2981, 0.00028619796
        %v2983 = vmul.f32 %v2980, %v2982
        %v2984 = vadd.f32 %v2983, 0.0036580483
        %v2985 = vmul.f32 %v2980, %v2984
        %v2986 = vadd.f32 %v2985, 0.05243302
        %v2987 = vmul.f32 %v2980, %v2986
        %v2988 = vadd.f32 %v2987, 0.18741608
        %v2989 = vmul.f32 %v2980, %v2988
        %v2990 = vadd.f32 %v2989, 1.1283791
        %v2991 = vmul.f32 %v2566, %v2990
        %v2992 = vmul.f32 %v2980, 3.8918573e-05
        %v2993 = vadd.f32 %v2992, 0.001143296
        %v2994 = vmul.f32 %v2980, %v2993
        %v2995 = vadd.f32 %v2994, 0.014752088
        %v2996 = vmul.f32 %v2980, %v2995
        %v2997 = vadd.f32 %v2996, 0.112945676
        %v2998 = vmul.f32 %v2980, %v2997
        %v2999 = vadd.f32 %v2998, 0.4994258
        %v3000 = vmul.f32 %v2980, %v2999
        %v3001 = vadd.f32 %v3000, 1.0
        %v3002 = vrcp.pop %v3001
        %v3003 = vmul.f32 %v3001, %v3002
        %v3004 = vsub.f32 1.0, %v3003
        %v3005 = vmul.f32 %v3002, %v3004
        %v3006 = vadd.f32 %v3002, %v3005
        %vm3007 = vweird.f32 %v3001
        %vm3008 = vweird.f32 %v3002
        %vm3009 = vmor %vm3007, %vm3008
        %v3010 = vsel %vm3009, %v3002, %v3006
        %v3011 = vand.u32 2147483647, %v3001
        %vm3012 = vcmp.eq.f32.partialorder %v3011, 8.507059e+37
        %v3013 = vand.u32 %v3001, 2147483648
        %v3014 = vor.u32 1.1754944e-38, %v3013
        %v3015 = vsel %vm3012, %v3014, %v3010
        %v3016 = vmul.f32 %v2991, %v3015
        %v3017 = vmin.f32 %v3016, 1.0
        %v3018 = vmax.f32 %v3017, -1.0
        %v3019 = vmul.f32 %v2567, %v2567
        %v3020 = vmin.f32 16.0, %v3019
        %v3021 = vmul.f32 %v3020, 2.1237322e-06
        %v3022 = vadd.f32 %v3021, 0.00028619796
        %v3023 = vmul.f32 %v3020, %v3022
        %v3024 = vadd.f32 %v3023, 0.0036580483
        %v3025 = vmul.f32 %v3020, %v3024
        %v3026 = vadd.f32 %v3025, 0.05243302
        %v3027 = vmul.f32 %v3020, %v3026
        %v3028 = vadd.f32 %v3027, 0.18741608
        %v3029 = vmul.f32 %v3020, %v3028
        %v3030 = vadd.f32 %v3029, 1.1283791
        %v3031 = vmul.f32 %v2567, %v3030
        %v3032 = vmul.f32 %v3020, 3.8918573e-05
        %v3033 = vadd.f32 %v3032, 0.001143296
        %v3034 = vmul.f32 %v3020, %v3033
        %v3035 = vadd.f32 %v3034, 0.014752088
        %v3036 = vmul.f32 %v3020, %v3035
        %v3037 = vadd.f32 %v3036, 0.112945676
        %v3038 = vmul.f32 %v3020, %v3037
        %v3039 = vadd.f32 %v3038, 0.4994258
        %v3040 = vmul.f32 %v3020, %v3039
        %v3041 = vadd.f32 %v3040, 1.0
        %v3042 = vrcp.pop %v3041
        %v3043 = vmul.f32 %v3041, %v3042
        %v3044 = vsub.f32 1.0, %v3043
        %v3045 = vmul.f32 %v3042, %v3044
        %v3046 = vadd.f32 %v3042, %v3045
        %vm3047 = vweird.f32 %v3041
        %vm3048 = vweird.f32 %v3042
        %vm3049 = vmor %vm3047, %vm3048
        %v3050 = vsel %vm3049, %v3042, %v3046
        %v3051 = vand.u32 2147483647, %v3041
        %vm3052 = vcmp.eq.f32.partialorder %v3051, 8.507059e+37
        %v3053 = vand.u32 %v3041, 2147483648
        %v3054 = vor.u32 1.1754944e-38, %v3053
        %v3055 = vsel %vm3052, %v3054, %v3050
        %v3056 = vmul.f32 %v3031, %v3055
        %v3057 = vmin.f32 %v3056, 1.0
        %v3058 = vmax.f32 %v3057, -1.0
        %v3059 = vmul.f32 %v2568, %v2568
        %v3060 = vmin.f32 16.0, %v3059
        %v3061 = vmul.f32 %v3060, 2.1237322e-06
        %v3062 = vadd.f32 %v3061, 0.00028619796
        %v3063 = vmul.f32 %v3060, %v3062
        %v3064 = vadd.f32 %v3063, 0.0036580483
        %v3065 = vmul.f32 %v3060, %v3064
        %v3066 = vadd.f32 %v3065, 0.05243302
        %v3067 = vmul.f32 %v3060, %v3066
        %v3068 = vadd.f32 %v3067, 0.18741608
        %v3069 = vmul.f32 %v3060, %v3068
        %v3070 = vadd.f32 %v3069, 1.1283791
        %v3071 = vmul.f32 %v2568, %v3070
        %v3072 = vmul.f32 %v3060, 3.8918573e-05
        %v3073 = vadd.f32 %v3072, 0.001143296
        %v3074 = vmul.f32 %v3060, %v3073
        %v3075 = vadd.f32 %v3074, 0.014752088
        %v3076 = vmul.f32 %v3060, %v3075
        %v3077 = vadd.f32 %v3076, 0.112945676
        %v3078 = vmul.f32 %v3060, %v3077
        %v3079 = vadd.f32 %v3078, 0.4994258
        %v3080 = vmul.f32 %v3060, %v3079
        %v3081 = vadd.f32 %v3080, 1.0
        %v3082 = vrcp.pop %v3081
        %v3083 = vmul.f32 %v3081, %v3082
        %v3084 = vsub.f32 1.0, %v3083
        %v3085 = vmul.f32 %v3082, %v3084
        %v3086 = vadd.f32 %v3082, %v3085
        %vm3087 = vweird.f32 %v3081
        %vm3088 = vweird.f32 %v3082
        %vm3089 = vmor %vm3087, %vm3088
        %v3090 = vsel %vm3089, %v3082, %v3086
        %v3091 = vand.u32 2147483647, %v3081
        %vm3092 = vcmp.eq.f32.partialorder %v3091, 8.507059e+37
        %v3093 = vand.u32 %v3081, 2147483648
        %v3094 = vor.u32 1.1754944e-38, %v3093
        %v3095 = vsel %vm3092, %v3094, %v3090
        %v3096 = vmul.f32 %v3071, %v3095
        %v3097 = vmin.f32 %v3096, 1.0
        %v3098 = vmax.f32 %v3097, -1.0
        %v3099 = vmul.f32 %v2569, %v2569
        %v3100 = vmin.f32 16.0, %v3099
        %v3101 = vmul.f32 %v3100, 2.1237322e-06
        %v3102 = vadd.f32 %v3101, 0.00028619796
        %v3103 = vmul.f32 %v3100, %v3102
        %v3104 = vadd.f32 %v3103, 0.0036580483
        %v3105 = vmul.f32 %v3100, %v3104
        %v3106 = vadd.f32 %v3105, 0.05243302
        %v3107 = vmul.f32 %v3100, %v3106
        %v3108 = vadd.f32 %v3107, 0.18741608
        %v3109 = vmul.f32 %v3100, %v3108
        %v3110 = vadd.f32 %v3109, 1.1283791
        %v3111 = vmul.f32 %v2569, %v3110
        %v3112 = vmul.f32 %v3100, 3.8918573e-05
        %v3113 = vadd.f32 %v3112, 0.001143296
        %v3114 = vmul.f32 %v3100, %v3113
        %v3115 = vadd.f32 %v3114, 0.014752088
        %v3116 = vmul.f32 %v3100, %v3115
        %v3117 = vadd.f32 %v3116, 0.112945676
        %v3118 = vmul.f32 %v3100, %v3117
        %v3119 = vadd.f32 %v3118, 0.4994258
        %v3120 = vmul.f32 %v3100, %v3119
        %v3121 = vadd.f32 %v3120, 1.0
        %v3122 = vrcp.pop %v3121
        %v3123 = vmul.f32 %v3121, %v3122
        %v3124 = vsub.f32 1.0, %v3123
        %v3125 = vmul.f32 %v3122, %v3124
        %v3126 = vadd.f32 %v3122, %v3125
        %vm3127 = vweird.f32 %v3121
        %vm3128 = vweird.f32 %v3122
        %vm3129 = vmor %vm3127, %vm3128
        %v3130 = vsel %vm3129, %v3122, %v3126
        %v3131 = vand.u32 2147483647, %v3121
        %vm3132 = vcmp.eq.f32.partialorder %v3131, 8.507059e+37
        %v3133 = vand.u32 %v3121, 2147483648
        %v3134 = vor.u32 1.1754944e-38, %v3133
        %v3135 = vsel %vm3132, %v3134, %v3130
        %v3136 = vmul.f32 %v3111, %v3135
        %v3137 = vmin.f32 %v3136, 1.0
        %v3138 = vmax.f32 %v3137, -1.0
        %v3139 = vmul.f32 %v2570, %v2570
        %v3140 = vmin.f32 16.0, %v3139
        %v3141 = vmul.f32 %v3140, 2.1237322e-06
        %v3142 = vadd.f32 %v3141, 0.00028619796
        %v3143 = vmul.f32 %v3140, %v3142
        %v3144 = vadd.f32 %v3143, 0.0036580483
        %v3145 = vmul.f32 %v3140, %v3144
        %v3146 = vadd.f32 %v3145, 0.05243302
        %v3147 = vmul.f32 %v3140, %v3146
        %v3148 = vadd.f32 %v3147, 0.18741608
        %v3149 = vmul.f32 %v3140, %v3148
        %v3150 = vadd.f32 %v3149, 1.1283791
        %v3151 = vmul.f32 %v2570, %v3150
        %v3152 = vmul.f32 %v3140, 3.8918573e-05
        %v3153 = vadd.f32 %v3152, 0.001143296
        %v3154 = vmul.f32 %v3140, %v3153
        %v3155 = vadd.f32 %v3154, 0.014752088
        %v3156 = vmul.f32 %v3140, %v3155
        %v3157 = vadd.f32 %v3156, 0.112945676
        %v3158 = vmul.f32 %v3140, %v3157
        %v3159 = vadd.f32 %v3158, 0.4994258
        %v3160 = vmul.f32 %v3140, %v3159
        %v3161 = vadd.f32 %v3160, 1.0
        %v3162 = vrcp.pop %v3161
        %v3163 = vmul.f32 %v3161, %v3162
        %v3164 = vsub.f32 1.0, %v3163
        %v3165 = vmul.f32 %v3162, %v3164
        %v3166 = vadd.f32 %v3162, %v3165
        %vm3167 = vweird.f32 %v3161
        %vm3168 = vweird.f32 %v3162
        %vm3169 = vmor %vm3167, %vm3168
        %v3170 = vsel %vm3169, %v3162, %v3166
        %v3171 = vand.u32 2147483647, %v3161
        %vm3172 = vcmp.eq.f32.partialorder %v3171, 8.507059e+37
        %v3173 = vand.u32 %v3161, 2147483648
        %v3174 = vor.u32 1.1754944e-38, %v3173
        %v3175 = vsel %vm3172, %v3174, %v3170
        %v3176 = vmul.f32 %v3151, %v3175
        %v3177 = vmin.f32 %v3176, 1.0
        %v3178 = vmax.f32 %v3177, -1.0
        %v3179 = vmul.f32 %v2571, %v2571
        %v3180 = vmin.f32 16.0, %v3179
        %v3181 = vmul.f32 %v3180, 2.1237322e-06
        %v3182 = vadd.f32 %v3181, 0.00028619796
        %v3183 = vmul.f32 %v3180, %v3182
        %v3184 = vadd.f32 %v3183, 0.0036580483
        %v3185 = vmul.f32 %v3180, %v3184
        %v3186 = vadd.f32 %v3185, 0.05243302
        %v3187 = vmul.f32 %v3180, %v3186
        %v3188 = vadd.f32 %v3187, 0.18741608
        %v3189 = vmul.f32 %v3180, %v3188
        %v3190 = vadd.f32 %v3189, 1.1283791
        %v3191 = vmul.f32 %v2571, %v3190
        %v3192 = vmul.f32 %v3180, 3.8918573e-05
        %v3193 = vadd.f32 %v3192, 0.001143296
        %v3194 = vmul.f32 %v3180, %v3193
        %v3195 = vadd.f32 %v3194, 0.014752088
        %v3196 = vmul.f32 %v3180, %v3195
        %v3197 = vadd.f32 %v3196, 0.112945676
        %v3198 = vmul.f32 %v3180, %v3197
        %v3199 = vadd.f32 %v3198, 0.4994258
        %v3200 = vmul.f32 %v3180, %v3199
        %v3201 = vadd.f32 %v3200, 1.0
        %v3202 = vrcp.pop %v3201
        %v3203 = vmul.f32 %v3201, %v3202
        %v3204 = vsub.f32 1.0, %v3203
        %v3205 = vmul.f32 %v3202, %v3204
        %v3206 = vadd.f32 %v3202, %v3205
        %vm3207 = vweird.f32 %v3201
        %vm3208 = vweird.f32 %v3202
        %vm3209 = vmor %vm3207, %vm3208
        %v3210 = vsel %vm3209, %v3202, %v3206
        %v3211 = vand.u32 2147483647, %v3201
        %vm3212 = vcmp.eq.f32.partialorder %v3211, 8.507059e+37
        %v3213 = vand.u32 %v3201, 2147483648
        %v3214 = vor.u32 1.1754944e-38, %v3213
        %v3215 = vsel %vm3212, %v3214, %v3210
        %v3216 = vmul.f32 %v3191, %v3215
        %v3217 = vmin.f32 %v3216, 1.0
        %v3218 = vmax.f32 %v3217, -1.0
        %v3219 = vmul.f32 %v2572, %v2572
        %v3220 = vmin.f32 16.0, %v3219
        %v3221 = vmul.f32 %v3220, 2.1237322e-06
        %v3222 = vadd.f32 %v3221, 0.00028619796
        %v3223 = vmul.f32 %v3220, %v3222
        %v3224 = vadd.f32 %v3223, 0.0036580483
        %v3225 = vmul.f32 %v3220, %v3224
        %v3226 = vadd.f32 %v3225, 0.05243302
        %v3227 = vmul.f32 %v3220, %v3226
        %v3228 = vadd.f32 %v3227, 0.18741608
        %v3229 = vmul.f32 %v3220, %v3228
        %v3230 = vadd.f32 %v3229, 1.1283791
        %v3231 = vmul.f32 %v2572, %v3230
        %v3232 = vmul.f32 %v3220, 3.8918573e-05
        %v3233 = vadd.f32 %v3232, 0.001143296
        %v3234 = vmul.f32 %v3220, %v3233
        %v3235 = vadd.f32 %v3234, 0.014752088
        %v3236 = vmul.f32 %v3220, %v3235
        %v3237 = vadd.f32 %v3236, 0.112945676
        %v3238 = vmul.f32 %v3220, %v3237
        %v3239 = vadd.f32 %v3238, 0.4994258
        %v3240 = vmul.f32 %v3220, %v3239
        %v3241 = vadd.f32 %v3240, 1.0
        %v3242 = vrcp.pop %v3241
        %v3243 = vmul.f32 %v3241, %v3242
        %v3244 = vsub.f32 1.0, %v3243
        %v3245 = vmul.f32 %v3242, %v3244
        %v3246 = vadd.f32 %v3242, %v3245
        %vm3247 = vweird.f32 %v3241
        %vm3248 = vweird.f32 %v3242
        %vm3249 = vmor %vm3247, %vm3248
        %v3250 = vsel %vm3249, %v3242, %v3246
        %v3251 = vand.u32 2147483647, %v3241
        %vm3252 = vcmp.eq.f32.partialorder %v3251, 8.507059e+37
        %v3253 = vand.u32 %v3241, 2147483648
        %v3254 = vor.u32 1.1754944e-38, %v3253
        %v3255 = vsel %vm3252, %v3254, %v3250
        %v3256 = vmul.f32 %v3231, %v3255
        %v3257 = vmin.f32 %v3256, 1.0
        %v3258 = vmax.f32 %v3257, -1.0
        %v3259 = vmul.f32 %v2573, %v2573
        %v3260 = vmin.f32 16.0, %v3259
        %v3261 = vmul.f32 %v3260, 2.1237322e-06
        %v3262 = vadd.f32 %v3261, 0.00028619796
        %v3263 = vmul.f32 %v3260, %v3262
        %v3264 = vadd.f32 %v3263, 0.0036580483
        %v3265 = vmul.f32 %v3260, %v3264
        %v3266 = vadd.f32 %v3265, 0.05243302
        %v3267 = vmul.f32 %v3260, %v3266
        %v3268 = vadd.f32 %v3267, 0.18741608
        %v3269 = vmul.f32 %v3260, %v3268
        %v3270 = vadd.f32 %v3269, 1.1283791
        %v3271 = vmul.f32 %v2573, %v3270
        %v3272 = vmul.f32 %v3260, 3.8918573e-05
        %v3273 = vadd.f32 %v3272, 0.001143296
        %v3274 = vmul.f32 %v3260, %v3273
        %v3275 = vadd.f32 %v3274, 0.014752088
        %v3276 = vmul.f32 %v3260, %v3275
        %v3277 = vadd.f32 %v3276, 0.112945676
        %v3278 = vmul.f32 %v3260, %v3277
        %v3279 = vadd.f32 %v3278, 0.4994258
        %v3280 = vmul.f32 %v3260, %v3279
        %v3281 = vadd.f32 %v3280, 1.0
        %v3282 = vrcp.pop %v3281
        %v3283 = vmul.f32 %v3281, %v3282
        %v3284 = vsub.f32 1.0, %v3283
        %v3285 = vmul.f32 %v3282, %v3284
        %v3286 = vadd.f32 %v3282, %v3285
        %vm3287 = vweird.f32 %v3281
        %vm3288 = vweird.f32 %v3282
        %vm3289 = vmor %vm3287, %vm3288
        %v3290 = vsel %vm3289, %v3282, %v3286
        %v3291 = vand.u32 2147483647, %v3281
        %vm3292 = vcmp.eq.f32.partialorder %v3291, 8.507059e+37
        %v3293 = vand.u32 %v3281, 2147483648
        %v3294 = vor.u32 1.1754944e-38, %v3293
        %v3295 = vsel %vm3292, %v3294, %v3290
        %v3296 = vmul.f32 %v3271, %v3295
        %v3297 = vmin.f32 %v3296, 1.0
        %v3298 = vmax.f32 %v3297, -1.0
        %v3299 = vmul.f32 %v2574, %v2574
        %v3300 = vmin.f32 16.0, %v3299
        %v3301 = vmul.f32 %v3300, 2.1237322e-06
        %v3302 = vadd.f32 %v3301, 0.00028619796
        %v3303 = vmul.f32 %v3300, %v3302
        %v3304 = vadd.f32 %v3303, 0.0036580483
        %v3305 = vmul.f32 %v3300, %v3304
        %v3306 = vadd.f32 %v3305, 0.05243302
        %v3307 = vmul.f32 %v3300, %v3306
        %v3308 = vadd.f32 %v3307, 0.18741608
        %v3309 = vmul.f32 %v3300, %v3308
        %v3310 = vadd.f32 %v3309, 1.1283791
        %v3311 = vmul.f32 %v2574, %v3310
        %v3312 = vmul.f32 %v3300, 3.8918573e-05
        %v3313 = vadd.f32 %v3312, 0.001143296
        %v3314 = vmul.f32 %v3300, %v3313
        %v3315 = vadd.f32 %v3314, 0.014752088
        %v3316 = vmul.f32 %v3300, %v3315
        %v3317 = vadd.f32 %v3316, 0.112945676
        %v3318 = vmul.f32 %v3300, %v3317
        %v3319 = vadd.f32 %v3318, 0.4994258
        %v3320 = vmul.f32 %v3300, %v3319
        %v3321 = vadd.f32 %v3320, 1.0
        %v3322 = vrcp.pop %v3321
        %v3323 = vmul.f32 %v3321, %v3322
        %v3324 = vsub.f32 1.0, %v3323
        %v3325 = vmul.f32 %v3322, %v3324
        %v3326 = vadd.f32 %v3322, %v3325
        %vm3327 = vweird.f32 %v3321
        %vm3328 = vweird.f32 %v3322
        %vm3329 = vmor %vm3327, %vm3328
        %v3330 = vsel %vm3329, %v3322, %v3326
        %v3331 = vand.u32 2147483647, %v3321
        %vm3332 = vcmp.eq.f32.partialorder %v3331, 8.507059e+37
        %v3333 = vand.u32 %v3321, 2147483648
        %v3334 = vor.u32 1.1754944e-38, %v3333
        %v3335 = vsel %vm3332, %v3334, %v3330
        %v3336 = vmul.f32 %v3311, %v3335
        %v3337 = vmin.f32 %v3336, 1.0
        %v3338 = vmax.f32 %v3337, -1.0
        %v3339 = vmul.f32 %v2575, %v2575
        %v3340 = vmin.f32 16.0, %v3339
        %v3341 = vmul.f32 %v3340, 2.1237322e-06
        %v3342 = vadd.f32 %v3341, 0.00028619796
        %v3343 = vmul.f32 %v3340, %v3342
        %v3344 = vadd.f32 %v3343, 0.0036580483
        %v3345 = vmul.f32 %v3340, %v3344
        %v3346 = vadd.f32 %v3345, 0.05243302
        %v3347 = vmul.f32 %v3340, %v3346
        %v3348 = vadd.f32 %v3347, 0.18741608
        %v3349 = vmul.f32 %v3340, %v3348
        %v3350 = vadd.f32 %v3349, 1.1283791
        %v3351 = vmul.f32 %v2575, %v3350
        %v3352 = vmul.f32 %v3340, 3.8918573e-05
        %v3353 = vadd.f32 %v3352, 0.001143296
        %v3354 = vmul.f32 %v3340, %v3353
        %v3355 = vadd.f32 %v3354, 0.014752088
        %v3356 = vmul.f32 %v3340, %v3355
        %v3357 = vadd.f32 %v3356, 0.112945676
        %v3358 = vmul.f32 %v3340, %v3357
        %v3359 = vadd.f32 %v3358, 0.4994258
        %v3360 = vmul.f32 %v3340, %v3359
        %v3361 = vadd.f32 %v3360, 1.0
        %v3362 = vrcp.pop %v3361
        %v3363 = vmul.f32 %v3361, %v3362
        %v3364 = vsub.f32 1.0, %v3363
        %v3365 = vmul.f32 %v3362, %v3364
        %v3366 = vadd.f32 %v3362, %v3365
        %vm3367 = vweird.f32 %v3361
        %vm3368 = vweird.f32 %v3362
        %vm3369 = vmor %vm3367, %vm3368
        %v3370 = vsel %vm3369, %v3362, %v3366
        %v3371 = vand.u32 2147483647, %v3361
        %vm3372 = vcmp.eq.f32.partialorder %v3371, 8.507059e+37
        %v3373 = vand.u32 %v3361, 2147483648
        %v3374 = vor.u32 1.1754944e-38, %v3373
        %v3375 = vsel %vm3372, %v3374, %v3370
        %v3376 = vmul.f32 %v3351, %v3375
        %v3377 = vmin.f32 %v3376, 1.0
        %v3378 = vmax.f32 %v3377, -1.0
        %v3379 = vmul.f32 %v2576, %v2576
        %v3380 = vmin.f32 16.0, %v3379
        %v3381 = vmul.f32 %v3380, 2.1237322e-06
        %v3382 = vadd.f32 %v3381, 0.00028619796
        %v3383 = vmul.f32 %v3380, %v3382
        %v3384 = vadd.f32 %v3383, 0.0036580483
        %v3385 = vmul.f32 %v3380, %v3384
        %v3386 = vadd.f32 %v3385, 0.05243302
        %v3387 = vmul.f32 %v3380, %v3386
        %v3388 = vadd.f32 %v3387, 0.18741608
        %v3389 = vmul.f32 %v3380, %v3388
        %v3390 = vadd.f32 %v3389, 1.1283791
        %v3391 = vmul.f32 %v2576, %v3390
        %v3392 = vmul.f32 %v3380, 3.8918573e-05
        %v3393 = vadd.f32 %v3392, 0.001143296
        %v3394 = vmul.f32 %v3380, %v3393
        %v3395 = vadd.f32 %v3394, 0.014752088
        %v3396 = vmul.f32 %v3380, %v3395
        %v3397 = vadd.f32 %v3396, 0.112945676
        %v3398 = vmul.f32 %v3380, %v3397
        %v3399 = vadd.f32 %v3398, 0.4994258
        %v3400 = vmul.f32 %v3380, %v3399
        %v3401 = vadd.f32 %v3400, 1.0
        %v3402 = vrcp.pop %v3401
        %v3403 = vmul.f32 %v3401, %v3402
        %v3404 = vsub.f32 1.0, %v3403
        %v3405 = vmul.f32 %v3402, %v3404
        %v3406 = vadd.f32 %v3402, %v3405
        %vm3407 = vweird.f32 %v3401
        %vm3408 = vweird.f32 %v3402
        %vm3409 = vmor %vm3407, %vm3408
        %v3410 = vsel %vm3409, %v3402, %v3406
        %v3411 = vand.u32 2147483647, %v3401
        %vm3412 = vcmp.eq.f32.partialorder %v3411, 8.507059e+37
        %v3413 = vand.u32 %v3401, 2147483648
        %v3414 = vor.u32 1.1754944e-38, %v3413
        %v3415 = vsel %vm3412, %v3414, %v3410
        %v3416 = vmul.f32 %v3391, %v3415
        %v3417 = vmin.f32 %v3416, 1.0
        %v3418 = vmax.f32 %v3417, -1.0
        %v3419 = vmul.f32 %v2577, %v2577
        %v3420 = vmin.f32 16.0, %v3419
        %v3421 = vmul.f32 %v3420, 2.1237322e-06
        %v3422 = vadd.f32 %v3421, 0.00028619796
        %v3423 = vmul.f32 %v3420, %v3422
        %v3424 = vadd.f32 %v3423, 0.0036580483
        %v3425 = vmul.f32 %v3420, %v3424
        %v3426 = vadd.f32 %v3425, 0.05243302
        %v3427 = vmul.f32 %v3420, %v3426
        %v3428 = vadd.f32 %v3427, 0.18741608
        %v3429 = vmul.f32 %v3420, %v3428
        %v3430 = vadd.f32 %v3429, 1.1283791
        %v3431 = vmul.f32 %v2577, %v3430
        %v3432 = vmul.f32 %v3420, 3.8918573e-05
        %v3433 = vadd.f32 %v3432, 0.001143296
        %v3434 = vmul.f32 %v3420, %v3433
        %v3435 = vadd.f32 %v3434, 0.014752088
        %v3436 = vmul.f32 %v3420, %v3435
        %v3437 = vadd.f32 %v3436, 0.112945676
        %v3438 = vmul.f32 %v3420, %v3437
        %v3439 = vadd.f32 %v3438, 0.4994258
        %v3440 = vmul.f32 %v3420, %v3439
        %v3441 = vadd.f32 %v3440, 1.0
        %v3442 = vrcp.pop %v3441
        %v3443 = vmul.f32 %v3441, %v3442
        %v3444 = vsub.f32 1.0, %v3443
        %v3445 = vmul.f32 %v3442, %v3444
        %v3446 = vadd.f32 %v3442, %v3445
        %vm3447 = vweird.f32 %v3441
        %vm3448 = vweird.f32 %v3442
        %vm3449 = vmor %vm3447, %vm3448
        %v3450 = vsel %vm3449, %v3442, %v3446
        %v3451 = vand.u32 2147483647, %v3441
        %vm3452 = vcmp.eq.f32.partialorder %v3451, 8.507059e+37
        %v3453 = vand.u32 %v3441, 2147483648
        %v3454 = vor.u32 1.1754944e-38, %v3453
        %v3455 = vsel %vm3452, %v3454, %v3450
        %v3456 = vmul.f32 %v3431, %v3455
        %v3457 = vmin.f32 %v3456, 1.0
        %v3458 = vmax.f32 %v3457, -1.0
        %v3459 = vmul.f32 %v2578, %v2578
        %v3460 = vmin.f32 16.0, %v3459
        %v3461 = vmul.f32 %v3460, 2.1237322e-06
        %v3462 = vadd.f32 %v3461, 0.00028619796
        %v3463 = vmul.f32 %v3460, %v3462
        %v3464 = vadd.f32 %v3463, 0.0036580483
        %v3465 = vmul.f32 %v3460, %v3464
        %v3466 = vadd.f32 %v3465, 0.05243302
        %v3467 = vmul.f32 %v3460, %v3466
        %v3468 = vadd.f32 %v3467, 0.18741608
        %v3469 = vmul.f32 %v3460, %v3468
        %v3470 = vadd.f32 %v3469, 1.1283791
        %v3471 = vmul.f32 %v2578, %v3470
        %v3472 = vmul.f32 %v3460, 3.8918573e-05
        %v3473 = vadd.f32 %v3472, 0.001143296
        %v3474 = vmul.f32 %v3460, %v3473
        %v3475 = vadd.f32 %v3474, 0.014752088
        %v3476 = vmul.f32 %v3460, %v3475
        %v3477 = vadd.f32 %v3476, 0.112945676
        %v3478 = vmul.f32 %v3460, %v3477
        %v3479 = vadd.f32 %v3478, 0.4994258
        %v3480 = vmul.f32 %v3460, %v3479
        %v3481 = vadd.f32 %v3480, 1.0
        %v3482 = vrcp.pop %v3481
        %v3483 = vmul.f32 %v3481, %v3482
        %v3484 = vsub.f32 1.0, %v3483
        %v3485 = vmul.f32 %v3482, %v3484
        %v3486 = vadd.f32 %v3482, %v3485
        %vm3487 = vweird.f32 %v3481
        %vm3488 = vweird.f32 %v3482
        %vm3489 = vmor %vm3487, %vm3488
        %v3490 = vsel %vm3489, %v3482, %v3486
        %v3491 = vand.u32 2147483647, %v3481
        %vm3492 = vcmp.eq.f32.partialorder %v3491, 8.507059e+37
        %v3493 = vand.u32 %v3481, 2147483648
        %v3494 = vor.u32 1.1754944e-38, %v3493
        %v3495 = vsel %vm3492, %v3494, %v3490
        %v3496 = vmul.f32 %v3471, %v3495
        %v3497 = vmin.f32 %v3496, 1.0
        %v3498 = vmax.f32 %v3497, -1.0
        %v3499 = vadd.f32 %v2618, 1.0
        %v3500 = vadd.f32 %v2658, 1.0
        %v3501 = vadd.f32 %v2698, 1.0
        %v3502 = vadd.f32 %v2738, 1.0
        %v3503 = vadd.f32 %v2778, 1.0
        %v3504 = vadd.f32 %v2818, 1.0
        %v3505 = vadd.f32 %v2858, 1.0
        %v3506 = vadd.f32 %v2898, 1.0
        %v3507 = vadd.f32 %v2938, 1.0
        %v3508 = vadd.f32 %v2978, 1.0
        %v3509 = vadd.f32 %v3018, 1.0
        %v3510 = vadd.f32 %v3058, 1.0
        %v3511 = vadd.f32 %v3098, 1.0
        %v3512 = vadd.f32 %v3138, 1.0
        %v3513 = vadd.f32 %v3178, 1.0
        %v3514 = vadd.f32 %v3218, 1.0
        %v3515 = vadd.f32 %v3258, 1.0
        %v3516 = vadd.f32 %v3298, 1.0
        %v3517 = vadd.f32 %v3338, 1.0
        %v3518 = vadd.f32 %v3378, 1.0
        %v3519 = vadd.f32 %v3418, 1.0
        %v3520 = vadd.f32 %v3458, 1.0
        %v3521 = vadd.f32 %v3498, 1.0
        %v3522 = vmul.f32 %v2533, %v3499
        %v3523 = vmul.f32 %v2534, %v3500
        %v3524 = vmul.f32 %v2535, %v3501
        %v3525 = vmul.f32 %v2536, %v3502
        %v3526 = vmul.f32 %v2537, %v3503
        %v3527 = vmul.f32 %v2538, %v3504
        %v3528 = vmul.f32 %v2539, %v3505
        %v3529 = vmul.f32 %v2540, %v3506
        %v3530 = vmul.f32 %v2541, %v3507
        %v3531 = vmul.f32 %v2542, %v3508
        %v3532 = vmul.f32 %v2543, %v3509
        %v3533 = vmul.f32 %v2544, %v3510
        %v3534 = vmul.f32 %v2545, %v3511
        %v3535 = vmul.f32 %v2546, %v3512
        %v3536 = vmul.f32 %v2547, %v3513
        %v3537 = vmul.f32 %v2548, %v3514
        %v3538 = vmul.f32 %v2549, %v3515
        %v3539 = vmul.f32 %v2550, %v3516
        %v3540 = vmul.f32 %v2551, %v3517
        %v3541 = vmul.f32 %v2552, %v3518
        %v3542 = vmul.f32 %v2553, %v3519
        %v3543 = vmul.f32 %v2554, %v3520
        %v3544 = vmul.f32 %v2555, %v3521
        %s3545 = scalar_lea.vmem %s3, 736
        %v3546 = vld [vmem:[%s3545] sm:$0xff]
        %v3547 = vld [vmem:[%s3545 + $0x8] sm:$0xff]
        %v3548 = vld [vmem:[%s3545 + $0x10] sm:$0xff]
        %v3549 = vld [vmem:[%s3545 + $0x18] sm:$0xff]
        %v3550 = vld [vmem:[%s3545 + $0x20] sm:$0xff]
        %v3551 = vld [vmem:[%s3545 + $0x28] sm:$0xff]
        %v3552 = vld [vmem:[%s3545 + $0x30] sm:$0xff]
        %v3553 = vld [vmem:[%s3545 + $0x38] sm:$0xff]
        %v3554 = vld [vmem:[%s3545 + $0x40] sm:$0xff]
        %v3555 = vld [vmem:[%s3545 + $0x48] sm:$0xff]
        %v3556 = vld [vmem:[%s3545 + $0x50] sm:$0xff]
        %v3557 = vld [vmem:[%s3545 + $0x58] sm:$0xff]
        %v3558 = vld [vmem:[%s3545 + $0x60] sm:$0xff]
        %v3559 = vld [vmem:[%s3545 + $0x68] sm:$0xff]
        %v3560 = vld [vmem:[%s3545 + $0x70] sm:$0xff]
        %v3561 = vld [vmem:[%s3545 + $0x78] sm:$0xff]
        %v3562 = vld [vmem:[%s3545 + $0x80] sm:$0xff]
        %v3563 = vld [vmem:[%s3545 + $0x88] sm:$0xff]
        %v3564 = vld [vmem:[%s3545 + $0x90] sm:$0xff]
        %v3565 = vld [vmem:[%s3545 + $0x98] sm:$0xff]
        %v3566 = vld [vmem:[%s3545 + $0xa0] sm:$0xff]
        %v3567 = vld [vmem:[%s3545 + $0xa8] sm:$0xff]
        %v3568 = vld [vmem:[%s3545 + $0xb0] sm:$0xff]
        %v3569 = vld [vmem:[%s3545 + $0xb8] sm:$0xff]
        %v3570 = vld [vmem:[%s3545 + $0xc0] sm:$0xff]
        %v3571 = vld [vmem:[%s3545 + $0xc8] sm:$0xff]
        %v3572 = vld [vmem:[%s3545 + $0xd0] sm:$0xff]
        %v3573 = vld [vmem:[%s3545 + $0xd8] sm:$0xff]
        %v3574 = vld [vmem:[%s3545 + $0xe0] sm:$0xff]
        %v3575 = vld [vmem:[%s3545 + $0xe8] sm:$0xff]
        %v3576 = vld [vmem:[%s3545 + $0xf0] sm:$0xff]
        %v3577 = vld [vmem:[%s3545 + $0xf8] sm:$0xff]
        %v3578 = vld [vmem:[%s3545 + $0x100] sm:$0xff]
        %v3579 = vld [vmem:[%s3545 + $0x108] sm:$0xff]
        %v3580 = vld [vmem:[%s3545 + $0x110] sm:$0xff]
        %v3581 = vld [vmem:[%s3545 + $0x118] sm:$0xff]
        %v3582 = vld [vmem:[%s3545 + $0x120] sm:$0xff]
        %v3583 = vld [vmem:[%s3545 + $0x128] sm:$0xff]
        %v3584 = vld [vmem:[%s3545 + $0x130] sm:$0xff]
        %v3585 = vld [vmem:[%s3545 + $0x138] sm:$0xff]
        %v3586 = vld [vmem:[%s3545 + $0x140] sm:$0xff]
        %v3587 = vld [vmem:[%s3545 + $0x148] sm:$0xff]
        %v3588 = vld [vmem:[%s3545 + $0x150] sm:$0xff]
        %v3589 = vld [vmem:[%s3545 + $0x158] sm:$0xff]
        %v3590 = vld [vmem:[%s3545 + $0x160] sm:$0xf]
        %v3591 = vld [vmem:[%s3545 + $0x168] sm:$0xf]
        %s3592 = scalar_lea.vmem %s4, 368
        %v3593 = vld [vmem:[%s3592] sm:$0xff]
        %v3594 = vld [vmem:[%s3592 + $0x8] sm:$0xff]
        %v3595 = vld [vmem:[%s3592 + $0x10] sm:$0xff]
        %v3596 = vld [vmem:[%s3592 + $0x18] sm:$0xff]
        %v3597 = vld [vmem:[%s3592 + $0x20] sm:$0xff]
        %v3598 = vld [vmem:[%s3592 + $0x28] sm:$0xff]
        %v3599 = vld [vmem:[%s3592 + $0x30] sm:$0xff]
        %v3600 = vld [vmem:[%s3592 + $0x38] sm:$0xff]
        %v3601 = vld [vmem:[%s3592 + $0x40] sm:$0xff]
        %v3602 = vld [vmem:[%s3592 + $0x48] sm:$0xff]
        %v3603 = vld [vmem:[%s3592 + $0x50] sm:$0xff]
        %v3604 = vld [vmem:[%s3592 + $0x58] sm:$0xff]
        %v3605 = vld [vmem:[%s3592 + $0x60] sm:$0xff]
        %v3606 = vld [vmem:[%s3592 + $0x68] sm:$0xff]
        %v3607 = vld [vmem:[%s3592 + $0x70] sm:$0xff]
        %v3608 = vld [vmem:[%s3592 + $0x78] sm:$0xff]
        %v3609 = vld [vmem:[%s3592 + $0x80] sm:$0xff]
        %v3610 = vld [vmem:[%s3592 + $0x88] sm:$0xff]
        %v3611 = vld [vmem:[%s3592 + $0x90] sm:$0xff]
        %v3612 = vld [vmem:[%s3592 + $0x98] sm:$0xff]
        %v3613 = vld [vmem:[%s3592 + $0xa0] sm:$0xff]
        %v3614 = vld [vmem:[%s3592 + $0xa8] sm:$0xff]
        %v3615 = vld [vmem:[%s3592 + $0xb0] sm:$0xf]
        %3617 = vset.pattern.permute.xlu0 0
        %3618 = vperm.xlu0 %3617, %v3593
        %v3619 = vpop.permute.xlu0 %3618
        %3622 = vset.pattern.permute.xlu0 0
        %3623 = vperm.xlu0 %3622, %v3594
        %v3624 = vpop.permute.xlu0 %3623
        %3627 = vset.pattern.permute.xlu0 0
        %3628 = vperm.xlu0 %3627, %v3595
        %v3629 = vpop.permute.xlu0 %3628
        %3632 = vset.pattern.permute.xlu0 0
        %3633 = vperm.xlu0 %3632, %v3596
        %v3634 = vpop.permute.xlu0 %3633
        %3637 = vset.pattern.permute.xlu0 0
        %3638 = vperm.xlu0 %3637, %v3597
        %v3639 = vpop.permute.xlu0 %3638
        %3642 = vset.pattern.permute.xlu0 0
        %3643 = vperm.xlu0 %3642, %v3598
        %v3644 = vpop.permute.xlu0 %3643
        %3647 = vset.pattern.permute.xlu0 0
        %3648 = vperm.xlu0 %3647, %v3599
        %v3649 = vpop.permute.xlu0 %3648
        %3652 = vset.pattern.permute.xlu0 0
        %3653 = vperm.xlu0 %3652, %v3600
        %v3654 = vpop.permute.xlu0 %3653
        %3657 = vset.pattern.permute.xlu0 0
        %3658 = vperm.xlu0 %3657, %v3601
        %v3659 = vpop.permute.xlu0 %3658
        %3662 = vset.pattern.permute.xlu0 0
        %3663 = vperm.xlu0 %3662, %v3602
        %v3664 = vpop.permute.xlu0 %3663
        %3667 = vset.pattern.permute.xlu0 0
        %3668 = vperm.xlu0 %3667, %v3603
        %v3669 = vpop.permute.xlu0 %3668
        %3672 = vset.pattern.permute.xlu0 0
        %3673 = vperm.xlu0 %3672, %v3604
        %v3674 = vpop.permute.xlu0 %3673
        %3677 = vset.pattern.permute.xlu0 0
        %3678 = vperm.xlu0 %3677, %v3605
        %v3679 = vpop.permute.xlu0 %3678
        %3682 = vset.pattern.permute.xlu0 0
        %3683 = vperm.xlu0 %3682, %v3606
        %v3684 = vpop.permute.xlu0 %3683
        %3687 = vset.pattern.permute.xlu0 0
        %3688 = vperm.xlu0 %3687, %v3607
        %v3689 = vpop.permute.xlu0 %3688
        %3692 = vset.pattern.permute.xlu0 0
        %3693 = vperm.xlu0 %3692, %v3608
        %v3694 = vpop.permute.xlu0 %3693
        %3697 = vset.pattern.permute.xlu0 0
        %3698 = vperm.xlu0 %3697, %v3609
        %v3699 = vpop.permute.xlu0 %3698
        %3702 = vset.pattern.permute.xlu0 0
        %3703 = vperm.xlu0 %3702, %v3610
        %v3704 = vpop.permute.xlu0 %3703
        %3707 = vset.pattern.permute.xlu0 0
        %3708 = vperm.xlu0 %3707, %v3611
        %v3709 = vpop.permute.xlu0 %3708
        %3712 = vset.pattern.permute.xlu0 0
        %3713 = vperm.xlu0 %3712, %v3612
        %v3714 = vpop.permute.xlu0 %3713
        %3717 = vset.pattern.permute.xlu0 0
        %3718 = vperm.xlu0 %3717, %v3613
        %v3719 = vpop.permute.xlu0 %3718
        %3722 = vset.pattern.permute.xlu0 0
        %3723 = vperm.xlu0 %3722, %v3614
        %v3724 = vpop.permute.xlu0 %3723
        %3727 = vset.pattern.permute.xlu0 0
        %3728 = vperm.xlu0 %3727, %v3615
        %v3729 = vpop.permute.xlu0 %3728
        %v3732 = vsel %vm845, %v3547, 0
        %v3735 = vsel %vm845, %v3549, 0
        %v3738 = vsel %vm845, %v3551, 0
        %v3741 = vsel %vm845, %v3553, 0
        %v3744 = vsel %vm845, %v3555, 0
        %v3747 = vsel %vm845, %v3557, 0
        %v3750 = vsel %vm845, %v3559, 0
        %v3753 = vsel %vm845, %v3561, 0
        %v3756 = vsel %vm845, %v3563, 0
        %v3759 = vsel %vm845, %v3565, 0
        %v3762 = vsel %vm845, %v3567, 0
        %v3765 = vsel %vm845, %v3569, 0
        %v3768 = vsel %vm845, %v3571, 0
        %v3771 = vsel %vm845, %v3573, 0
        %v3774 = vsel %vm845, %v3575, 0
        %v3777 = vsel %vm845, %v3577, 0
        %v3780 = vsel %vm845, %v3579, 0
        %v3783 = vsel %vm845, %v3581, 0
        %v3786 = vsel %vm845, %v3583, 0
        %v3789 = vsel %vm845, %v3585, 0
        %v3792 = vsel %vm845, %v3587, 0
        %v3795 = vsel %vm845, %v3589, 0
        %v3798 = vsel %vm845, %v3591, 0
        %v3801 = vsel %vm915, %v3544, 0
        %3803 = vmatpush.msra.mxu0 %v3537
        %3804 = vmatpush.msra.mxu0 %v3536
        %3805 = vmatpush.msra.mxu0 %v3535
        %3806 = vmatpush.msra.mxu0 %v3534
        %3807 = vmatpush.msra.mxu0 %v3533
        %3808 = vmatpush.msra.mxu0 %v3532
        %3809 = vmatpush.msra.mxu0 %v3531
        %3810 = vmatpush.msra.mxu0 %v3530
        %3811 = vmatpush.msra.mxu0 %v3529
        %3812 = vmatpush.msra.mxu0 %v3528
        %3813 = vmatpush.msra.mxu0 %v3527
        %3814 = vmatpush.msra.mxu0 %v3526
        %3815 = vmatpush.msra.mxu0 %v3525
        %3816 = vmatpush.msra.mxu0 %v3524
        %3817 = vmatpush.msra.mxu0 %v3523
        %3818 = vmatpush.msra.mxu0 %v3522
        %3819 = vmatmul.f32.gmra.mxu0 %v3546
        %v3820 = vpop.f32.mrf.mxu0
        %v3821 = vadd.f32 %v3619, %v3820
        %3822 = vmatmul.f32.gmra.mxu0 %v3548
        %v3823 = vpop.f32.mrf.mxu0
        %v3824 = vadd.f32 %v3624, %v3823
        %3825 = vmatmul.f32.gmra.mxu0 %v3550
        %v3826 = vpop.f32.mrf.mxu0
        %v3827 = vadd.f32 %v3629, %v3826
        %3828 = vmatmul.f32.gmra.mxu0 %v3552
        %v3829 = vpop.f32.mrf.mxu0
        %v3830 = vadd.f32 %v3634, %v3829
        %3831 = vmatmul.f32.gmra.mxu0 %v3554
        %v3832 = vpop.f32.mrf.mxu0
        %v3833 = vadd.f32 %v3639, %v3832
        %3834 = vmatmul.f32.gmra.mxu0 %v3556
        %v3835 = vpop.f32.mrf.mxu0
        %v3836 = vadd.f32 %v3644, %v3835
        %3837 = vmatmul.f32.gmra.mxu0 %v3558
        %v3838 = vpop.f32.mrf.mxu0
        %v3839 = vadd.f32 %v3649, %v3838
        %3840 = vmatmul.f32.gmra.mxu0 %v3560
        %v3841 = vpop.f32.mrf.mxu0
        %v3842 = vadd.f32 %v3654, %v3841
        %3843 = vmatmul.f32.gmra.mxu0 %v3562
        %v3844 = vpop.f32.mrf.mxu0
        %v3845 = vadd.f32 %v3659, %v3844
        %3846 = vmatmul.f32.gmra.mxu0 %v3564
        %v3847 = vpop.f32.mrf.mxu0
        %v3848 = vadd.f32 %v3664, %v3847
        %3849 = vmatmul.f32.gmra.mxu0 %v3566
        %v3850 = vpop.f32.mrf.mxu0
        %v3851 = vadd.f32 %v3669, %v3850
        %3852 = vmatmul.f32.gmra.mxu0 %v3568
        %v3853 = vpop.f32.mrf.mxu0
        %v3854 = vadd.f32 %v3674, %v3853
        %3855 = vmatmul.f32.gmra.mxu0 %v3570
        %v3856 = vpop.f32.mrf.mxu0
        %v3857 = vadd.f32 %v3679, %v3856
        %3858 = vmatmul.f32.gmra.mxu0 %v3572
        %v3859 = vpop.f32.mrf.mxu0
        %v3860 = vadd.f32 %v3684, %v3859
        %3861 = vmatmul.f32.gmra.mxu0 %v3574
        %v3862 = vpop.f32.mrf.mxu0
        %v3863 = vadd.f32 %v3689, %v3862
        %3864 = vmatmul.f32.gmra.mxu0 %v3576
        %v3865 = vpop.f32.mrf.mxu0
        %v3866 = vadd.f32 %v3694, %v3865
        %3867 = vmatmul.f32.gmra.mxu0 %v3578
        %v3868 = vpop.f32.mrf.mxu0
        %v3869 = vadd.f32 %v3699, %v3868
        %3870 = vmatmul.f32.gmra.mxu0 %v3580
        %v3871 = vpop.f32.mrf.mxu0
        %v3872 = vadd.f32 %v3704, %v3871
        %3873 = vmatmul.f32.gmra.mxu0 %v3582
        %v3874 = vpop.f32.mrf.mxu0
        %v3875 = vadd.f32 %v3709, %v3874
        %3876 = vmatmul.f32.gmra.mxu0 %v3584
        %v3877 = vpop.f32.mrf.mxu0
        %v3878 = vadd.f32 %v3714, %v3877
        %3879 = vmatmul.f32.gmra.mxu0 %v3586
        %v3880 = vpop.f32.mrf.mxu0
        %v3881 = vadd.f32 %v3719, %v3880
        %3882 = vmatmul.f32.gmra.mxu0 %v3588
        %v3883 = vpop.f32.mrf.mxu0
        %v3884 = vadd.f32 %v3724, %v3883
        %3885 = vmatmul.f32.gmra.mxu0 %v3590
        %v3886 = vpop.f32.mrf.mxu0
        %v3887 = vadd.f32 %v3729, %v3886
        %3888 = vdwg.mxu0
        %3889 = vmatpush.msra.mxu0 0.0
        %3890 = vmatpush.msra.mxu0 0.0
        %3891 = vmatpush.msra.mxu0 0.0
        %3892 = vmatpush.msra.mxu0 0.0
        %3893 = vmatpush.msra.mxu0 0.0
        %3894 = vmatpush.msra.mxu0 0.0
        %3895 = vmatpush.msra.mxu0 0.0
        %3896 = vmatpush.msra.mxu0 0.0
        %3897 = vmatpush.msra.mxu0 0.0
        %3898 = vmatpush.msra.mxu0 %v3801
        %3899 = vmatpush.msra.mxu0 %v3543
        %3900 = vmatpush.msra.mxu0 %v3542
        %3901 = vmatpush.msra.mxu0 %v3541
        %3902 = vmatpush.msra.mxu0 %v3540
        %3903 = vmatpush.msra.mxu0 %v3539
        %3904 = vmatpush.msra.mxu0 %v3538
        %3905 = vmatmul.f32.gmra.mxu0 %v3732
        %v3906 = vpop.f32.mrf.mxu0
        %v3907 = vadd.f32 %v3821, %v3906
        %3908 = vmatmul.f32.gmra.mxu0 %v3735
        %v3909 = vpop.f32.mrf.mxu0
        %v3910 = vadd.f32 %v3824, %v3909
        %3911 = vmatmul.f32.gmra.mxu0 %v3738
        %v3912 = vpop.f32.mrf.mxu0
        %v3913 = vadd.f32 %v3827, %v3912
        %3914 = vmatmul.f32.gmra.mxu0 %v3741
        %v3915 = vpop.f32.mrf.mxu0
        %v3916 = vadd.f32 %v3830, %v3915
        %3917 = vmatmul.f32.gmra.mxu0 %v3744
        %v3918 = vpop.f32.mrf.mxu0
        %v3919 = vadd.f32 %v3833, %v3918
        %3920 = vmatmul.f32.gmra.mxu0 %v3747
        %v3921 = vpop.f32.mrf.mxu0
        %v3922 = vadd.f32 %v3836, %v3921
        %3923 = vmatmul.f32.gmra.mxu0 %v3750
        %v3924 = vpop.f32.mrf.mxu0
        %v3925 = vadd.f32 %v3839, %v3924
        %3926 = vmatmul.f32.gmra.mxu0 %v3753
        %v3927 = vpop.f32.mrf.mxu0
        %v3928 = vadd.f32 %v3842, %v3927
        %3929 = vmatmul.f32.gmra.mxu0 %v3756
        %v3930 = vpop.f32.mrf.mxu0
        %v3931 = vadd.f32 %v3845, %v3930
        %3932 = vmatmul.f32.gmra.mxu0 %v3759
        %v3933 = vpop.f32.mrf.mxu0
        %v3934 = vadd.f32 %v3848, %v3933
        %3935 = vmatmul.f32.gmra.mxu0 %v3762
        %v3936 = vpop.f32.mrf.mxu0
        %v3937 = vadd.f32 %v3851, %v3936
        %3938 = vmatmul.f32.gmra.mxu0 %v3765
        %v3939 = vpop.f32.mrf.mxu0
        %v3940 = vadd.f32 %v3854, %v3939
        %3941 = vmatmul.f32.gmra.mxu0 %v3768
        %v3942 = vpop.f32.mrf.mxu0
        %v3943 = vadd.f32 %v3857, %v3942
        %3944 = vmatmul.f32.gmra.mxu0 %v3771
        %v3945 = vpop.f32.mrf.mxu0
        %v3946 = vadd.f32 %v3860, %v3945
        %3947 = vmatmul.f32.gmra.mxu0 %v3774
        %v3948 = vpop.f32.mrf.mxu0
        %v3949 = vadd.f32 %v3863, %v3948
        %3950 = vmatmul.f32.gmra.mxu0 %v3777
        %v3951 = vpop.f32.mrf.mxu0
        %v3952 = vadd.f32 %v3866, %v3951
        %3953 = vmatmul.f32.gmra.mxu0 %v3780
        %v3954 = vpop.f32.mrf.mxu0
        %v3955 = vadd.f32 %v3869, %v3954
        %3956 = vmatmul.f32.gmra.mxu0 %v3783
        %v3957 = vpop.f32.mrf.mxu0
        %v3958 = vadd.f32 %v3872, %v3957
        %3959 = vmatmul.f32.gmra.mxu0 %v3786
        %v3960 = vpop.f32.mrf.mxu0
        %v3961 = vadd.f32 %v3875, %v3960
        %3962 = vmatmul.f32.gmra.mxu0 %v3789
        %v3963 = vpop.f32.mrf.mxu0
        %v3964 = vadd.f32 %v3878, %v3963
        %3965 = vmatmul.f32.gmra.mxu0 %v3792
        %v3966 = vpop.f32.mrf.mxu0
        %v3967 = vadd.f32 %v3881, %v3966
        %3968 = vmatmul.f32.gmra.mxu0 %v3795
        %v3969 = vpop.f32.mrf.mxu0
        %v3970 = vadd.f32 %v3884, %v3969
        %3971 = vmatmul.f32.gmra.mxu0 %v3798
        %v3972 = vpop.f32.mrf.mxu0
        %v3973 = vadd.f32 %v3887, %v3972
        %3974 = vdwg.mxu0
        %v3975 = vmul.f32 %v3907, 0.5
        %v3976 = vmul.f32 %v3910, 0.5
        %v3977 = vmul.f32 %v3913, 0.5
        %v3978 = vmul.f32 %v3916, 0.5
        %v3979 = vmul.f32 %v3919, 0.5
        %v3980 = vmul.f32 %v3922, 0.5
        %v3981 = vmul.f32 %v3925, 0.5
        %v3982 = vmul.f32 %v3928, 0.5
        %v3983 = vmul.f32 %v3931, 0.5
        %v3984 = vmul.f32 %v3934, 0.5
        %v3985 = vmul.f32 %v3937, 0.5
        %v3986 = vmul.f32 %v3940, 0.5
        %v3987 = vmul.f32 %v3943, 0.5
        %v3988 = vmul.f32 %v3946, 0.5
        %v3989 = vmul.f32 %v3949, 0.5
        %v3990 = vmul.f32 %v3952, 0.5
        %v3991 = vmul.f32 %v3955, 0.5
        %v3992 = vmul.f32 %v3958, 0.5
        %v3993 = vmul.f32 %v3961, 0.5
        %v3994 = vmul.f32 %v3964, 0.5
        %v3995 = vmul.f32 %v3967, 0.5
        %v3996 = vmul.f32 %v3970, 0.5
        %v3997 = vmul.f32 %v3973, 0.5
        %v3998 = vmul.f32 %v3907, 0.70710677
        %v3999 = vmul.f32 %v3910, 0.70710677
        %v4000 = vmul.f32 %v3913, 0.70710677
        %v4001 = vmul.f32 %v3916, 0.70710677
        %v4002 = vmul.f32 %v3919, 0.70710677
        %v4003 = vmul.f32 %v3922, 0.70710677
        %v4004 = vmul.f32 %v3925, 0.70710677
        %v4005 = vmul.f32 %v3928, 0.70710677
        %v4006 = vmul.f32 %v3931, 0.70710677
        %v4007 = vmul.f32 %v3934, 0.70710677
        %v4008 = vmul.f32 %v3937, 0.70710677
        %v4009 = vmul.f32 %v3940, 0.70710677
        %v4010 = vmul.f32 %v3943, 0.70710677
        %v4011 = vmul.f32 %v3946, 0.70710677
        %v4012 = vmul.f32 %v3949, 0.70710677
        %v4013 = vmul.f32 %v3952, 0.70710677
        %v4014 = vmul.f32 %v3955, 0.70710677
        %v4015 = vmul.f32 %v3958, 0.70710677
        %v4016 = vmul.f32 %v3961, 0.70710677
        %v4017 = vmul.f32 %v3964, 0.70710677
        %v4018 = vmul.f32 %v3967, 0.70710677
        %v4019 = vmul.f32 %v3970, 0.70710677
        %v4020 = vmul.f32 %v3973, 0.70710677
        %v4021 = vmul.f32 %v3998, %v3998
        %v4022 = vmin.f32 16.0, %v4021
        %v4023 = vmul.f32 %v4022, 2.1237322e-06
        %v4024 = vadd.f32 %v4023, 0.00028619796
        %v4025 = vmul.f32 %v4022, %v4024
        %v4026 = vadd.f32 %v4025, 0.0036580483
        %v4027 = vmul.f32 %v4022, %v4026
        %v4028 = vadd.f32 %v4027, 0.05243302
        %v4029 = vmul.f32 %v4022, %v4028
        %v4030 = vadd.f32 %v4029, 0.18741608
        %v4031 = vmul.f32 %v4022, %v4030
        %v4032 = vadd.f32 %v4031, 1.1283791
        %v4033 = vmul.f32 %v3998, %v4032
        %v4034 = vmul.f32 %v4022, 3.8918573e-05
        %v4035 = vadd.f32 %v4034, 0.001143296
        %v4036 = vmul.f32 %v4022, %v4035
        %v4037 = vadd.f32 %v4036, 0.014752088
        %v4038 = vmul.f32 %v4022, %v4037
        %v4039 = vadd.f32 %v4038, 0.112945676
        %v4040 = vmul.f32 %v4022, %v4039
        %v4041 = vadd.f32 %v4040, 0.4994258
        %v4042 = vmul.f32 %v4022, %v4041
        %v4043 = vadd.f32 %v4042, 1.0
        %v4044 = vrcp.pop %v4043
        %v4045 = vmul.f32 %v4043, %v4044
        %v4046 = vsub.f32 1.0, %v4045
        %v4047 = vmul.f32 %v4044, %v4046
        %v4048 = vadd.f32 %v4044, %v4047
        %vm4049 = vweird.f32 %v4043
        %vm4050 = vweird.f32 %v4044
        %vm4051 = vmor %vm4049, %vm4050
        %v4052 = vsel %vm4051, %v4044, %v4048
        %v4053 = vand.u32 2147483647, %v4043
        %vm4054 = vcmp.eq.f32.partialorder %v4053, 8.507059e+37
        %v4055 = vand.u32 %v4043, 2147483648
        %v4056 = vor.u32 1.1754944e-38, %v4055
        %v4057 = vsel %vm4054, %v4056, %v4052
        %v4058 = vmul.f32 %v4033, %v4057
        %v4059 = vmin.f32 %v4058, 1.0
        %v4060 = vmax.f32 %v4059, -1.0
        %v4061 = vmul.f32 %v3999, %v3999
        %v4062 = vmin.f32 16.0, %v4061
        %v4063 = vmul.f32 %v4062, 2.1237322e-06
        %v4064 = vadd.f32 %v4063, 0.00028619796
        %v4065 = vmul.f32 %v4062, %v4064
        %v4066 = vadd.f32 %v4065, 0.0036580483
        %v4067 = vmul.f32 %v4062, %v4066
        %v4068 = vadd.f32 %v4067, 0.05243302
        %v4069 = vmul.f32 %v4062, %v4068
        %v4070 = vadd.f32 %v4069, 0.18741608
        %v4071 = vmul.f32 %v4062, %v4070
        %v4072 = vadd.f32 %v4071, 1.1283791
        %v4073 = vmul.f32 %v3999, %v4072
        %v4074 = vmul.f32 %v4062, 3.8918573e-05
        %v4075 = vadd.f32 %v4074, 0.001143296
        %v4076 = vmul.f32 %v4062, %v4075
        %v4077 = vadd.f32 %v4076, 0.014752088
        %v4078 = vmul.f32 %v4062, %v4077
        %v4079 = vadd.f32 %v4078, 0.112945676
        %v4080 = vmul.f32 %v4062, %v4079
        %v4081 = vadd.f32 %v4080, 0.4994258
        %v4082 = vmul.f32 %v4062, %v4081
        %v4083 = vadd.f32 %v4082, 1.0
        %v4084 = vrcp.pop %v4083
        %v4085 = vmul.f32 %v4083, %v4084
        %v4086 = vsub.f32 1.0, %v4085
        %v4087 = vmul.f32 %v4084, %v4086
        %v4088 = vadd.f32 %v4084, %v4087
        %vm4089 = vweird.f32 %v4083
        %vm4090 = vweird.f32 %v4084
        %vm4091 = vmor %vm4089, %vm4090
        %v4092 = vsel %vm4091, %v4084, %v4088
        %v4093 = vand.u32 2147483647, %v4083
        %vm4094 = vcmp.eq.f32.partialorder %v4093, 8.507059e+37
        %v4095 = vand.u32 %v4083, 2147483648
        %v4096 = vor.u32 1.1754944e-38, %v4095
        %v4097 = vsel %vm4094, %v4096, %v4092
        %v4098 = vmul.f32 %v4073, %v4097
        %v4099 = vmin.f32 %v4098, 1.0
        %v4100 = vmax.f32 %v4099, -1.0
        %v4101 = vmul.f32 %v4000, %v4000
        %v4102 = vmin.f32 16.0, %v4101
        %v4103 = vmul.f32 %v4102, 2.1237322e-06
        %v4104 = vadd.f32 %v4103, 0.00028619796
        %v4105 = vmul.f32 %v4102, %v4104
        %v4106 = vadd.f32 %v4105, 0.0036580483
        %v4107 = vmul.f32 %v4102, %v4106
        %v4108 = vadd.f32 %v4107, 0.05243302
        %v4109 = vmul.f32 %v4102, %v4108
        %v4110 = vadd.f32 %v4109, 0.18741608
        %v4111 = vmul.f32 %v4102, %v4110
        %v4112 = vadd.f32 %v4111, 1.1283791
        %v4113 = vmul.f32 %v4000, %v4112
        %v4114 = vmul.f32 %v4102, 3.8918573e-05
        %v4115 = vadd.f32 %v4114, 0.001143296
        %v4116 = vmul.f32 %v4102, %v4115
        %v4117 = vadd.f32 %v4116, 0.014752088
        %v4118 = vmul.f32 %v4102, %v4117
        %v4119 = vadd.f32 %v4118, 0.112945676
        %v4120 = vmul.f32 %v4102, %v4119
        %v4121 = vadd.f32 %v4120, 0.4994258
        %v4122 = vmul.f32 %v4102, %v4121
        %v4123 = vadd.f32 %v4122, 1.0
        %v4124 = vrcp.pop %v4123
        %v4125 = vmul.f32 %v4123, %v4124
        %v4126 = vsub.f32 1.0, %v4125
        %v4127 = vmul.f32 %v4124, %v4126
        %v4128 = vadd.f32 %v4124, %v4127
        %vm4129 = vweird.f32 %v4123
        %vm4130 = vweird.f32 %v4124
        %vm4131 = vmor %vm4129, %vm4130
        %v4132 = vsel %vm4131, %v4124, %v4128
        %v4133 = vand.u32 2147483647, %v4123
        %vm4134 = vcmp.eq.f32.partialorder %v4133, 8.507059e+37
        %v4135 = vand.u32 %v4123, 2147483648
        %v4136 = vor.u32 1.1754944e-38, %v4135
        %v4137 = vsel %vm4134, %v4136, %v4132
        %v4138 = vmul.f32 %v4113, %v4137
        %v4139 = vmin.f32 %v4138, 1.0
        %v4140 = vmax.f32 %v4139, -1.0
        %v4141 = vmul.f32 %v4001, %v4001
        %v4142 = vmin.f32 16.0, %v4141
        %v4143 = vmul.f32 %v4142, 2.1237322e-06
        %v4144 = vadd.f32 %v4143, 0.00028619796
        %v4145 = vmul.f32 %v4142, %v4144
        %v4146 = vadd.f32 %v4145, 0.0036580483
        %v4147 = vmul.f32 %v4142, %v4146
        %v4148 = vadd.f32 %v4147, 0.05243302
        %v4149 = vmul.f32 %v4142, %v4148
        %v4150 = vadd.f32 %v4149, 0.18741608
        %v4151 = vmul.f32 %v4142, %v4150
        %v4152 = vadd.f32 %v4151, 1.1283791
        %v4153 = vmul.f32 %v4001, %v4152
        %v4154 = vmul.f32 %v4142, 3.8918573e-05
        %v4155 = vadd.f32 %v4154, 0.001143296
        %v4156 = vmul.f32 %v4142, %v4155
        %v4157 = vadd.f32 %v4156, 0.014752088
        %v4158 = vmul.f32 %v4142, %v4157
        %v4159 = vadd.f32 %v4158, 0.112945676
        %v4160 = vmul.f32 %v4142, %v4159
        %v4161 = vadd.f32 %v4160, 0.4994258
        %v4162 = vmul.f32 %v4142, %v4161
        %v4163 = vadd.f32 %v4162, 1.0
        %v4164 = vrcp.pop %v4163
        %v4165 = vmul.f32 %v4163, %v4164
        %v4166 = vsub.f32 1.0, %v4165
        %v4167 = vmul.f32 %v4164, %v4166
        %v4168 = vadd.f32 %v4164, %v4167
        %vm4169 = vweird.f32 %v4163
        %vm4170 = vweird.f32 %v4164
        %vm4171 = vmor %vm4169, %vm4170
        %v4172 = vsel %vm4171, %v4164, %v4168
        %v4173 = vand.u32 2147483647, %v4163
        %vm4174 = vcmp.eq.f32.partialorder %v4173, 8.507059e+37
        %v4175 = vand.u32 %v4163, 2147483648
        %v4176 = vor.u32 1.1754944e-38, %v4175
        %v4177 = vsel %vm4174, %v4176, %v4172
        %v4178 = vmul.f32 %v4153, %v4177
        %v4179 = vmin.f32 %v4178, 1.0
        %v4180 = vmax.f32 %v4179, -1.0
        %v4181 = vmul.f32 %v4002, %v4002
        %v4182 = vmin.f32 16.0, %v4181
        %v4183 = vmul.f32 %v4182, 2.1237322e-06
        %v4184 = vadd.f32 %v4183, 0.00028619796
        %v4185 = vmul.f32 %v4182, %v4184
        %v4186 = vadd.f32 %v4185, 0.0036580483
        %v4187 = vmul.f32 %v4182, %v4186
        %v4188 = vadd.f32 %v4187, 0.05243302
        %v4189 = vmul.f32 %v4182, %v4188
        %v4190 = vadd.f32 %v4189, 0.18741608
        %v4191 = vmul.f32 %v4182, %v4190
        %v4192 = vadd.f32 %v4191, 1.1283791
        %v4193 = vmul.f32 %v4002, %v4192
        %v4194 = vmul.f32 %v4182, 3.8918573e-05
        %v4195 = vadd.f32 %v4194, 0.001143296
        %v4196 = vmul.f32 %v4182, %v4195
        %v4197 = vadd.f32 %v4196, 0.014752088
        %v4198 = vmul.f32 %v4182, %v4197
        %v4199 = vadd.f32 %v4198, 0.112945676
        %v4200 = vmul.f32 %v4182, %v4199
        %v4201 = vadd.f32 %v4200, 0.4994258
        %v4202 = vmul.f32 %v4182, %v4201
        %v4203 = vadd.f32 %v4202, 1.0
        %v4204 = vrcp.pop %v4203
        %v4205 = vmul.f32 %v4203, %v4204
        %v4206 = vsub.f32 1.0, %v4205
        %v4207 = vmul.f32 %v4204, %v4206
        %v4208 = vadd.f32 %v4204, %v4207
        %vm4209 = vweird.f32 %v4203
        %vm4210 = vweird.f32 %v4204
        %vm4211 = vmor %vm4209, %vm4210
        %v4212 = vsel %vm4211, %v4204, %v4208
        %v4213 = vand.u32 2147483647, %v4203
        %vm4214 = vcmp.eq.f32.partialorder %v4213, 8.507059e+37
        %v4215 = vand.u32 %v4203, 2147483648
        %v4216 = vor.u32 1.1754944e-38, %v4215
        %v4217 = vsel %vm4214, %v4216, %v4212
        %v4218 = vmul.f32 %v4193, %v4217
        %v4219 = vmin.f32 %v4218, 1.0
        %v4220 = vmax.f32 %v4219, -1.0
        %v4221 = vmul.f32 %v4003, %v4003
        %v4222 = vmin.f32 16.0, %v4221
        %v4223 = vmul.f32 %v4222, 2.1237322e-06
        %v4224 = vadd.f32 %v4223, 0.00028619796
        %v4225 = vmul.f32 %v4222, %v4224
        %v4226 = vadd.f32 %v4225, 0.0036580483
        %v4227 = vmul.f32 %v4222, %v4226
        %v4228 = vadd.f32 %v4227, 0.05243302
        %v4229 = vmul.f32 %v4222, %v4228
        %v4230 = vadd.f32 %v4229, 0.18741608
        %v4231 = vmul.f32 %v4222, %v4230
        %v4232 = vadd.f32 %v4231, 1.1283791
        %v4233 = vmul.f32 %v4003, %v4232
        %v4234 = vmul.f32 %v4222, 3.8918573e-05
        %v4235 = vadd.f32 %v4234, 0.001143296
        %v4236 = vmul.f32 %v4222, %v4235
        %v4237 = vadd.f32 %v4236, 0.014752088
        %v4238 = vmul.f32 %v4222, %v4237
        %v4239 = vadd.f32 %v4238, 0.112945676
        %v4240 = vmul.f32 %v4222, %v4239
        %v4241 = vadd.f32 %v4240, 0.4994258
        %v4242 = vmul.f32 %v4222, %v4241
        %v4243 = vadd.f32 %v4242, 1.0
        %v4244 = vrcp.pop %v4243
        %v4245 = vmul.f32 %v4243, %v4244
        %v4246 = vsub.f32 1.0, %v4245
        %v4247 = vmul.f32 %v4244, %v4246
        %v4248 = vadd.f32 %v4244, %v4247
        %vm4249 = vweird.f32 %v4243
        %vm4250 = vweird.f32 %v4244
        %vm4251 = vmor %vm4249, %vm4250
        %v4252 = vsel %vm4251, %v4244, %v4248
        %v4253 = vand.u32 2147483647, %v4243
        %vm4254 = vcmp.eq.f32.partialorder %v4253, 8.507059e+37
        %v4255 = vand.u32 %v4243, 2147483648
        %v4256 = vor.u32 1.1754944e-38, %v4255
        %v4257 = vsel %vm4254, %v4256, %v4252
        %v4258 = vmul.f32 %v4233, %v4257
        %v4259 = vmin.f32 %v4258, 1.0
        %v4260 = vmax.f32 %v4259, -1.0
        %v4261 = vmul.f32 %v4004, %v4004
        %v4262 = vmin.f32 16.0, %v4261
        %v4263 = vmul.f32 %v4262, 2.1237322e-06
        %v4264 = vadd.f32 %v4263, 0.00028619796
        %v4265 = vmul.f32 %v4262, %v4264
        %v4266 = vadd.f32 %v4265, 0.0036580483
        %v4267 = vmul.f32 %v4262, %v4266
        %v4268 = vadd.f32 %v4267, 0.05243302
        %v4269 = vmul.f32 %v4262, %v4268
        %v4270 = vadd.f32 %v4269, 0.18741608
        %v4271 = vmul.f32 %v4262, %v4270
        %v4272 = vadd.f32 %v4271, 1.1283791
        %v4273 = vmul.f32 %v4004, %v4272
        %v4274 = vmul.f32 %v4262, 3.8918573e-05
        %v4275 = vadd.f32 %v4274, 0.001143296
        %v4276 = vmul.f32 %v4262, %v4275
        %v4277 = vadd.f32 %v4276, 0.014752088
        %v4278 = vmul.f32 %v4262, %v4277
        %v4279 = vadd.f32 %v4278, 0.112945676
        %v4280 = vmul.f32 %v4262, %v4279
        %v4281 = vadd.f32 %v4280, 0.4994258
        %v4282 = vmul.f32 %v4262, %v4281
        %v4283 = vadd.f32 %v4282, 1.0
        %v4284 = vrcp.pop %v4283
        %v4285 = vmul.f32 %v4283, %v4284
        %v4286 = vsub.f32 1.0, %v4285
        %v4287 = vmul.f32 %v4284, %v4286
        %v4288 = vadd.f32 %v4284, %v4287
        %vm4289 = vweird.f32 %v4283
        %vm4290 = vweird.f32 %v4284
        %vm4291 = vmor %vm4289, %vm4290
        %v4292 = vsel %vm4291, %v4284, %v4288
        %v4293 = vand.u32 2147483647, %v4283
        %vm4294 = vcmp.eq.f32.partialorder %v4293, 8.507059e+37
        %v4295 = vand.u32 %v4283, 2147483648
        %v4296 = vor.u32 1.1754944e-38, %v4295
        %v4297 = vsel %vm4294, %v4296, %v4292
        %v4298 = vmul.f32 %v4273, %v4297
        %v4299 = vmin.f32 %v4298, 1.0
        %v4300 = vmax.f32 %v4299, -1.0
        %v4301 = vmul.f32 %v4005, %v4005
        %v4302 = vmin.f32 16.0, %v4301
        %v4303 = vmul.f32 %v4302, 2.1237322e-06
        %v4304 = vadd.f32 %v4303, 0.00028619796
        %v4305 = vmul.f32 %v4302, %v4304
        %v4306 = vadd.f32 %v4305, 0.0036580483
        %v4307 = vmul.f32 %v4302, %v4306
        %v4308 = vadd.f32 %v4307, 0.05243302
        %v4309 = vmul.f32 %v4302, %v4308
        %v4310 = vadd.f32 %v4309, 0.18741608
        %v4311 = vmul.f32 %v4302, %v4310
        %v4312 = vadd.f32 %v4311, 1.1283791
        %v4313 = vmul.f32 %v4005, %v4312
        %v4314 = vmul.f32 %v4302, 3.8918573e-05
        %v4315 = vadd.f32 %v4314, 0.001143296
        %v4316 = vmul.f32 %v4302, %v4315
        %v4317 = vadd.f32 %v4316, 0.014752088
        %v4318 = vmul.f32 %v4302, %v4317
        %v4319 = vadd.f32 %v4318, 0.112945676
        %v4320 = vmul.f32 %v4302, %v4319
        %v4321 = vadd.f32 %v4320, 0.4994258
        %v4322 = vmul.f32 %v4302, %v4321
        %v4323 = vadd.f32 %v4322, 1.0
        %v4324 = vrcp.pop %v4323
        %v4325 = vmul.f32 %v4323, %v4324
        %v4326 = vsub.f32 1.0, %v4325
        %v4327 = vmul.f32 %v4324, %v4326
        %v4328 = vadd.f32 %v4324, %v4327
        %vm4329 = vweird.f32 %v4323
        %vm4330 = vweird.f32 %v4324
        %vm4331 = vmor %vm4329, %vm4330
        %v4332 = vsel %vm4331, %v4324, %v4328
        %v4333 = vand.u32 2147483647, %v4323
        %vm4334 = vcmp.eq.f32.partialorder %v4333, 8.507059e+37
        %v4335 = vand.u32 %v4323, 2147483648
        %v4336 = vor.u32 1.1754944e-38, %v4335
        %v4337 = vsel %vm4334, %v4336, %v4332
        %v4338 = vmul.f32 %v4313, %v4337
        %v4339 = vmin.f32 %v4338, 1.0
        %v4340 = vmax.f32 %v4339, -1.0
        %v4341 = vmul.f32 %v4006, %v4006
        %v4342 = vmin.f32 16.0, %v4341
        %v4343 = vmul.f32 %v4342, 2.1237322e-06
        %v4344 = vadd.f32 %v4343, 0.00028619796
        %v4345 = vmul.f32 %v4342, %v4344
        %v4346 = vadd.f32 %v4345, 0.0036580483
        %v4347 = vmul.f32 %v4342, %v4346
        %v4348 = vadd.f32 %v4347, 0.05243302
        %v4349 = vmul.f32 %v4342, %v4348
        %v4350 = vadd.f32 %v4349, 0.18741608
        %v4351 = vmul.f32 %v4342, %v4350
        %v4352 = vadd.f32 %v4351, 1.1283791
        %v4353 = vmul.f32 %v4006, %v4352
        %v4354 = vmul.f32 %v4342, 3.8918573e-05
        %v4355 = vadd.f32 %v4354, 0.001143296
        %v4356 = vmul.f32 %v4342, %v4355
        %v4357 = vadd.f32 %v4356, 0.014752088
        %v4358 = vmul.f32 %v4342, %v4357
        %v4359 = vadd.f32 %v4358, 0.112945676
        %v4360 = vmul.f32 %v4342, %v4359
        %v4361 = vadd.f32 %v4360, 0.4994258
        %v4362 = vmul.f32 %v4342, %v4361
        %v4363 = vadd.f32 %v4362, 1.0
        %v4364 = vrcp.pop %v4363
        %v4365 = vmul.f32 %v4363, %v4364
        %v4366 = vsub.f32 1.0, %v4365
        %v4367 = vmul.f32 %v4364, %v4366
        %v4368 = vadd.f32 %v4364, %v4367
        %vm4369 = vweird.f32 %v4363
        %vm4370 = vweird.f32 %v4364
        %vm4371 = vmor %vm4369, %vm4370
        %v4372 = vsel %vm4371, %v4364, %v4368
        %v4373 = vand.u32 2147483647, %v4363
        %vm4374 = vcmp.eq.f32.partialorder %v4373, 8.507059e+37
        %v4375 = vand.u32 %v4363, 2147483648
        %v4376 = vor.u32 1.1754944e-38, %v4375
        %v4377 = vsel %vm4374, %v4376, %v4372
        %v4378 = vmul.f32 %v4353, %v4377
        %v4379 = vmin.f32 %v4378, 1.0
        %v4380 = vmax.f32 %v4379, -1.0
        %v4381 = vmul.f32 %v4007, %v4007
        %v4382 = vmin.f32 16.0, %v4381
        %v4383 = vmul.f32 %v4382, 2.1237322e-06
        %v4384 = vadd.f32 %v4383, 0.00028619796
        %v4385 = vmul.f32 %v4382, %v4384
        %v4386 = vadd.f32 %v4385, 0.0036580483
        %v4387 = vmul.f32 %v4382, %v4386
        %v4388 = vadd.f32 %v4387, 0.05243302
        %v4389 = vmul.f32 %v4382, %v4388
        %v4390 = vadd.f32 %v4389, 0.18741608
        %v4391 = vmul.f32 %v4382, %v4390
        %v4392 = vadd.f32 %v4391, 1.1283791
        %v4393 = vmul.f32 %v4007, %v4392
        %v4394 = vmul.f32 %v4382, 3.8918573e-05
        %v4395 = vadd.f32 %v4394, 0.001143296
        %v4396 = vmul.f32 %v4382, %v4395
        %v4397 = vadd.f32 %v4396, 0.014752088
        %v4398 = vmul.f32 %v4382, %v4397
        %v4399 = vadd.f32 %v4398, 0.112945676
        %v4400 = vmul.f32 %v4382, %v4399
        %v4401 = vadd.f32 %v4400, 0.4994258
        %v4402 = vmul.f32 %v4382, %v4401
        %v4403 = vadd.f32 %v4402, 1.0
        %v4404 = vrcp.pop %v4403
        %v4405 = vmul.f32 %v4403, %v4404
        %v4406 = vsub.f32 1.0, %v4405
        %v4407 = vmul.f32 %v4404, %v4406
        %v4408 = vadd.f32 %v4404, %v4407
        %vm4409 = vweird.f32 %v4403
        %vm4410 = vweird.f32 %v4404
        %vm4411 = vmor %vm4409, %vm4410
        %v4412 = vsel %vm4411, %v4404, %v4408
        %v4413 = vand.u32 2147483647, %v4403
        %vm4414 = vcmp.eq.f32.partialorder %v4413, 8.507059e+37
        %v4415 = vand.u32 %v4403, 2147483648
        %v4416 = vor.u32 1.1754944e-38, %v4415
        %v4417 = vsel %vm4414, %v4416, %v4412
        %v4418 = vmul.f32 %v4393, %v4417
        %v4419 = vmin.f32 %v4418, 1.0
        %v4420 = vmax.f32 %v4419, -1.0
        %v4421 = vmul.f32 %v4008, %v4008
        %v4422 = vmin.f32 16.0, %v4421
        %v4423 = vmul.f32 %v4422, 2.1237322e-06
        %v4424 = vadd.f32 %v4423, 0.00028619796
        %v4425 = vmul.f32 %v4422, %v4424
        %v4426 = vadd.f32 %v4425, 0.0036580483
        %v4427 = vmul.f32 %v4422, %v4426
        %v4428 = vadd.f32 %v4427, 0.05243302
        %v4429 = vmul.f32 %v4422, %v4428
        %v4430 = vadd.f32 %v4429, 0.18741608
        %v4431 = vmul.f32 %v4422, %v4430
        %v4432 = vadd.f32 %v4431, 1.1283791
        %v4433 = vmul.f32 %v4008, %v4432
        %v4434 = vmul.f32 %v4422, 3.8918573e-05
        %v4435 = vadd.f32 %v4434, 0.001143296
        %v4436 = vmul.f32 %v4422, %v4435
        %v4437 = vadd.f32 %v4436, 0.014752088
        %v4438 = vmul.f32 %v4422, %v4437
        %v4439 = vadd.f32 %v4438, 0.112945676
        %v4440 = vmul.f32 %v4422, %v4439
        %v4441 = vadd.f32 %v4440, 0.4994258
        %v4442 = vmul.f32 %v4422, %v4441
        %v4443 = vadd.f32 %v4442, 1.0
        %v4444 = vrcp.pop %v4443
        %v4445 = vmul.f32 %v4443, %v4444
        %v4446 = vsub.f32 1.0, %v4445
        %v4447 = vmul.f32 %v4444, %v4446
        %v4448 = vadd.f32 %v4444, %v4447
        %vm4449 = vweird.f32 %v4443
        %vm4450 = vweird.f32 %v4444
        %vm4451 = vmor %vm4449, %vm4450
        %v4452 = vsel %vm4451, %v4444, %v4448
        %v4453 = vand.u32 2147483647, %v4443
        %vm4454 = vcmp.eq.f32.partialorder %v4453, 8.507059e+37
        %v4455 = vand.u32 %v4443, 2147483648
        %v4456 = vor.u32 1.1754944e-38, %v4455
        %v4457 = vsel %vm4454, %v4456, %v4452
        %v4458 = vmul.f32 %v4433, %v4457
        %v4459 = vmin.f32 %v4458, 1.0
        %v4460 = vmax.f32 %v4459, -1.0
        %v4461 = vmul.f32 %v4009, %v4009
        %v4462 = vmin.f32 16.0, %v4461
        %v4463 = vmul.f32 %v4462, 2.1237322e-06
        %v4464 = vadd.f32 %v4463, 0.00028619796
        %v4465 = vmul.f32 %v4462, %v4464
        %v4466 = vadd.f32 %v4465, 0.0036580483
        %v4467 = vmul.f32 %v4462, %v4466
        %v4468 = vadd.f32 %v4467, 0.05243302
        %v4469 = vmul.f32 %v4462, %v4468
        %v4470 = vadd.f32 %v4469, 0.18741608
        %v4471 = vmul.f32 %v4462, %v4470
        %v4472 = vadd.f32 %v4471, 1.1283791
        %v4473 = vmul.f32 %v4009, %v4472
        %v4474 = vmul.f32 %v4462, 3.8918573e-05
        %v4475 = vadd.f32 %v4474, 0.001143296
        %v4476 = vmul.f32 %v4462, %v4475
        %v4477 = vadd.f32 %v4476, 0.014752088
        %v4478 = vmul.f32 %v4462, %v4477
        %v4479 = vadd.f32 %v4478, 0.112945676
        %v4480 = vmul.f32 %v4462, %v4479
        %v4481 = vadd.f32 %v4480, 0.4994258
        %v4482 = vmul.f32 %v4462, %v4481
        %v4483 = vadd.f32 %v4482, 1.0
        %v4484 = vrcp.pop %v4483
        %v4485 = vmul.f32 %v4483, %v4484
        %v4486 = vsub.f32 1.0, %v4485
        %v4487 = vmul.f32 %v4484, %v4486
        %v4488 = vadd.f32 %v4484, %v4487
        %vm4489 = vweird.f32 %v4483
        %vm4490 = vweird.f32 %v4484
        %vm4491 = vmor %vm4489, %vm4490
        %v4492 = vsel %vm4491, %v4484, %v4488
        %v4493 = vand.u32 2147483647, %v4483
        %vm4494 = vcmp.eq.f32.partialorder %v4493, 8.507059e+37
        %v4495 = vand.u32 %v4483, 2147483648
        %v4496 = vor.u32 1.1754944e-38, %v4495
        %v4497 = vsel %vm4494, %v4496, %v4492
        %v4498 = vmul.f32 %v4473, %v4497
        %v4499 = vmin.f32 %v4498, 1.0
        %v4500 = vmax.f32 %v4499, -1.0
        %v4501 = vmul.f32 %v4010, %v4010
        %v4502 = vmin.f32 16.0, %v4501
        %v4503 = vmul.f32 %v4502, 2.1237322e-06
        %v4504 = vadd.f32 %v4503, 0.00028619796
        %v4505 = vmul.f32 %v4502, %v4504
        %v4506 = vadd.f32 %v4505, 0.0036580483
        %v4507 = vmul.f32 %v4502, %v4506
        %v4508 = vadd.f32 %v4507, 0.05243302
        %v4509 = vmul.f32 %v4502, %v4508
        %v4510 = vadd.f32 %v4509, 0.18741608
        %v4511 = vmul.f32 %v4502, %v4510
        %v4512 = vadd.f32 %v4511, 1.1283791
        %v4513 = vmul.f32 %v4010, %v4512
        %v4514 = vmul.f32 %v4502, 3.8918573e-05
        %v4515 = vadd.f32 %v4514, 0.001143296
        %v4516 = vmul.f32 %v4502, %v4515
        %v4517 = vadd.f32 %v4516, 0.014752088
        %v4518 = vmul.f32 %v4502, %v4517
        %v4519 = vadd.f32 %v4518, 0.112945676
        %v4520 = vmul.f32 %v4502, %v4519
        %v4521 = vadd.f32 %v4520, 0.4994258
        %v4522 = vmul.f32 %v4502, %v4521
        %v4523 = vadd.f32 %v4522, 1.0
        %v4524 = vrcp.pop %v4523
        %v4525 = vmul.f32 %v4523, %v4524
        %v4526 = vsub.f32 1.0, %v4525
        %v4527 = vmul.f32 %v4524, %v4526
        %v4528 = vadd.f32 %v4524, %v4527
        %vm4529 = vweird.f32 %v4523
        %vm4530 = vweird.f32 %v4524
        %vm4531 = vmor %vm4529, %vm4530
        %v4532 = vsel %vm4531, %v4524, %v4528
        %v4533 = vand.u32 2147483647, %v4523
        %vm4534 = vcmp.eq.f32.partialorder %v4533, 8.507059e+37
        %v4535 = vand.u32 %v4523, 2147483648
        %v4536 = vor.u32 1.1754944e-38, %v4535
        %v4537 = vsel %vm4534, %v4536, %v4532
        %v4538 = vmul.f32 %v4513, %v4537
        %v4539 = vmin.f32 %v4538, 1.0
        %v4540 = vmax.f32 %v4539, -1.0
        %v4541 = vmul.f32 %v4011, %v4011
        %v4542 = vmin.f32 16.0, %v4541
        %v4543 = vmul.f32 %v4542, 2.1237322e-06
        %v4544 = vadd.f32 %v4543, 0.00028619796
        %v4545 = vmul.f32 %v4542, %v4544
        %v4546 = vadd.f32 %v4545, 0.0036580483
        %v4547 = vmul.f32 %v4542, %v4546
        %v4548 = vadd.f32 %v4547, 0.05243302
        %v4549 = vmul.f32 %v4542, %v4548
        %v4550 = vadd.f32 %v4549, 0.18741608
        %v4551 = vmul.f32 %v4542, %v4550
        %v4552 = vadd.f32 %v4551, 1.1283791
        %v4553 = vmul.f32 %v4011, %v4552
        %v4554 = vmul.f32 %v4542, 3.8918573e-05
        %v4555 = vadd.f32 %v4554, 0.001143296
        %v4556 = vmul.f32 %v4542, %v4555
        %v4557 = vadd.f32 %v4556, 0.014752088
        %v4558 = vmul.f32 %v4542, %v4557
        %v4559 = vadd.f32 %v4558, 0.112945676
        %v4560 = vmul.f32 %v4542, %v4559
        %v4561 = vadd.f32 %v4560, 0.4994258
        %v4562 = vmul.f32 %v4542, %v4561
        %v4563 = vadd.f32 %v4562, 1.0
        %v4564 = vrcp.pop %v4563
        %v4565 = vmul.f32 %v4563, %v4564
        %v4566 = vsub.f32 1.0, %v4565
        %v4567 = vmul.f32 %v4564, %v4566
        %v4568 = vadd.f32 %v4564, %v4567
        %vm4569 = vweird.f32 %v4563
        %vm4570 = vweird.f32 %v4564
        %vm4571 = vmor %vm4569, %vm4570
        %v4572 = vsel %vm4571, %v4564, %v4568
        %v4573 = vand.u32 2147483647, %v4563
        %vm4574 = vcmp.eq.f32.partialorder %v4573, 8.507059e+37
        %v4575 = vand.u32 %v4563, 2147483648
        %v4576 = vor.u32 1.1754944e-38, %v4575
        %v4577 = vsel %vm4574, %v4576, %v4572
        %v4578 = vmul.f32 %v4553, %v4577
        %v4579 = vmin.f32 %v4578, 1.0
        %v4580 = vmax.f32 %v4579, -1.0
        %v4581 = vmul.f32 %v4012, %v4012
        %v4582 = vmin.f32 16.0, %v4581
        %v4583 = vmul.f32 %v4582, 2.1237322e-06
        %v4584 = vadd.f32 %v4583, 0.00028619796
        %v4585 = vmul.f32 %v4582, %v4584
        %v4586 = vadd.f32 %v4585, 0.0036580483
        %v4587 = vmul.f32 %v4582, %v4586
        %v4588 = vadd.f32 %v4587, 0.05243302
        %v4589 = vmul.f32 %v4582, %v4588
        %v4590 = vadd.f32 %v4589, 0.18741608
        %v4591 = vmul.f32 %v4582, %v4590
        %v4592 = vadd.f32 %v4591, 1.1283791
        %v4593 = vmul.f32 %v4012, %v4592
        %v4594 = vmul.f32 %v4582, 3.8918573e-05
        %v4595 = vadd.f32 %v4594, 0.001143296
        %v4596 = vmul.f32 %v4582, %v4595
        %v4597 = vadd.f32 %v4596, 0.014752088
        %v4598 = vmul.f32 %v4582, %v4597
        %v4599 = vadd.f32 %v4598, 0.112945676
        %v4600 = vmul.f32 %v4582, %v4599
        %v4601 = vadd.f32 %v4600, 0.4994258
        %v4602 = vmul.f32 %v4582, %v4601
        %v4603 = vadd.f32 %v4602, 1.0
        %v4604 = vrcp.pop %v4603
        %v4605 = vmul.f32 %v4603, %v4604
        %v4606 = vsub.f32 1.0, %v4605
        %v4607 = vmul.f32 %v4604, %v4606
        %v4608 = vadd.f32 %v4604, %v4607
        %vm4609 = vweird.f32 %v4603
        %vm4610 = vweird.f32 %v4604
        %vm4611 = vmor %vm4609, %vm4610
        %v4612 = vsel %vm4611, %v4604, %v4608
        %v4613 = vand.u32 2147483647, %v4603
        %vm4614 = vcmp.eq.f32.partialorder %v4613, 8.507059e+37
        %v4615 = vand.u32 %v4603, 2147483648
        %v4616 = vor.u32 1.1754944e-38, %v4615
        %v4617 = vsel %vm4614, %v4616, %v4612
        %v4618 = vmul.f32 %v4593, %v4617
        %v4619 = vmin.f32 %v4618, 1.0
        %v4620 = vmax.f32 %v4619, -1.0
        %v4621 = vmul.f32 %v4013, %v4013
        %v4622 = vmin.f32 16.0, %v4621
        %v4623 = vmul.f32 %v4622, 2.1237322e-06
        %v4624 = vadd.f32 %v4623, 0.00028619796
        %v4625 = vmul.f32 %v4622, %v4624
        %v4626 = vadd.f32 %v4625, 0.0036580483
        %v4627 = vmul.f32 %v4622, %v4626
        %v4628 = vadd.f32 %v4627, 0.05243302
        %v4629 = vmul.f32 %v4622, %v4628
        %v4630 = vadd.f32 %v4629, 0.18741608
        %v4631 = vmul.f32 %v4622, %v4630
        %v4632 = vadd.f32 %v4631, 1.1283791
        %v4633 = vmul.f32 %v4013, %v4632
        %v4634 = vmul.f32 %v4622, 3.8918573e-05
        %v4635 = vadd.f32 %v4634, 0.001143296
        %v4636 = vmul.f32 %v4622, %v4635
        %v4637 = vadd.f32 %v4636, 0.014752088
        %v4638 = vmul.f32 %v4622, %v4637
        %v4639 = vadd.f32 %v4638, 0.112945676
        %v4640 = vmul.f32 %v4622, %v4639
        %v4641 = vadd.f32 %v4640, 0.4994258
        %v4642 = vmul.f32 %v4622, %v4641
        %v4643 = vadd.f32 %v4642, 1.0
        %v4644 = vrcp.pop %v4643
        %v4645 = vmul.f32 %v4643, %v4644
        %v4646 = vsub.f32 1.0, %v4645
        %v4647 = vmul.f32 %v4644, %v4646
        %v4648 = vadd.f32 %v4644, %v4647
        %vm4649 = vweird.f32 %v4643
        %vm4650 = vweird.f32 %v4644
        %vm4651 = vmor %vm4649, %vm4650
        %v4652 = vsel %vm4651, %v4644, %v4648
        %v4653 = vand.u32 2147483647, %v4643
        %vm4654 = vcmp.eq.f32.partialorder %v4653, 8.507059e+37
        %v4655 = vand.u32 %v4643, 2147483648
        %v4656 = vor.u32 1.1754944e-38, %v4655
        %v4657 = vsel %vm4654, %v4656, %v4652
        %v4658 = vmul.f32 %v4633, %v4657
        %v4659 = vmin.f32 %v4658, 1.0
        %v4660 = vmax.f32 %v4659, -1.0
        %v4661 = vmul.f32 %v4014, %v4014
        %v4662 = vmin.f32 16.0, %v4661
        %v4663 = vmul.f32 %v4662, 2.1237322e-06
        %v4664 = vadd.f32 %v4663, 0.00028619796
        %v4665 = vmul.f32 %v4662, %v4664
        %v4666 = vadd.f32 %v4665, 0.0036580483
        %v4667 = vmul.f32 %v4662, %v4666
        %v4668 = vadd.f32 %v4667, 0.05243302
        %v4669 = vmul.f32 %v4662, %v4668
        %v4670 = vadd.f32 %v4669, 0.18741608
        %v4671 = vmul.f32 %v4662, %v4670
        %v4672 = vadd.f32 %v4671, 1.1283791
        %v4673 = vmul.f32 %v4014, %v4672
        %v4674 = vmul.f32 %v4662, 3.8918573e-05
        %v4675 = vadd.f32 %v4674, 0.001143296
        %v4676 = vmul.f32 %v4662, %v4675
        %v4677 = vadd.f32 %v4676, 0.014752088
        %v4678 = vmul.f32 %v4662, %v4677
        %v4679 = vadd.f32 %v4678, 0.112945676
        %v4680 = vmul.f32 %v4662, %v4679
        %v4681 = vadd.f32 %v4680, 0.4994258
        %v4682 = vmul.f32 %v4662, %v4681
        %v4683 = vadd.f32 %v4682, 1.0
        %v4684 = vrcp.pop %v4683
        %v4685 = vmul.f32 %v4683, %v4684
        %v4686 = vsub.f32 1.0, %v4685
        %v4687 = vmul.f32 %v4684, %v4686
        %v4688 = vadd.f32 %v4684, %v4687
        %vm4689 = vweird.f32 %v4683
        %vm4690 = vweird.f32 %v4684
        %vm4691 = vmor %vm4689, %vm4690
        %v4692 = vsel %vm4691, %v4684, %v4688
        %v4693 = vand.u32 2147483647, %v4683
        %vm4694 = vcmp.eq.f32.partialorder %v4693, 8.507059e+37
        %v4695 = vand.u32 %v4683, 2147483648
        %v4696 = vor.u32 1.1754944e-38, %v4695
        %v4697 = vsel %vm4694, %v4696, %v4692
        %v4698 = vmul.f32 %v4673, %v4697
        %v4699 = vmin.f32 %v4698, 1.0
        %v4700 = vmax.f32 %v4699, -1.0
        %v4701 = vmul.f32 %v4015, %v4015
        %v4702 = vmin.f32 16.0, %v4701
        %v4703 = vmul.f32 %v4702, 2.1237322e-06
        %v4704 = vadd.f32 %v4703, 0.00028619796
        %v4705 = vmul.f32 %v4702, %v4704
        %v4706 = vadd.f32 %v4705, 0.0036580483
        %v4707 = vmul.f32 %v4702, %v4706
        %v4708 = vadd.f32 %v4707, 0.05243302
        %v4709 = vmul.f32 %v4702, %v4708
        %v4710 = vadd.f32 %v4709, 0.18741608
        %v4711 = vmul.f32 %v4702, %v4710
        %v4712 = vadd.f32 %v4711, 1.1283791
        %v4713 = vmul.f32 %v4015, %v4712
        %v4714 = vmul.f32 %v4702, 3.8918573e-05
        %v4715 = vadd.f32 %v4714, 0.001143296
        %v4716 = vmul.f32 %v4702, %v4715
        %v4717 = vadd.f32 %v4716, 0.014752088
        %v4718 = vmul.f32 %v4702, %v4717
        %v4719 = vadd.f32 %v4718, 0.112945676
        %v4720 = vmul.f32 %v4702, %v4719
        %v4721 = vadd.f32 %v4720, 0.4994258
        %v4722 = vmul.f32 %v4702, %v4721
        %v4723 = vadd.f32 %v4722, 1.0
        %v4724 = vrcp.pop %v4723
        %v4725 = vmul.f32 %v4723, %v4724
        %v4726 = vsub.f32 1.0, %v4725
        %v4727 = vmul.f32 %v4724, %v4726
        %v4728 = vadd.f32 %v4724, %v4727
        %vm4729 = vweird.f32 %v4723
        %vm4730 = vweird.f32 %v4724
        %vm4731 = vmor %vm4729, %vm4730
        %v4732 = vsel %vm4731, %v4724, %v4728
        %v4733 = vand.u32 2147483647, %v4723
        %vm4734 = vcmp.eq.f32.partialorder %v4733, 8.507059e+37
        %v4735 = vand.u32 %v4723, 2147483648
        %v4736 = vor.u32 1.1754944e-38, %v4735
        %v4737 = vsel %vm4734, %v4736, %v4732
        %v4738 = vmul.f32 %v4713, %v4737
        %v4739 = vmin.f32 %v4738, 1.0
        %v4740 = vmax.f32 %v4739, -1.0
        %v4741 = vmul.f32 %v4016, %v4016
        %v4742 = vmin.f32 16.0, %v4741
        %v4743 = vmul.f32 %v4742, 2.1237322e-06
        %v4744 = vadd.f32 %v4743, 0.00028619796
        %v4745 = vmul.f32 %v4742, %v4744
        %v4746 = vadd.f32 %v4745, 0.0036580483
        %v4747 = vmul.f32 %v4742, %v4746
        %v4748 = vadd.f32 %v4747, 0.05243302
        %v4749 = vmul.f32 %v4742, %v4748
        %v4750 = vadd.f32 %v4749, 0.18741608
        %v4751 = vmul.f32 %v4742, %v4750
        %v4752 = vadd.f32 %v4751, 1.1283791
        %v4753 = vmul.f32 %v4016, %v4752
        %v4754 = vmul.f32 %v4742, 3.8918573e-05
        %v4755 = vadd.f32 %v4754, 0.001143296
        %v4756 = vmul.f32 %v4742, %v4755
        %v4757 = vadd.f32 %v4756, 0.014752088
        %v4758 = vmul.f32 %v4742, %v4757
        %v4759 = vadd.f32 %v4758, 0.112945676
        %v4760 = vmul.f32 %v4742, %v4759
        %v4761 = vadd.f32 %v4760, 0.4994258
        %v4762 = vmul.f32 %v4742, %v4761
        %v4763 = vadd.f32 %v4762, 1.0
        %v4764 = vrcp.pop %v4763
        %v4765 = vmul.f32 %v4763, %v4764
        %v4766 = vsub.f32 1.0, %v4765
        %v4767 = vmul.f32 %v4764, %v4766
        %v4768 = vadd.f32 %v4764, %v4767
        %vm4769 = vweird.f32 %v4763
        %vm4770 = vweird.f32 %v4764
        %vm4771 = vmor %vm4769, %vm4770
        %v4772 = vsel %vm4771, %v4764, %v4768
        %v4773 = vand.u32 2147483647, %v4763
        %vm4774 = vcmp.eq.f32.partialorder %v4773, 8.507059e+37
        %v4775 = vand.u32 %v4763, 2147483648
        %v4776 = vor.u32 1.1754944e-38, %v4775
        %v4777 = vsel %vm4774, %v4776, %v4772
        %v4778 = vmul.f32 %v4753, %v4777
        %v4779 = vmin.f32 %v4778, 1.0
        %v4780 = vmax.f32 %v4779, -1.0
        %v4781 = vmul.f32 %v4017, %v4017
        %v4782 = vmin.f32 16.0, %v4781
        %v4783 = vmul.f32 %v4782, 2.1237322e-06
        %v4784 = vadd.f32 %v4783, 0.00028619796
        %v4785 = vmul.f32 %v4782, %v4784
        %v4786 = vadd.f32 %v4785, 0.0036580483
        %v4787 = vmul.f32 %v4782, %v4786
        %v4788 = vadd.f32 %v4787, 0.05243302
        %v4789 = vmul.f32 %v4782, %v4788
        %v4790 = vadd.f32 %v4789, 0.18741608
        %v4791 = vmul.f32 %v4782, %v4790
        %v4792 = vadd.f32 %v4791, 1.1283791
        %v4793 = vmul.f32 %v4017, %v4792
        %v4794 = vmul.f32 %v4782, 3.8918573e-05
        %v4795 = vadd.f32 %v4794, 0.001143296
        %v4796 = vmul.f32 %v4782, %v4795
        %v4797 = vadd.f32 %v4796, 0.014752088
        %v4798 = vmul.f32 %v4782, %v4797
        %v4799 = vadd.f32 %v4798, 0.112945676
        %v4800 = vmul.f32 %v4782, %v4799
        %v4801 = vadd.f32 %v4800, 0.4994258
        %v4802 = vmul.f32 %v4782, %v4801
        %v4803 = vadd.f32 %v4802, 1.0
        %v4804 = vrcp.pop %v4803
        %v4805 = vmul.f32 %v4803, %v4804
        %v4806 = vsub.f32 1.0, %v4805
        %v4807 = vmul.f32 %v4804, %v4806
        %v4808 = vadd.f32 %v4804, %v4807
        %vm4809 = vweird.f32 %v4803
        %vm4810 = vweird.f32 %v4804
        %vm4811 = vmor %vm4809, %vm4810
        %v4812 = vsel %vm4811, %v4804, %v4808
        %v4813 = vand.u32 2147483647, %v4803
        %vm4814 = vcmp.eq.f32.partialorder %v4813, 8.507059e+37
        %v4815 = vand.u32 %v4803, 2147483648
        %v4816 = vor.u32 1.1754944e-38, %v4815
        %v4817 = vsel %vm4814, %v4816, %v4812
        %v4818 = vmul.f32 %v4793, %v4817
        %v4819 = vmin.f32 %v4818, 1.0
        %v4820 = vmax.f32 %v4819, -1.0
        %v4821 = vmul.f32 %v4018, %v4018
        %v4822 = vmin.f32 16.0, %v4821
        %v4823 = vmul.f32 %v4822, 2.1237322e-06
        %v4824 = vadd.f32 %v4823, 0.00028619796
        %v4825 = vmul.f32 %v4822, %v4824
        %v4826 = vadd.f32 %v4825, 0.0036580483
        %v4827 = vmul.f32 %v4822, %v4826
        %v4828 = vadd.f32 %v4827, 0.05243302
        %v4829 = vmul.f32 %v4822, %v4828
        %v4830 = vadd.f32 %v4829, 0.18741608
        %v4831 = vmul.f32 %v4822, %v4830
        %v4832 = vadd.f32 %v4831, 1.1283791
        %v4833 = vmul.f32 %v4018, %v4832
        %v4834 = vmul.f32 %v4822, 3.8918573e-05
        %v4835 = vadd.f32 %v4834, 0.001143296
        %v4836 = vmul.f32 %v4822, %v4835
        %v4837 = vadd.f32 %v4836, 0.014752088
        %v4838 = vmul.f32 %v4822, %v4837
        %v4839 = vadd.f32 %v4838, 0.112945676
        %v4840 = vmul.f32 %v4822, %v4839
        %v4841 = vadd.f32 %v4840, 0.4994258
        %v4842 = vmul.f32 %v4822, %v4841
        %v4843 = vadd.f32 %v4842, 1.0
        %v4844 = vrcp.pop %v4843
        %v4845 = vmul.f32 %v4843, %v4844
        %v4846 = vsub.f32 1.0, %v4845
        %v4847 = vmul.f32 %v4844, %v4846
        %v4848 = vadd.f32 %v4844, %v4847
        %vm4849 = vweird.f32 %v4843
        %vm4850 = vweird.f32 %v4844
        %vm4851 = vmor %vm4849, %vm4850
        %v4852 = vsel %vm4851, %v4844, %v4848
        %v4853 = vand.u32 2147483647, %v4843
        %vm4854 = vcmp.eq.f32.partialorder %v4853, 8.507059e+37
        %v4855 = vand.u32 %v4843, 2147483648
        %v4856 = vor.u32 1.1754944e-38, %v4855
        %v4857 = vsel %vm4854, %v4856, %v4852
        %v4858 = vmul.f32 %v4833, %v4857
        %v4859 = vmin.f32 %v4858, 1.0
        %v4860 = vmax.f32 %v4859, -1.0
        %v4861 = vmul.f32 %v4019, %v4019
        %v4862 = vmin.f32 16.0, %v4861
        %v4863 = vmul.f32 %v4862, 2.1237322e-06
        %v4864 = vadd.f32 %v4863, 0.00028619796
        %v4865 = vmul.f32 %v4862, %v4864
        %v4866 = vadd.f32 %v4865, 0.0036580483
        %v4867 = vmul.f32 %v4862, %v4866
        %v4868 = vadd.f32 %v4867, 0.05243302
        %v4869 = vmul.f32 %v4862, %v4868
        %v4870 = vadd.f32 %v4869, 0.18741608
        %v4871 = vmul.f32 %v4862, %v4870
        %v4872 = vadd.f32 %v4871, 1.1283791
        %v4873 = vmul.f32 %v4019, %v4872
        %v4874 = vmul.f32 %v4862, 3.8918573e-05
        %v4875 = vadd.f32 %v4874, 0.001143296
        %v4876 = vmul.f32 %v4862, %v4875
        %v4877 = vadd.f32 %v4876, 0.014752088
        %v4878 = vmul.f32 %v4862, %v4877
        %v4879 = vadd.f32 %v4878, 0.112945676
        %v4880 = vmul.f32 %v4862, %v4879
        %v4881 = vadd.f32 %v4880, 0.4994258
        %v4882 = vmul.f32 %v4862, %v4881
        %v4883 = vadd.f32 %v4882, 1.0
        %v4884 = vrcp.pop %v4883
        %v4885 = vmul.f32 %v4883, %v4884
        %v4886 = vsub.f32 1.0, %v4885
        %v4887 = vmul.f32 %v4884, %v4886
        %v4888 = vadd.f32 %v4884, %v4887
        %vm4889 = vweird.f32 %v4883
        %vm4890 = vweird.f32 %v4884
        %vm4891 = vmor %vm4889, %vm4890
        %v4892 = vsel %vm4891, %v4884, %v4888
        %v4893 = vand.u32 2147483647, %v4883
        %vm4894 = vcmp.eq.f32.partialorder %v4893, 8.507059e+37
        %v4895 = vand.u32 %v4883, 2147483648
        %v4896 = vor.u32 1.1754944e-38, %v4895
        %v4897 = vsel %vm4894, %v4896, %v4892
        %v4898 = vmul.f32 %v4873, %v4897
        %v4899 = vmin.f32 %v4898, 1.0
        %v4900 = vmax.f32 %v4899, -1.0
        %v4901 = vmul.f32 %v4020, %v4020
        %v4902 = vmin.f32 16.0, %v4901
        %v4903 = vmul.f32 %v4902, 2.1237322e-06
        %v4904 = vadd.f32 %v4903, 0.00028619796
        %v4905 = vmul.f32 %v4902, %v4904
        %v4906 = vadd.f32 %v4905, 0.0036580483
        %v4907 = vmul.f32 %v4902, %v4906
        %v4908 = vadd.f32 %v4907, 0.05243302
        %v4909 = vmul.f32 %v4902, %v4908
        %v4910 = vadd.f32 %v4909, 0.18741608
        %v4911 = vmul.f32 %v4902, %v4910
        %v4912 = vadd.f32 %v4911, 1.1283791
        %v4913 = vmul.f32 %v4020, %v4912
        %v4914 = vmul.f32 %v4902, 3.8918573e-05
        %v4915 = vadd.f32 %v4914, 0.001143296
        %v4916 = vmul.f32 %v4902, %v4915
        %v4917 = vadd.f32 %v4916, 0.014752088
        %v4918 = vmul.f32 %v4902, %v4917
        %v4919 = vadd.f32 %v4918, 0.112945676
        %v4920 = vmul.f32 %v4902, %v4919
        %v4921 = vadd.f32 %v4920, 0.4994258
        %v4922 = vmul.f32 %v4902, %v4921
        %v4923 = vadd.f32 %v4922, 1.0
        %v4924 = vrcp.pop %v4923
        %v4925 = vmul.f32 %v4923, %v4924
        %v4926 = vsub.f32 1.0, %v4925
        %v4927 = vmul.f32 %v4924, %v4926
        %v4928 = vadd.f32 %v4924, %v4927
        %vm4929 = vweird.f32 %v4923
        %vm4930 = vweird.f32 %v4924
        %vm4931 = vmor %vm4929, %vm4930
        %v4932 = vsel %vm4931, %v4924, %v4928
        %v4933 = vand.u32 2147483647, %v4923
        %vm4934 = vcmp.eq.f32.partialorder %v4933, 8.507059e+37
        %v4935 = vand.u32 %v4923, 2147483648
        %v4936 = vor.u32 1.1754944e-38, %v4935
        %v4937 = vsel %vm4934, %v4936, %v4932
        %v4938 = vmul.f32 %v4913, %v4937
        %v4939 = vmin.f32 %v4938, 1.0
        %v4940 = vmax.f32 %v4939, -1.0
        %v4941 = vadd.f32 %v4060, 1.0
        %v4942 = vadd.f32 %v4100, 1.0
        %v4943 = vadd.f32 %v4140, 1.0
        %v4944 = vadd.f32 %v4180, 1.0
        %v4945 = vadd.f32 %v4220, 1.0
        %v4946 = vadd.f32 %v4260, 1.0
        %v4947 = vadd.f32 %v4300, 1.0
        %v4948 = vadd.f32 %v4340, 1.0
        %v4949 = vadd.f32 %v4380, 1.0
        %v4950 = vadd.f32 %v4420, 1.0
        %v4951 = vadd.f32 %v4460, 1.0
        %v4952 = vadd.f32 %v4500, 1.0
        %v4953 = vadd.f32 %v4540, 1.0
        %v4954 = vadd.f32 %v4580, 1.0
        %v4955 = vadd.f32 %v4620, 1.0
        %v4956 = vadd.f32 %v4660, 1.0
        %v4957 = vadd.f32 %v4700, 1.0
        %v4958 = vadd.f32 %v4740, 1.0
        %v4959 = vadd.f32 %v4780, 1.0
        %v4960 = vadd.f32 %v4820, 1.0
        %v4961 = vadd.f32 %v4860, 1.0
        %v4962 = vadd.f32 %v4900, 1.0
        %v4963 = vadd.f32 %v4940, 1.0
        %v4964 = vmul.f32 %v3975, %v4941
        %v4965 = vmul.f32 %v3976, %v4942
        %v4966 = vmul.f32 %v3977, %v4943
        %v4967 = vmul.f32 %v3978, %v4944
        %v4968 = vmul.f32 %v3979, %v4945
        %v4969 = vmul.f32 %v3980, %v4946
        %v4970 = vmul.f32 %v3981, %v4947
        %v4971 = vmul.f32 %v3982, %v4948
        %v4972 = vmul.f32 %v3983, %v4949
        %v4973 = vmul.f32 %v3984, %v4950
        %v4974 = vmul.f32 %v3985, %v4951
        %v4975 = vmul.f32 %v3986, %v4952
        %v4976 = vmul.f32 %v3987, %v4953
        %v4977 = vmul.f32 %v3988, %v4954
        %v4978 = vmul.f32 %v3989, %v4955
        %v4979 = vmul.f32 %v3990, %v4956
        %v4980 = vmul.f32 %v3991, %v4957
        %v4981 = vmul.f32 %v3992, %v4958
        %v4982 = vmul.f32 %v3993, %v4959
        %v4983 = vmul.f32 %v3994, %v4960
        %v4984 = vmul.f32 %v3995, %v4961
        %v4985 = vmul.f32 %v3996, %v4962
        %v4986 = vmul.f32 %v3997, %v4963
        %s4987 = scalar_lea.vmem %s3, 1104
        %v4988 = vld [vmem:[%s4987] sm:$0xff]
        %v4989 = vld [vmem:[%s4987 + $0x8] sm:$0xff]
        %v4990 = vld [vmem:[%s4987 + $0x10] sm:$0xff]
        %v4991 = vld [vmem:[%s4987 + $0x18] sm:$0xff]
        %v4992 = vld [vmem:[%s4987 + $0x20] sm:$0xff]
        %v4993 = vld [vmem:[%s4987 + $0x28] sm:$0xff]
        %v4994 = vld [vmem:[%s4987 + $0x30] sm:$0xff]
        %v4995 = vld [vmem:[%s4987 + $0x38] sm:$0xff]
        %v4996 = vld [vmem:[%s4987 + $0x40] sm:$0xff]
        %v4997 = vld [vmem:[%s4987 + $0x48] sm:$0xff]
        %v4998 = vld [vmem:[%s4987 + $0x50] sm:$0xff]
        %v4999 = vld [vmem:[%s4987 + $0x58] sm:$0xff]
        %v5000 = vld [vmem:[%s4987 + $0x60] sm:$0xff]
        %v5001 = vld [vmem:[%s4987 + $0x68] sm:$0xff]
        %v5002 = vld [vmem:[%s4987 + $0x70] sm:$0xff]
        %v5003 = vld [vmem:[%s4987 + $0x78] sm:$0xff]
        %v5004 = vld [vmem:[%s4987 + $0x80] sm:$0xff]
        %v5005 = vld [vmem:[%s4987 + $0x88] sm:$0xff]
        %v5006 = vld [vmem:[%s4987 + $0x90] sm:$0xff]
        %v5007 = vld [vmem:[%s4987 + $0x98] sm:$0xff]
        %v5008 = vld [vmem:[%s4987 + $0xa0] sm:$0xff]
        %v5009 = vld [vmem:[%s4987 + $0xa8] sm:$0xff]
        %v5010 = vld [vmem:[%s4987 + $0xb0] sm:$0xff]
        %v5011 = vld [vmem:[%s4987 + $0xb8] sm:$0xff]
        %v5012 = vld [vmem:[%s4987 + $0xc0] sm:$0xff]
        %v5013 = vld [vmem:[%s4987 + $0xc8] sm:$0xff]
        %v5014 = vld [vmem:[%s4987 + $0xd0] sm:$0xff]
        %v5015 = vld [vmem:[%s4987 + $0xd8] sm:$0xff]
        %v5016 = vld [vmem:[%s4987 + $0xe0] sm:$0xff]
        %v5017 = vld [vmem:[%s4987 + $0xe8] sm:$0xff]
        %v5018 = vld [vmem:[%s4987 + $0xf0] sm:$0xff]
        %v5019 = vld [vmem:[%s4987 + $0xf8] sm:$0xff]
        %v5020 = vld [vmem:[%s4987 + $0x100] sm:$0xff]
        %v5021 = vld [vmem:[%s4987 + $0x108] sm:$0xff]
        %v5022 = vld [vmem:[%s4987 + $0x110] sm:$0xff]
        %v5023 = vld [vmem:[%s4987 + $0x118] sm:$0xff]
        %v5024 = vld [vmem:[%s4987 + $0x120] sm:$0xff]
        %v5025 = vld [vmem:[%s4987 + $0x128] sm:$0xff]
        %v5026 = vld [vmem:[%s4987 + $0x130] sm:$0xff]
        %v5027 = vld [vmem:[%s4987 + $0x138] sm:$0xff]
        %v5028 = vld [vmem:[%s4987 + $0x140] sm:$0xff]
        %v5029 = vld [vmem:[%s4987 + $0x148] sm:$0xff]
        %v5030 = vld [vmem:[%s4987 + $0x150] sm:$0xff]
        %v5031 = vld [vmem:[%s4987 + $0x158] sm:$0xff]
        %v5032 = vld [vmem:[%s4987 + $0x160] sm:$0xf]
        %v5033 = vld [vmem:[%s4987 + $0x168] sm:$0xf]
        %s5034 = scalar_lea.vmem %s4, 552
        %v5035 = vld [vmem:[%s5034] sm:$0xff]
        %v5036 = vld [vmem:[%s5034 + $0x8] sm:$0xff]
        %v5037 = vld [vmem:[%s5034 + $0x10] sm:$0xff]
        %v5038 = vld [vmem:[%s5034 + $0x18] sm:$0xff]
        %v5039 = vld [vmem:[%s5034 + $0x20] sm:$0xff]
        %v5040 = vld [vmem:[%s5034 + $0x28] sm:$0xff]
        %v5041 = vld [vmem:[%s5034 + $0x30] sm:$0xff]
        %v5042 = vld [vmem:[%s5034 + $0x38] sm:$0xff]
        %v5043 = vld [vmem:[%s5034 + $0x40] sm:$0xff]
        %v5044 = vld [vmem:[%s5034 + $0x48] sm:$0xff]
        %v5045 = vld [vmem:[%s5034 + $0x50] sm:$0xff]
        %v5046 = vld [vmem:[%s5034 + $0x58] sm:$0xff]
        %v5047 = vld [vmem:[%s5034 + $0x60] sm:$0xff]
        %v5048 = vld [vmem:[%s5034 + $0x68] sm:$0xff]
        %v5049 = vld [vmem:[%s5034 + $0x70] sm:$0xff]
        %v5050 = vld [vmem:[%s5034 + $0x78] sm:$0xff]
        %v5051 = vld [vmem:[%s5034 + $0x80] sm:$0xff]
        %v5052 = vld [vmem:[%s5034 + $0x88] sm:$0xff]
        %v5053 = vld [vmem:[%s5034 + $0x90] sm:$0xff]
        %v5054 = vld [vmem:[%s5034 + $0x98] sm:$0xff]
        %v5055 = vld [vmem:[%s5034 + $0xa0] sm:$0xff]
        %v5056 = vld [vmem:[%s5034 + $0xa8] sm:$0xff]
        %v5057 = vld [vmem:[%s5034 + $0xb0] sm:$0xf]
        %5059 = vset.pattern.permute.xlu0 0
        %5060 = vperm.xlu0 %5059, %v5035
        %v5061 = vpop.permute.xlu0 %5060
        %5064 = vset.pattern.permute.xlu0 0
        %5065 = vperm.xlu0 %5064, %v5036
        %v5066 = vpop.permute.xlu0 %5065
        %5069 = vset.pattern.permute.xlu0 0
        %5070 = vperm.xlu0 %5069, %v5037
        %v5071 = vpop.permute.xlu0 %5070
        %5074 = vset.pattern.permute.xlu0 0
        %5075 = vperm.xlu0 %5074, %v5038
        %v5076 = vpop.permute.xlu0 %5075
        %5079 = vset.pattern.permute.xlu0 0
        %5080 = vperm.xlu0 %5079, %v5039
        %v5081 = vpop.permute.xlu0 %5080
        %5084 = vset.pattern.permute.xlu0 0
        %5085 = vperm.xlu0 %5084, %v5040
        %v5086 = vpop.permute.xlu0 %5085
        %5089 = vset.pattern.permute.xlu0 0
        %5090 = vperm.xlu0 %5089, %v5041
        %v5091 = vpop.permute.xlu0 %5090
        %5094 = vset.pattern.permute.xlu0 0
        %5095 = vperm.xlu0 %5094, %v5042
        %v5096 = vpop.permute.xlu0 %5095
        %5099 = vset.pattern.permute.xlu0 0
        %5100 = vperm.xlu0 %5099, %v5043
        %v5101 = vpop.permute.xlu0 %5100
        %5104 = vset.pattern.permute.xlu0 0
        %5105 = vperm.xlu0 %5104, %v5044
        %v5106 = vpop.permute.xlu0 %5105
        %5109 = vset.pattern.permute.xlu0 0
        %5110 = vperm.xlu0 %5109, %v5045
        %v5111 = vpop.permute.xlu0 %5110
        %5114 = vset.pattern.permute.xlu0 0
        %5115 = vperm.xlu0 %5114, %v5046
        %v5116 = vpop.permute.xlu0 %5115
        %5119 = vset.pattern.permute.xlu0 0
        %5120 = vperm.xlu0 %5119, %v5047
        %v5121 = vpop.permute.xlu0 %5120
        %5124 = vset.pattern.permute.xlu0 0
        %5125 = vperm.xlu0 %5124, %v5048
        %v5126 = vpop.permute.xlu0 %5125
        %5129 = vset.pattern.permute.xlu0 0
        %5130 = vperm.xlu0 %5129, %v5049
        %v5131 = vpop.permute.xlu0 %5130
        %5134 = vset.pattern.permute.xlu0 0
        %5135 = vperm.xlu0 %5134, %v5050
        %v5136 = vpop.permute.xlu0 %5135
        %5139 = vset.pattern.permute.xlu0 0
        %5140 = vperm.xlu0 %5139, %v5051
        %v5141 = vpop.permute.xlu0 %5140
        %5144 = vset.pattern.permute.xlu0 0
        %5145 = vperm.xlu0 %5144, %v5052
        %v5146 = vpop.permute.xlu0 %5145
        %5149 = vset.pattern.permute.xlu0 0
        %5150 = vperm.xlu0 %5149, %v5053
        %v5151 = vpop.permute.xlu0 %5150
        %5154 = vset.pattern.permute.xlu0 0
        %5155 = vperm.xlu0 %5154, %v5054
        %v5156 = vpop.permute.xlu0 %5155
        %5159 = vset.pattern.permute.xlu0 0
        %5160 = vperm.xlu0 %5159, %v5055
        %v5161 = vpop.permute.xlu0 %5160
        %5164 = vset.pattern.permute.xlu0 0
        %5165 = vperm.xlu0 %5164, %v5056
        %v5166 = vpop.permute.xlu0 %5165
        %5169 = vset.pattern.permute.xlu0 0
        %5170 = vperm.xlu0 %5169, %v5057
        %v5171 = vpop.permute.xlu0 %5170
        %v5174 = vsel %vm845, %v4989, 0
        %v5177 = vsel %vm845, %v4991, 0
        %v5180 = vsel %vm845, %v4993, 0
        %v5183 = vsel %vm845, %v4995, 0
        %v5186 = vsel %vm845, %v4997, 0
        %v5189 = vsel %vm845, %v4999, 0
        %v5192 = vsel %vm845, %v5001, 0
        %v5195 = vsel %vm845, %v5003, 0
        %v5198 = vsel %vm845, %v5005, 0
        %v5201 = vsel %vm845, %v5007, 0
        %v5204 = vsel %vm845, %v5009, 0
        %v5207 = vsel %vm845, %v5011, 0
        %v5210 = vsel %vm845, %v5013, 0
        %v5213 = vsel %vm845, %v5015, 0
        %v5216 = vsel %vm845, %v5017, 0
        %v5219 = vsel %vm845, %v5019, 0
        %v5222 = vsel %vm845, %v5021, 0
        %v5225 = vsel %vm845, %v5023, 0
        %v5228 = vsel %vm845, %v5025, 0
        %v5231 = vsel %vm845, %v5027, 0
        %v5234 = vsel %vm845, %v5029, 0
        %v5237 = vsel %vm845, %v5031, 0
        %v5240 = vsel %vm845, %v5033, 0
        %v5243 = vsel %vm915, %v4986, 0
        %5245 = vmatpush.msra.mxu0 %v4979
        %5246 = vmatpush.msra.mxu0 %v4978
        %5247 = vmatpush.msra.mxu0 %v4977
        %5248 = vmatpush.msra.mxu0 %v4976
        %5249 = vmatpush.msra.mxu0 %v4975
        %5250 = vmatpush.msra.mxu0 %v4974
        %5251 = vmatpush.msra.mxu0 %v4973
        %5252 = vmatpush.msra.mxu0 %v4972
        %5253 = vmatpush.msra.mxu0 %v4971
        %5254 = vmatpush.msra.mxu0 %v4970
        %5255 = vmatpush.msra.mxu0 %v4969
        %5256 = vmatpush.msra.mxu0 %v4968
        %5257 = vmatpush.msra.mxu0 %v4967
        %5258 = vmatpush.msra.mxu0 %v4966
        %5259 = vmatpush.msra.mxu0 %v4965
        %5260 = vmatpush.msra.mxu0 %v4964
        %5261 = vmatmul.f32.gmra.mxu0 %v4988
        %v5262 = vpop.f32.mrf.mxu0
        %v5263 = vadd.f32 %v5061, %v5262
        %5264 = vmatmul.f32.gmra.mxu0 %v4990
        %v5265 = vpop.f32.mrf.mxu0
        %v5266 = vadd.f32 %v5066, %v5265
        %5267 = vmatmul.f32.gmra.mxu0 %v4992
        %v5268 = vpop.f32.mrf.mxu0
        %v5269 = vadd.f32 %v5071, %v5268
        %5270 = vmatmul.f32.gmra.mxu0 %v4994
        %v5271 = vpop.f32.mrf.mxu0
        %v5272 = vadd.f32 %v5076, %v5271
        %5273 = vmatmul.f32.gmra.mxu0 %v4996
        %v5274 = vpop.f32.mrf.mxu0
        %v5275 = vadd.f32 %v5081, %v5274
        %5276 = vmatmul.f32.gmra.mxu0 %v4998
        %v5277 = vpop.f32.mrf.mxu0
        %v5278 = vadd.f32 %v5086, %v5277
        %5279 = vmatmul.f32.gmra.mxu0 %v5000
        %v5280 = vpop.f32.mrf.mxu0
        %v5281 = vadd.f32 %v5091, %v5280
        %5282 = vmatmul.f32.gmra.mxu0 %v5002
        %v5283 = vpop.f32.mrf.mxu0
        %v5284 = vadd.f32 %v5096, %v5283
        %5285 = vmatmul.f32.gmra.mxu0 %v5004
        %v5286 = vpop.f32.mrf.mxu0
        %v5287 = vadd.f32 %v5101, %v5286
        %5288 = vmatmul.f32.gmra.mxu0 %v5006
        %v5289 = vpop.f32.mrf.mxu0
        %v5290 = vadd.f32 %v5106, %v5289
        %5291 = vmatmul.f32.gmra.mxu0 %v5008
        %v5292 = vpop.f32.mrf.mxu0
        %v5293 = vadd.f32 %v5111, %v5292
        %5294 = vmatmul.f32.gmra.mxu0 %v5010
        %v5295 = vpop.f32.mrf.mxu0
        %v5296 = vadd.f32 %v5116, %v5295
        %5297 = vmatmul.f32.gmra.mxu0 %v5012
        %v5298 = vpop.f32.mrf.mxu0
        %v5299 = vadd.f32 %v5121, %v5298
        %5300 = vmatmul.f32.gmra.mxu0 %v5014
        %v5301 = vpop.f32.mrf.mxu0
        %v5302 = vadd.f32 %v5126, %v5301
        %5303 = vmatmul.f32.gmra.mxu0 %v5016
        %v5304 = vpop.f32.mrf.mxu0
        %v5305 = vadd.f32 %v5131, %v5304
        %5306 = vmatmul.f32.gmra.mxu0 %v5018
        %v5307 = vpop.f32.mrf.mxu0
        %v5308 = vadd.f32 %v5136, %v5307
        %5309 = vmatmul.f32.gmra.mxu0 %v5020
        %v5310 = vpop.f32.mrf.mxu0
        %v5311 = vadd.f32 %v5141, %v5310
        %5312 = vmatmul.f32.gmra.mxu0 %v5022
        %v5313 = vpop.f32.mrf.mxu0
        %v5314 = vadd.f32 %v5146, %v5313
        %5315 = vmatmul.f32.gmra.mxu0 %v5024
        %v5316 = vpop.f32.mrf.mxu0
        %v5317 = vadd.f32 %v5151, %v5316
        %5318 = vmatmul.f32.gmra.mxu0 %v5026
        %v5319 = vpop.f32.mrf.mxu0
        %v5320 = vadd.f32 %v5156, %v5319
        %5321 = vmatmul.f32.gmra.mxu0 %v5028
        %v5322 = vpop.f32.mrf.mxu0
        %v5323 = vadd.f32 %v5161, %v5322
        %5324 = vmatmul.f32.gmra.mxu0 %v5030
        %v5325 = vpop.f32.mrf.mxu0
        %v5326 = vadd.f32 %v5166, %v5325
        %5327 = vmatmul.f32.gmra.mxu0 %v5032
        %v5328 = vpop.f32.mrf.mxu0
        %v5329 = vadd.f32 %v5171, %v5328
        %5330 = vdwg.mxu0
        %5331 = vmatpush.msra.mxu0 0.0
        %5332 = vmatpush.msra.mxu0 0.0
        %5333 = vmatpush.msra.mxu0 0.0
        %5334 = vmatpush.msra.mxu0 0.0
        %5335 = vmatpush.msra.mxu0 0.0
        %5336 = vmatpush.msra.mxu0 0.0
        %5337 = vmatpush.msra.mxu0 0.0
        %5338 = vmatpush.msra.mxu0 0.0
        %5339 = vmatpush.msra.mxu0 0.0
        %5340 = vmatpush.msra.mxu0 %v5243
        %5341 = vmatpush.msra.mxu0 %v4985
        %5342 = vmatpush.msra.mxu0 %v4984
        %5343 = vmatpush.msra.mxu0 %v4983
        %5344 = vmatpush.msra.mxu0 %v4982
        %5345 = vmatpush.msra.mxu0 %v4981
        %5346 = vmatpush.msra.mxu0 %v4980
        %5347 = vmatmul.f32.gmra.mxu0 %v5174
        %v5348 = vpop.f32.mrf.mxu0
        %v5349 = vadd.f32 %v5263, %v5348
        %5350 = vmatmul.f32.gmra.mxu0 %v5177
        %v5351 = vpop.f32.mrf.mxu0
        %v5352 = vadd.f32 %v5266, %v5351
        %5353 = vmatmul.f32.gmra.mxu0 %v5180
        %v5354 = vpop.f32.mrf.mxu0
        %v5355 = vadd.f32 %v5269, %v5354
        %5356 = vmatmul.f32.gmra.mxu0 %v5183
        %v5357 = vpop.f32.mrf.mxu0
        %v5358 = vadd.f32 %v5272, %v5357
        %5359 = vmatmul.f32.gmra.mxu0 %v5186
        %v5360 = vpop.f32.mrf.mxu0
        %v5361 = vadd.f32 %v5275, %v5360
        %5362 = vmatmul.f32.gmra.mxu0 %v5189
        %v5363 = vpop.f32.mrf.mxu0
        %v5364 = vadd.f32 %v5278, %v5363
        %5365 = vmatmul.f32.gmra.mxu0 %v5192
        %v5366 = vpop.f32.mrf.mxu0
        %v5367 = vadd.f32 %v5281, %v5366
        %5368 = vmatmul.f32.gmra.mxu0 %v5195
        %v5369 = vpop.f32.mrf.mxu0
        %v5370 = vadd.f32 %v5284, %v5369
        %5371 = vmatmul.f32.gmra.mxu0 %v5198
        %v5372 = vpop.f32.mrf.mxu0
        %v5373 = vadd.f32 %v5287, %v5372
        %5374 = vmatmul.f32.gmra.mxu0 %v5201
        %v5375 = vpop.f32.mrf.mxu0
        %v5376 = vadd.f32 %v5290, %v5375
        %5377 = vmatmul.f32.gmra.mxu0 %v5204
        %v5378 = vpop.f32.mrf.mxu0
        %v5379 = vadd.f32 %v5293, %v5378
        %5380 = vmatmul.f32.gmra.mxu0 %v5207
        %v5381 = vpop.f32.mrf.mxu0
        %v5382 = vadd.f32 %v5296, %v5381
        %5383 = vmatmul.f32.gmra.mxu0 %v5210
        %v5384 = vpop.f32.mrf.mxu0
        %v5385 = vadd.f32 %v5299, %v5384
        %5386 = vmatmul.f32.gmra.mxu0 %v5213
        %v5387 = vpop.f32.mrf.mxu0
        %v5388 = vadd.f32 %v5302, %v5387
        %5389 = vmatmul.f32.gmra.mxu0 %v5216
        %v5390 = vpop.f32.mrf.mxu0
        %v5391 = vadd.f32 %v5305, %v5390
        %5392 = vmatmul.f32.gmra.mxu0 %v5219
        %v5393 = vpop.f32.mrf.mxu0
        %v5394 = vadd.f32 %v5308, %v5393
        %5395 = vmatmul.f32.gmra.mxu0 %v5222
        %v5396 = vpop.f32.mrf.mxu0
        %v5397 = vadd.f32 %v5311, %v5396
        %5398 = vmatmul.f32.gmra.mxu0 %v5225
        %v5399 = vpop.f32.mrf.mxu0
        %v5400 = vadd.f32 %v5314, %v5399
        %5401 = vmatmul.f32.gmra.mxu0 %v5228
        %v5402 = vpop.f32.mrf.mxu0
        %v5403 = vadd.f32 %v5317, %v5402
        %5404 = vmatmul.f32.gmra.mxu0 %v5231
        %v5405 = vpop.f32.mrf.mxu0
        %v5406 = vadd.f32 %v5320, %v5405
        %5407 = vmatmul.f32.gmra.mxu0 %v5234
        %v5408 = vpop.f32.mrf.mxu0
        %v5409 = vadd.f32 %v5323, %v5408
        %5410 = vmatmul.f32.gmra.mxu0 %v5237
        %v5411 = vpop.f32.mrf.mxu0
        %v5412 = vadd.f32 %v5326, %v5411
        %5413 = vmatmul.f32.gmra.mxu0 %v5240
        %v5414 = vpop.f32.mrf.mxu0
        %v5415 = vadd.f32 %v5329, %v5414
        %5416 = vdwg.mxu0
        %v5417 = vmul.f32 %v5349, 0.5
        %v5418 = vmul.f32 %v5352, 0.5
        %v5419 = vmul.f32 %v5355, 0.5
        %v5420 = vmul.f32 %v5358, 0.5
        %v5421 = vmul.f32 %v5361, 0.5
        %v5422 = vmul.f32 %v5364, 0.5
        %v5423 = vmul.f32 %v5367, 0.5
        %v5424 = vmul.f32 %v5370, 0.5
        %v5425 = vmul.f32 %v5373, 0.5
        %v5426 = vmul.f32 %v5376, 0.5
        %v5427 = vmul.f32 %v5379, 0.5
        %v5428 = vmul.f32 %v5382, 0.5
        %v5429 = vmul.f32 %v5385, 0.5
        %v5430 = vmul.f32 %v5388, 0.5
        %v5431 = vmul.f32 %v5391, 0.5
        %v5432 = vmul.f32 %v5394, 0.5
        %v5433 = vmul.f32 %v5397, 0.5
        %v5434 = vmul.f32 %v5400, 0.5
        %v5435 = vmul.f32 %v5403, 0.5
        %v5436 = vmul.f32 %v5406, 0.5
        %v5437 = vmul.f32 %v5409, 0.5
        %v5438 = vmul.f32 %v5412, 0.5
        %v5439 = vmul.f32 %v5415, 0.5
        %v5440 = vmul.f32 %v5349, 0.70710677
        %v5441 = vmul.f32 %v5352, 0.70710677
        %v5442 = vmul.f32 %v5355, 0.70710677
        %v5443 = vmul.f32 %v5358, 0.70710677
        %v5444 = vmul.f32 %v5361, 0.70710677
        %v5445 = vmul.f32 %v5364, 0.70710677
        %v5446 = vmul.f32 %v5367, 0.70710677
        %v5447 = vmul.f32 %v5370, 0.70710677
        %v5448 = vmul.f32 %v5373, 0.70710677
        %v5449 = vmul.f32 %v5376, 0.70710677
        %v5450 = vmul.f32 %v5379, 0.70710677
        %v5451 = vmul.f32 %v5382, 0.70710677
        %v5452 = vmul.f32 %v5385, 0.70710677
        %v5453 = vmul.f32 %v5388, 0.70710677
        %v5454 = vmul.f32 %v5391, 0.70710677
        %v5455 = vmul.f32 %v5394, 0.70710677
        %v5456 = vmul.f32 %v5397, 0.70710677
        %v5457 = vmul.f32 %v5400, 0.70710677
        %v5458 = vmul.f32 %v5403, 0.70710677
        %v5459 = vmul.f32 %v5406, 0.70710677
        %v5460 = vmul.f32 %v5409, 0.70710677
        %v5461 = vmul.f32 %v5412, 0.70710677
        %v5462 = vmul.f32 %v5415, 0.70710677
        %v5463 = vmul.f32 %v5440, %v5440
        %v5464 = vmin.f32 16.0, %v5463
        %v5465 = vmul.f32 %v5464, 2.1237322e-06
        %v5466 = vadd.f32 %v5465, 0.00028619796
        %v5467 = vmul.f32 %v5464, %v5466
        %v5468 = vadd.f32 %v5467, 0.0036580483
        %v5469 = vmul.f32 %v5464, %v5468
        %v5470 = vadd.f32 %v5469, 0.05243302
        %v5471 = vmul.f32 %v5464, %v5470
        %v5472 = vadd.f32 %v5471, 0.18741608
        %v5473 = vmul.f32 %v5464, %v5472
        %v5474 = vadd.f32 %v5473, 1.1283791
        %v5475 = vmul.f32 %v5440, %v5474
        %v5476 = vmul.f32 %v5464, 3.8918573e-05
        %v5477 = vadd.f32 %v5476, 0.001143296
        %v5478 = vmul.f32 %v5464, %v5477
        %v5479 = vadd.f32 %v5478, 0.014752088
        %v5480 = vmul.f32 %v5464, %v5479
        %v5481 = vadd.f32 %v5480, 0.112945676
        %v5482 = vmul.f32 %v5464, %v5481
        %v5483 = vadd.f32 %v5482, 0.4994258
        %v5484 = vmul.f32 %v5464, %v5483
        %v5485 = vadd.f32 %v5484, 1.0
        %v5486 = vrcp.pop %v5485
        %v5487 = vmul.f32 %v5485, %v5486
        %v5488 = vsub.f32 1.0, %v5487
        %v5489 = vmul.f32 %v5486, %v5488
        %v5490 = vadd.f32 %v5486, %v5489
        %vm5491 = vweird.f32 %v5485
        %vm5492 = vweird.f32 %v5486
        %vm5493 = vmor %vm5491, %vm5492
        %v5494 = vsel %vm5493, %v5486, %v5490
        %v5495 = vand.u32 2147483647, %v5485
        %vm5496 = vcmp.eq.f32.partialorder %v5495, 8.507059e+37
        %v5497 = vand.u32 %v5485, 2147483648
        %v5498 = vor.u32 1.1754944e-38, %v5497
        %v5499 = vsel %vm5496, %v5498, %v5494
        %v5500 = vmul.f32 %v5475, %v5499
        %v5501 = vmin.f32 %v5500, 1.0
        %v5502 = vmax.f32 %v5501, -1.0
        %v5503 = vmul.f32 %v5441, %v5441
        %v5504 = vmin.f32 16.0, %v5503
        %v5505 = vmul.f32 %v5504, 2.1237322e-06
        %v5506 = vadd.f32 %v5505, 0.00028619796
        %v5507 = vmul.f32 %v5504, %v5506
        %v5508 = vadd.f32 %v5507, 0.0036580483
        %v5509 = vmul.f32 %v5504, %v5508
        %v5510 = vadd.f32 %v5509, 0.05243302
        %v5511 = vmul.f32 %v5504, %v5510
        %v5512 = vadd.f32 %v5511, 0.18741608
        %v5513 = vmul.f32 %v5504, %v5512
        %v5514 = vadd.f32 %v5513, 1.1283791
        %v5515 = vmul.f32 %v5441, %v5514
        %v5516 = vmul.f32 %v5504, 3.8918573e-05
        %v5517 = vadd.f32 %v5516, 0.001143296
        %v5518 = vmul.f32 %v5504, %v5517
        %v5519 = vadd.f32 %v5518, 0.014752088
        %v5520 = vmul.f32 %v5504, %v5519
        %v5521 = vadd.f32 %v5520, 0.112945676
        %v5522 = vmul.f32 %v5504, %v5521
        %v5523 = vadd.f32 %v5522, 0.4994258
        %v5524 = vmul.f32 %v5504, %v5523
        %v5525 = vadd.f32 %v5524, 1.0
        %v5526 = vrcp.pop %v5525
        %v5527 = vmul.f32 %v5525, %v5526
        %v5528 = vsub.f32 1.0, %v5527
        %v5529 = vmul.f32 %v5526, %v5528
        %v5530 = vadd.f32 %v5526, %v5529
        %vm5531 = vweird.f32 %v5525
        %vm5532 = vweird.f32 %v5526
        %vm5533 = vmor %vm5531, %vm5532
        %v5534 = vsel %vm5533, %v5526, %v5530
        %v5535 = vand.u32 2147483647, %v5525
        %vm5536 = vcmp.eq.f32.partialorder %v5535, 8.507059e+37
        %v5537 = vand.u32 %v5525, 2147483648
        %v5538 = vor.u32 1.1754944e-38, %v5537
        %v5539 = vsel %vm5536, %v5538, %v5534
        %v5540 = vmul.f32 %v5515, %v5539
        %v5541 = vmin.f32 %v5540, 1.0
        %v5542 = vmax.f32 %v5541, -1.0
        %v5543 = vmul.f32 %v5442, %v5442
        %v5544 = vmin.f32 16.0, %v5543
        %v5545 = vmul.f32 %v5544, 2.1237322e-06
        %v5546 = vadd.f32 %v5545, 0.00028619796
        %v5547 = vmul.f32 %v5544, %v5546
        %v5548 = vadd.f32 %v5547, 0.0036580483
        %v5549 = vmul.f32 %v5544, %v5548
        %v5550 = vadd.f32 %v5549, 0.05243302
        %v5551 = vmul.f32 %v5544, %v5550
        %v5552 = vadd.f32 %v5551, 0.18741608
        %v5553 = vmul.f32 %v5544, %v5552
        %v5554 = vadd.f32 %v5553, 1.1283791
        %v5555 = vmul.f32 %v5442, %v5554
        %v5556 = vmul.f32 %v5544, 3.8918573e-05
        %v5557 = vadd.f32 %v5556, 0.001143296
        %v5558 = vmul.f32 %v5544, %v5557
        %v5559 = vadd.f32 %v5558, 0.014752088
        %v5560 = vmul.f32 %v5544, %v5559
        %v5561 = vadd.f32 %v5560, 0.112945676
        %v5562 = vmul.f32 %v5544, %v5561
        %v5563 = vadd.f32 %v5562, 0.4994258
        %v5564 = vmul.f32 %v5544, %v5563
        %v5565 = vadd.f32 %v5564, 1.0
        %v5566 = vrcp.pop %v5565
        %v5567 = vmul.f32 %v5565, %v5566
        %v5568 = vsub.f32 1.0, %v5567
        %v5569 = vmul.f32 %v5566, %v5568
        %v5570 = vadd.f32 %v5566, %v5569
        %vm5571 = vweird.f32 %v5565
        %vm5572 = vweird.f32 %v5566
        %vm5573 = vmor %vm5571, %vm5572
        %v5574 = vsel %vm5573, %v5566, %v5570
        %v5575 = vand.u32 2147483647, %v5565
        %vm5576 = vcmp.eq.f32.partialorder %v5575, 8.507059e+37
        %v5577 = vand.u32 %v5565, 2147483648
        %v5578 = vor.u32 1.1754944e-38, %v5577
        %v5579 = vsel %vm5576, %v5578, %v5574
        %v5580 = vmul.f32 %v5555, %v5579
        %v5581 = vmin.f32 %v5580, 1.0
        %v5582 = vmax.f32 %v5581, -1.0
        %v5583 = vmul.f32 %v5443, %v5443
        %v5584 = vmin.f32 16.0, %v5583
        %v5585 = vmul.f32 %v5584, 2.1237322e-06
        %v5586 = vadd.f32 %v5585, 0.00028619796
        %v5587 = vmul.f32 %v5584, %v5586
        %v5588 = vadd.f32 %v5587, 0.0036580483
        %v5589 = vmul.f32 %v5584, %v5588
        %v5590 = vadd.f32 %v5589, 0.05243302
        %v5591 = vmul.f32 %v5584, %v5590
        %v5592 = vadd.f32 %v5591, 0.18741608
        %v5593 = vmul.f32 %v5584, %v5592
        %v5594 = vadd.f32 %v5593, 1.1283791
        %v5595 = vmul.f32 %v5443, %v5594
        %v5596 = vmul.f32 %v5584, 3.8918573e-05
        %v5597 = vadd.f32 %v5596, 0.001143296
        %v5598 = vmul.f32 %v5584, %v5597
        %v5599 = vadd.f32 %v5598, 0.014752088
        %v5600 = vmul.f32 %v5584, %v5599
        %v5601 = vadd.f32 %v5600, 0.112945676
        %v5602 = vmul.f32 %v5584, %v5601
        %v5603 = vadd.f32 %v5602, 0.4994258
        %v5604 = vmul.f32 %v5584, %v5603
        %v5605 = vadd.f32 %v5604, 1.0
        %v5606 = vrcp.pop %v5605
        %v5607 = vmul.f32 %v5605, %v5606
        %v5608 = vsub.f32 1.0, %v5607
        %v5609 = vmul.f32 %v5606, %v5608
        %v5610 = vadd.f32 %v5606, %v5609
        %vm5611 = vweird.f32 %v5605
        %vm5612 = vweird.f32 %v5606
        %vm5613 = vmor %vm5611, %vm5612
        %v5614 = vsel %vm5613, %v5606, %v5610
        %v5615 = vand.u32 2147483647, %v5605
        %vm5616 = vcmp.eq.f32.partialorder %v5615, 8.507059e+37
        %v5617 = vand.u32 %v5605, 2147483648
        %v5618 = vor.u32 1.1754944e-38, %v5617
        %v5619 = vsel %vm5616, %v5618, %v5614
        %v5620 = vmul.f32 %v5595, %v5619
        %v5621 = vmin.f32 %v5620, 1.0
        %v5622 = vmax.f32 %v5621, -1.0
        %v5623 = vmul.f32 %v5444, %v5444
        %v5624 = vmin.f32 16.0, %v5623
        %v5625 = vmul.f32 %v5624, 2.1237322e-06
        %v5626 = vadd.f32 %v5625, 0.00028619796
        %v5627 = vmul.f32 %v5624, %v5626
        %v5628 = vadd.f32 %v5627, 0.0036580483
        %v5629 = vmul.f32 %v5624, %v5628
        %v5630 = vadd.f32 %v5629, 0.05243302
        %v5631 = vmul.f32 %v5624, %v5630
        %v5632 = vadd.f32 %v5631, 0.18741608
        %v5633 = vmul.f32 %v5624, %v5632
        %v5634 = vadd.f32 %v5633, 1.1283791
        %v5635 = vmul.f32 %v5444, %v5634
        %v5636 = vmul.f32 %v5624, 3.8918573e-05
        %v5637 = vadd.f32 %v5636, 0.001143296
        %v5638 = vmul.f32 %v5624, %v5637
        %v5639 = vadd.f32 %v5638, 0.014752088
        %v5640 = vmul.f32 %v5624, %v5639
        %v5641 = vadd.f32 %v5640, 0.112945676
        %v5642 = vmul.f32 %v5624, %v5641
        %v5643 = vadd.f32 %v5642, 0.4994258
        %v5644 = vmul.f32 %v5624, %v5643
        %v5645 = vadd.f32 %v5644, 1.0
        %v5646 = vrcp.pop %v5645
        %v5647 = vmul.f32 %v5645, %v5646
        %v5648 = vsub.f32 1.0, %v5647
        %v5649 = vmul.f32 %v5646, %v5648
        %v5650 = vadd.f32 %v5646, %v5649
        %vm5651 = vweird.f32 %v5645
        %vm5652 = vweird.f32 %v5646
        %vm5653 = vmor %vm5651, %vm5652
        %v5654 = vsel %vm5653, %v5646, %v5650
        %v5655 = vand.u32 2147483647, %v5645
        %vm5656 = vcmp.eq.f32.partialorder %v5655, 8.507059e+37
        %v5657 = vand.u32 %v5645, 2147483648
        %v5658 = vor.u32 1.1754944e-38, %v5657
        %v5659 = vsel %vm5656, %v5658, %v5654
        %v5660 = vmul.f32 %v5635, %v5659
        %v5661 = vmin.f32 %v5660, 1.0
        %v5662 = vmax.f32 %v5661, -1.0
        %v5663 = vmul.f32 %v5445, %v5445
        %v5664 = vmin.f32 16.0, %v5663
        %v5665 = vmul.f32 %v5664, 2.1237322e-06
        %v5666 = vadd.f32 %v5665, 0.00028619796
        %v5667 = vmul.f32 %v5664, %v5666
        %v5668 = vadd.f32 %v5667, 0.0036580483
        %v5669 = vmul.f32 %v5664, %v5668
        %v5670 = vadd.f32 %v5669, 0.05243302
        %v5671 = vmul.f32 %v5664, %v5670
        %v5672 = vadd.f32 %v5671, 0.18741608
        %v5673 = vmul.f32 %v5664, %v5672
        %v5674 = vadd.f32 %v5673, 1.1283791
        %v5675 = vmul.f32 %v5445, %v5674
        %v5676 = vmul.f32 %v5664, 3.8918573e-05
        %v5677 = vadd.f32 %v5676, 0.001143296
        %v5678 = vmul.f32 %v5664, %v5677
        %v5679 = vadd.f32 %v5678, 0.014752088
        %v5680 = vmul.f32 %v5664, %v5679
        %v5681 = vadd.f32 %v5680, 0.112945676
        %v5682 = vmul.f32 %v5664, %v5681
        %v5683 = vadd.f32 %v5682, 0.4994258
        %v5684 = vmul.f32 %v5664, %v5683
        %v5685 = vadd.f32 %v5684, 1.0
        %v5686 = vrcp.pop %v5685
        %v5687 = vmul.f32 %v5685, %v5686
        %v5688 = vsub.f32 1.0, %v5687
        %v5689 = vmul.f32 %v5686, %v5688
        %v5690 = vadd.f32 %v5686, %v5689
        %vm5691 = vweird.f32 %v5685
        %vm5692 = vweird.f32 %v5686
        %vm5693 = vmor %vm5691, %vm5692
        %v5694 = vsel %vm5693, %v5686, %v5690
        %v5695 = vand.u32 2147483647, %v5685
        %vm5696 = vcmp.eq.f32.partialorder %v5695, 8.507059e+37
        %v5697 = vand.u32 %v5685, 2147483648
        %v5698 = vor.u32 1.1754944e-38, %v5697
        %v5699 = vsel %vm5696, %v5698, %v5694
        %v5700 = vmul.f32 %v5675, %v5699
        %v5701 = vmin.f32 %v5700, 1.0
        %v5702 = vmax.f32 %v5701, -1.0
        %v5703 = vmul.f32 %v5446, %v5446
        %v5704 = vmin.f32 16.0, %v5703
        %v5705 = vmul.f32 %v5704, 2.1237322e-06
        %v5706 = vadd.f32 %v5705, 0.00028619796
        %v5707 = vmul.f32 %v5704, %v5706
        %v5708 = vadd.f32 %v5707, 0.0036580483
        %v5709 = vmul.f32 %v5704, %v5708
        %v5710 = vadd.f32 %v5709, 0.05243302
        %v5711 = vmul.f32 %v5704, %v5710
        %v5712 = vadd.f32 %v5711, 0.18741608
        %v5713 = vmul.f32 %v5704, %v5712
        %v5714 = vadd.f32 %v5713, 1.1283791
        %v5715 = vmul.f32 %v5446, %v5714
        %v5716 = vmul.f32 %v5704, 3.8918573e-05
        %v5717 = vadd.f32 %v5716, 0.001143296
        %v5718 = vmul.f32 %v5704, %v5717
        %v5719 = vadd.f32 %v5718, 0.014752088
        %v5720 = vmul.f32 %v5704, %v5719
        %v5721 = vadd.f32 %v5720, 0.112945676
        %v5722 = vmul.f32 %v5704, %v5721
        %v5723 = vadd.f32 %v5722, 0.4994258
        %v5724 = vmul.f32 %v5704, %v5723
        %v5725 = vadd.f32 %v5724, 1.0
        %v5726 = vrcp.pop %v5725
        %v5727 = vmul.f32 %v5725, %v5726
        %v5728 = vsub.f32 1.0, %v5727
        %v5729 = vmul.f32 %v5726, %v5728
        %v5730 = vadd.f32 %v5726, %v5729
        %vm5731 = vweird.f32 %v5725
        %vm5732 = vweird.f32 %v5726
        %vm5733 = vmor %vm5731, %vm5732
        %v5734 = vsel %vm5733, %v5726, %v5730
        %v5735 = vand.u32 2147483647, %v5725
        %vm5736 = vcmp.eq.f32.partialorder %v5735, 8.507059e+37
        %v5737 = vand.u32 %v5725, 2147483648
        %v5738 = vor.u32 1.1754944e-38, %v5737
        %v5739 = vsel %vm5736, %v5738, %v5734
        %v5740 = vmul.f32 %v5715, %v5739
        %v5741 = vmin.f32 %v5740, 1.0
        %v5742 = vmax.f32 %v5741, -1.0
        %v5743 = vmul.f32 %v5447, %v5447
        %v5744 = vmin.f32 16.0, %v5743
        %v5745 = vmul.f32 %v5744, 2.1237322e-06
        %v5746 = vadd.f32 %v5745, 0.00028619796
        %v5747 = vmul.f32 %v5744, %v5746
        %v5748 = vadd.f32 %v5747, 0.0036580483
        %v5749 = vmul.f32 %v5744, %v5748
        %v5750 = vadd.f32 %v5749, 0.05243302
        %v5751 = vmul.f32 %v5744, %v5750
        %v5752 = vadd.f32 %v5751, 0.18741608
        %v5753 = vmul.f32 %v5744, %v5752
        %v5754 = vadd.f32 %v5753, 1.1283791
        %v5755 = vmul.f32 %v5447, %v5754
        %v5756 = vmul.f32 %v5744, 3.8918573e-05
        %v5757 = vadd.f32 %v5756, 0.001143296
        %v5758 = vmul.f32 %v5744, %v5757
        %v5759 = vadd.f32 %v5758, 0.014752088
        %v5760 = vmul.f32 %v5744, %v5759
        %v5761 = vadd.f32 %v5760, 0.112945676
        %v5762 = vmul.f32 %v5744, %v5761
        %v5763 = vadd.f32 %v5762, 0.4994258
        %v5764 = vmul.f32 %v5744, %v5763
        %v5765 = vadd.f32 %v5764, 1.0
        %v5766 = vrcp.pop %v5765
        %v5767 = vmul.f32 %v5765, %v5766
        %v5768 = vsub.f32 1.0, %v5767
        %v5769 = vmul.f32 %v5766, %v5768
        %v5770 = vadd.f32 %v5766, %v5769
        %vm5771 = vweird.f32 %v5765
        %vm5772 = vweird.f32 %v5766
        %vm5773 = vmor %vm5771, %vm5772
        %v5774 = vsel %vm5773, %v5766, %v5770
        %v5775 = vand.u32 2147483647, %v5765
        %vm5776 = vcmp.eq.f32.partialorder %v5775, 8.507059e+37
        %v5777 = vand.u32 %v5765, 2147483648
        %v5778 = vor.u32 1.1754944e-38, %v5777
        %v5779 = vsel %vm5776, %v5778, %v5774
        %v5780 = vmul.f32 %v5755, %v5779
        %v5781 = vmin.f32 %v5780, 1.0
        %v5782 = vmax.f32 %v5781, -1.0
        %v5783 = vmul.f32 %v5448, %v5448
        %v5784 = vmin.f32 16.0, %v5783
        %v5785 = vmul.f32 %v5784, 2.1237322e-06
        %v5786 = vadd.f32 %v5785, 0.00028619796
        %v5787 = vmul.f32 %v5784, %v5786
        %v5788 = vadd.f32 %v5787, 0.0036580483
        %v5789 = vmul.f32 %v5784, %v5788
        %v5790 = vadd.f32 %v5789, 0.05243302
        %v5791 = vmul.f32 %v5784, %v5790
        %v5792 = vadd.f32 %v5791, 0.18741608
        %v5793 = vmul.f32 %v5784, %v5792
        %v5794 = vadd.f32 %v5793, 1.1283791
        %v5795 = vmul.f32 %v5448, %v5794
        %v5796 = vmul.f32 %v5784, 3.8918573e-05
        %v5797 = vadd.f32 %v5796, 0.001143296
        %v5798 = vmul.f32 %v5784, %v5797
        %v5799 = vadd.f32 %v5798, 0.014752088
        %v5800 = vmul.f32 %v5784, %v5799
        %v5801 = vadd.f32 %v5800, 0.112945676
        %v5802 = vmul.f32 %v5784, %v5801
        %v5803 = vadd.f32 %v5802, 0.4994258
        %v5804 = vmul.f32 %v5784, %v5803
        %v5805 = vadd.f32 %v5804, 1.0
        %v5806 = vrcp.pop %v5805
        %v5807 = vmul.f32 %v5805, %v5806
        %v5808 = vsub.f32 1.0, %v5807
        %v5809 = vmul.f32 %v5806, %v5808
        %v5810 = vadd.f32 %v5806, %v5809
        %vm5811 = vweird.f32 %v5805
        %vm5812 = vweird.f32 %v5806
        %vm5813 = vmor %vm5811, %vm5812
        %v5814 = vsel %vm5813, %v5806, %v5810
        %v5815 = vand.u32 2147483647, %v5805
        %vm5816 = vcmp.eq.f32.partialorder %v5815, 8.507059e+37
        %v5817 = vand.u32 %v5805, 2147483648
        %v5818 = vor.u32 1.1754944e-38, %v5817
        %v5819 = vsel %vm5816, %v5818, %v5814
        %v5820 = vmul.f32 %v5795, %v5819
        %v5821 = vmin.f32 %v5820, 1.0
        %v5822 = vmax.f32 %v5821, -1.0
        %v5823 = vmul.f32 %v5449, %v5449
        %v5824 = vmin.f32 16.0, %v5823
        %v5825 = vmul.f32 %v5824, 2.1237322e-06
        %v5826 = vadd.f32 %v5825, 0.00028619796
        %v5827 = vmul.f32 %v5824, %v5826
        %v5828 = vadd.f32 %v5827, 0.0036580483
        %v5829 = vmul.f32 %v5824, %v5828
        %v5830 = vadd.f32 %v5829, 0.05243302
        %v5831 = vmul.f32 %v5824, %v5830
        %v5832 = vadd.f32 %v5831, 0.18741608
        %v5833 = vmul.f32 %v5824, %v5832
        %v5834 = vadd.f32 %v5833, 1.1283791
        %v5835 = vmul.f32 %v5449, %v5834
        %v5836 = vmul.f32 %v5824, 3.8918573e-05
        %v5837 = vadd.f32 %v5836, 0.001143296
        %v5838 = vmul.f32 %v5824, %v5837
        %v5839 = vadd.f32 %v5838, 0.014752088
        %v5840 = vmul.f32 %v5824, %v5839
        %v5841 = vadd.f32 %v5840, 0.112945676
        %v5842 = vmul.f32 %v5824, %v5841
        %v5843 = vadd.f32 %v5842, 0.4994258
        %v5844 = vmul.f32 %v5824, %v5843
        %v5845 = vadd.f32 %v5844, 1.0
        %v5846 = vrcp.pop %v5845
        %v5847 = vmul.f32 %v5845, %v5846
        %v5848 = vsub.f32 1.0, %v5847
        %v5849 = vmul.f32 %v5846, %v5848
        %v5850 = vadd.f32 %v5846, %v5849
        %vm5851 = vweird.f32 %v5845
        %vm5852 = vweird.f32 %v5846
        %vm5853 = vmor %vm5851, %vm5852
        %v5854 = vsel %vm5853, %v5846, %v5850
        %v5855 = vand.u32 2147483647, %v5845
        %vm5856 = vcmp.eq.f32.partialorder %v5855, 8.507059e+37
        %v5857 = vand.u32 %v5845, 2147483648
        %v5858 = vor.u32 1.1754944e-38, %v5857
        %v5859 = vsel %vm5856, %v5858, %v5854
        %v5860 = vmul.f32 %v5835, %v5859
        %v5861 = vmin.f32 %v5860, 1.0
        %v5862 = vmax.f32 %v5861, -1.0
        %v5863 = vmul.f32 %v5450, %v5450
        %v5864 = vmin.f32 16.0, %v5863
        %v5865 = vmul.f32 %v5864, 2.1237322e-06
        %v5866 = vadd.f32 %v5865, 0.00028619796
        %v5867 = vmul.f32 %v5864, %v5866
        %v5868 = vadd.f32 %v5867, 0.0036580483
        %v5869 = vmul.f32 %v5864, %v5868
        %v5870 = vadd.f32 %v5869, 0.05243302
        %v5871 = vmul.f32 %v5864, %v5870
        %v5872 = vadd.f32 %v5871, 0.18741608
        %v5873 = vmul.f32 %v5864, %v5872
        %v5874 = vadd.f32 %v5873, 1.1283791
        %v5875 = vmul.f32 %v5450, %v5874
        %v5876 = vmul.f32 %v5864, 3.8918573e-05
        %v5877 = vadd.f32 %v5876, 0.001143296
        %v5878 = vmul.f32 %v5864, %v5877
        %v5879 = vadd.f32 %v5878, 0.014752088
        %v5880 = vmul.f32 %v5864, %v5879
        %v5881 = vadd.f32 %v5880, 0.112945676
        %v5882 = vmul.f32 %v5864, %v5881
        %v5883 = vadd.f32 %v5882, 0.4994258
        %v5884 = vmul.f32 %v5864, %v5883
        %v5885 = vadd.f32 %v5884, 1.0
        %v5886 = vrcp.pop %v5885
        %v5887 = vmul.f32 %v5885, %v5886
        %v5888 = vsub.f32 1.0, %v5887
        %v5889 = vmul.f32 %v5886, %v5888
        %v5890 = vadd.f32 %v5886, %v5889
        %vm5891 = vweird.f32 %v5885
        %vm5892 = vweird.f32 %v5886
        %vm5893 = vmor %vm5891, %vm5892
        %v5894 = vsel %vm5893, %v5886, %v5890
        %v5895 = vand.u32 2147483647, %v5885
        %vm5896 = vcmp.eq.f32.partialorder %v5895, 8.507059e+37
        %v5897 = vand.u32 %v5885, 2147483648
        %v5898 = vor.u32 1.1754944e-38, %v5897
        %v5899 = vsel %vm5896, %v5898, %v5894
        %v5900 = vmul.f32 %v5875, %v5899
        %v5901 = vmin.f32 %v5900, 1.0
        %v5902 = vmax.f32 %v5901, -1.0
        %v5903 = vmul.f32 %v5451, %v5451
        %v5904 = vmin.f32 16.0, %v5903
        %v5905 = vmul.f32 %v5904, 2.1237322e-06
        %v5906 = vadd.f32 %v5905, 0.00028619796
        %v5907 = vmul.f32 %v5904, %v5906
        %v5908 = vadd.f32 %v5907, 0.0036580483
        %v5909 = vmul.f32 %v5904, %v5908
        %v5910 = vadd.f32 %v5909, 0.05243302
        %v5911 = vmul.f32 %v5904, %v5910
        %v5912 = vadd.f32 %v5911, 0.18741608
        %v5913 = vmul.f32 %v5904, %v5912
        %v5914 = vadd.f32 %v5913, 1.1283791
        %v5915 = vmul.f32 %v5451, %v5914
        %v5916 = vmul.f32 %v5904, 3.8918573e-05
        %v5917 = vadd.f32 %v5916, 0.001143296
        %v5918 = vmul.f32 %v5904, %v5917
        %v5919 = vadd.f32 %v5918, 0.014752088
        %v5920 = vmul.f32 %v5904, %v5919
        %v5921 = vadd.f32 %v5920, 0.112945676
        %v5922 = vmul.f32 %v5904, %v5921
        %v5923 = vadd.f32 %v5922, 0.4994258
        %v5924 = vmul.f32 %v5904, %v5923
        %v5925 = vadd.f32 %v5924, 1.0
        %v5926 = vrcp.pop %v5925
        %v5927 = vmul.f32 %v5925, %v5926
        %v5928 = vsub.f32 1.0, %v5927
        %v5929 = vmul.f32 %v5926, %v5928
        %v5930 = vadd.f32 %v5926, %v5929
        %vm5931 = vweird.f32 %v5925
        %vm5932 = vweird.f32 %v5926
        %vm5933 = vmor %vm5931, %vm5932
        %v5934 = vsel %vm5933, %v5926, %v5930
        %v5935 = vand.u32 2147483647, %v5925
        %vm5936 = vcmp.eq.f32.partialorder %v5935, 8.507059e+37
        %v5937 = vand.u32 %v5925, 2147483648
        %v5938 = vor.u32 1.1754944e-38, %v5937
        %v5939 = vsel %vm5936, %v5938, %v5934
        %v5940 = vmul.f32 %v5915, %v5939
        %v5941 = vmin.f32 %v5940, 1.0
        %v5942 = vmax.f32 %v5941, -1.0
        %v5943 = vmul.f32 %v5452, %v5452
        %v5944 = vmin.f32 16.0, %v5943
        %v5945 = vmul.f32 %v5944, 2.1237322e-06
        %v5946 = vadd.f32 %v5945, 0.00028619796
        %v5947 = vmul.f32 %v5944, %v5946
        %v5948 = vadd.f32 %v5947, 0.0036580483
        %v5949 = vmul.f32 %v5944, %v5948
        %v5950 = vadd.f32 %v5949, 0.05243302
        %v5951 = vmul.f32 %v5944, %v5950
        %v5952 = vadd.f32 %v5951, 0.18741608
        %v5953 = vmul.f32 %v5944, %v5952
        %v5954 = vadd.f32 %v5953, 1.1283791
        %v5955 = vmul.f32 %v5452, %v5954
        %v5956 = vmul.f32 %v5944, 3.8918573e-05
        %v5957 = vadd.f32 %v5956, 0.001143296
        %v5958 = vmul.f32 %v5944, %v5957
        %v5959 = vadd.f32 %v5958, 0.014752088
        %v5960 = vmul.f32 %v5944, %v5959
        %v5961 = vadd.f32 %v5960, 0.112945676
        %v5962 = vmul.f32 %v5944, %v5961
        %v5963 = vadd.f32 %v5962, 0.4994258
        %v5964 = vmul.f32 %v5944, %v5963
        %v5965 = vadd.f32 %v5964, 1.0
        %v5966 = vrcp.pop %v5965
        %v5967 = vmul.f32 %v5965, %v5966
        %v5968 = vsub.f32 1.0, %v5967
        %v5969 = vmul.f32 %v5966, %v5968
        %v5970 = vadd.f32 %v5966, %v5969
        %vm5971 = vweird.f32 %v5965
        %vm5972 = vweird.f32 %v5966
        %vm5973 = vmor %vm5971, %vm5972
        %v5974 = vsel %vm5973, %v5966, %v5970
        %v5975 = vand.u32 2147483647, %v5965
        %vm5976 = vcmp.eq.f32.partialorder %v5975, 8.507059e+37
        %v5977 = vand.u32 %v5965, 2147483648
        %v5978 = vor.u32 1.1754944e-38, %v5977
        %v5979 = vsel %vm5976, %v5978, %v5974
        %v5980 = vmul.f32 %v5955, %v5979
        %v5981 = vmin.f32 %v5980, 1.0
        %v5982 = vmax.f32 %v5981, -1.0
        %v5983 = vmul.f32 %v5453, %v5453
        %v5984 = vmin.f32 16.0, %v5983
        %v5985 = vmul.f32 %v5984, 2.1237322e-06
        %v5986 = vadd.f32 %v5985, 0.00028619796
        %v5987 = vmul.f32 %v5984, %v5986
        %v5988 = vadd.f32 %v5987, 0.0036580483
        %v5989 = vmul.f32 %v5984, %v5988
        %v5990 = vadd.f32 %v5989, 0.05243302
        %v5991 = vmul.f32 %v5984, %v5990
        %v5992 = vadd.f32 %v5991, 0.18741608
        %v5993 = vmul.f32 %v5984, %v5992
        %v5994 = vadd.f32 %v5993, 1.1283791
        %v5995 = vmul.f32 %v5453, %v5994
        %v5996 = vmul.f32 %v5984, 3.8918573e-05
        %v5997 = vadd.f32 %v5996, 0.001143296
        %v5998 = vmul.f32 %v5984, %v5997
        %v5999 = vadd.f32 %v5998, 0.014752088
        %v6000 = vmul.f32 %v5984, %v5999
        %v6001 = vadd.f32 %v6000, 0.112945676
        %v6002 = vmul.f32 %v5984, %v6001
        %v6003 = vadd.f32 %v6002, 0.4994258
        %v6004 = vmul.f32 %v5984, %v6003
        %v6005 = vadd.f32 %v6004, 1.0
        %v6006 = vrcp.pop %v6005
        %v6007 = vmul.f32 %v6005, %v6006
        %v6008 = vsub.f32 1.0, %v6007
        %v6009 = vmul.f32 %v6006, %v6008
        %v6010 = vadd.f32 %v6006, %v6009
        %vm6011 = vweird.f32 %v6005
        %vm6012 = vweird.f32 %v6006
        %vm6013 = vmor %vm6011, %vm6012
        %v6014 = vsel %vm6013, %v6006, %v6010
        %v6015 = vand.u32 2147483647, %v6005
        %vm6016 = vcmp.eq.f32.partialorder %v6015, 8.507059e+37
        %v6017 = vand.u32 %v6005, 2147483648
        %v6018 = vor.u32 1.1754944e-38, %v6017
        %v6019 = vsel %vm6016, %v6018, %v6014
        %v6020 = vmul.f32 %v5995, %v6019
        %v6021 = vmin.f32 %v6020, 1.0
        %v6022 = vmax.f32 %v6021, -1.0
        %v6023 = vmul.f32 %v5454, %v5454
        %v6024 = vmin.f32 16.0, %v6023
        %v6025 = vmul.f32 %v6024, 2.1237322e-06
        %v6026 = vadd.f32 %v6025, 0.00028619796
        %v6027 = vmul.f32 %v6024, %v6026
        %v6028 = vadd.f32 %v6027, 0.0036580483
        %v6029 = vmul.f32 %v6024, %v6028
        %v6030 = vadd.f32 %v6029, 0.05243302
        %v6031 = vmul.f32 %v6024, %v6030
        %v6032 = vadd.f32 %v6031, 0.18741608
        %v6033 = vmul.f32 %v6024, %v6032
        %v6034 = vadd.f32 %v6033, 1.1283791
        %v6035 = vmul.f32 %v5454, %v6034
        %v6036 = vmul.f32 %v6024, 3.8918573e-05
        %v6037 = vadd.f32 %v6036, 0.001143296
        %v6038 = vmul.f32 %v6024, %v6037
        %v6039 = vadd.f32 %v6038, 0.014752088
        %v6040 = vmul.f32 %v6024, %v6039
        %v6041 = vadd.f32 %v6040, 0.112945676
        %v6042 = vmul.f32 %v6024, %v6041
        %v6043 = vadd.f32 %v6042, 0.4994258
        %v6044 = vmul.f32 %v6024, %v6043
        %v6045 = vadd.f32 %v6044, 1.0
        %v6046 = vrcp.pop %v6045
        %v6047 = vmul.f32 %v6045, %v6046
        %v6048 = vsub.f32 1.0, %v6047
        %v6049 = vmul.f32 %v6046, %v6048
        %v6050 = vadd.f32 %v6046, %v6049
        %vm6051 = vweird.f32 %v6045
        %vm6052 = vweird.f32 %v6046
        %vm6053 = vmor %vm6051, %vm6052
        %v6054 = vsel %vm6053, %v6046, %v6050
        %v6055 = vand.u32 2147483647, %v6045
        %vm6056 = vcmp.eq.f32.partialorder %v6055, 8.507059e+37
        %v6057 = vand.u32 %v6045, 2147483648
        %v6058 = vor.u32 1.1754944e-38, %v6057
        %v6059 = vsel %vm6056, %v6058, %v6054
        %v6060 = vmul.f32 %v6035, %v6059
        %v6061 = vmin.f32 %v6060, 1.0
        %v6062 = vmax.f32 %v6061, -1.0
        %v6063 = vmul.f32 %v5455, %v5455
        %v6064 = vmin.f32 16.0, %v6063
        %v6065 = vmul.f32 %v6064, 2.1237322e-06
        %v6066 = vadd.f32 %v6065, 0.00028619796
        %v6067 = vmul.f32 %v6064, %v6066
        %v6068 = vadd.f32 %v6067, 0.0036580483
        %v6069 = vmul.f32 %v6064, %v6068
        %v6070 = vadd.f32 %v6069, 0.05243302
        %v6071 = vmul.f32 %v6064, %v6070
        %v6072 = vadd.f32 %v6071, 0.18741608
        %v6073 = vmul.f32 %v6064, %v6072
        %v6074 = vadd.f32 %v6073, 1.1283791
        %v6075 = vmul.f32 %v5455, %v6074
        %v6076 = vmul.f32 %v6064, 3.8918573e-05
        %v6077 = vadd.f32 %v6076, 0.001143296
        %v6078 = vmul.f32 %v6064, %v6077
        %v6079 = vadd.f32 %v6078, 0.014752088
        %v6080 = vmul.f32 %v6064, %v6079
        %v6081 = vadd.f32 %v6080, 0.112945676
        %v6082 = vmul.f32 %v6064, %v6081
        %v6083 = vadd.f32 %v6082, 0.4994258
        %v6084 = vmul.f32 %v6064, %v6083
        %v6085 = vadd.f32 %v6084, 1.0
        %v6086 = vrcp.pop %v6085
        %v6087 = vmul.f32 %v6085, %v6086
        %v6088 = vsub.f32 1.0, %v6087
        %v6089 = vmul.f32 %v6086, %v6088
        %v6090 = vadd.f32 %v6086, %v6089
        %vm6091 = vweird.f32 %v6085
        %vm6092 = vweird.f32 %v6086
        %vm6093 = vmor %vm6091, %vm6092
        %v6094 = vsel %vm6093, %v6086, %v6090
        %v6095 = vand.u32 2147483647, %v6085
        %vm6096 = vcmp.eq.f32.partialorder %v6095, 8.507059e+37
        %v6097 = vand.u32 %v6085, 2147483648
        %v6098 = vor.u32 1.1754944e-38, %v6097
        %v6099 = vsel %vm6096, %v6098, %v6094
        %v6100 = vmul.f32 %v6075, %v6099
        %v6101 = vmin.f32 %v6100, 1.0
        %v6102 = vmax.f32 %v6101, -1.0
        %v6103 = vmul.f32 %v5456, %v5456
        %v6104 = vmin.f32 16.0, %v6103
        %v6105 = vmul.f32 %v6104, 2.1237322e-06
        %v6106 = vadd.f32 %v6105, 0.00028619796
        %v6107 = vmul.f32 %v6104, %v6106
        %v6108 = vadd.f32 %v6107, 0.0036580483
        %v6109 = vmul.f32 %v6104, %v6108
        %v6110 = vadd.f32 %v6109, 0.05243302
        %v6111 = vmul.f32 %v6104, %v6110
        %v6112 = vadd.f32 %v6111, 0.18741608
        %v6113 = vmul.f32 %v6104, %v6112
        %v6114 = vadd.f32 %v6113, 1.1283791
        %v6115 = vmul.f32 %v5456, %v6114
        %v6116 = vmul.f32 %v6104, 3.8918573e-05
        %v6117 = vadd.f32 %v6116, 0.001143296
        %v6118 = vmul.f32 %v6104, %v6117
        %v6119 = vadd.f32 %v6118, 0.014752088
        %v6120 = vmul.f32 %v6104, %v6119
        %v6121 = vadd.f32 %v6120, 0.112945676
        %v6122 = vmul.f32 %v6104, %v6121
        %v6123 = vadd.f32 %v6122, 0.4994258
        %v6124 = vmul.f32 %v6104, %v6123
        %v6125 = vadd.f32 %v6124, 1.0
        %v6126 = vrcp.pop %v6125
        %v6127 = vmul.f32 %v6125, %v6126
        %v6128 = vsub.f32 1.0, %v6127
        %v6129 = vmul.f32 %v6126, %v6128
        %v6130 = vadd.f32 %v6126, %v6129
        %vm6131 = vweird.f32 %v6125
        %vm6132 = vweird.f32 %v6126
        %vm6133 = vmor %vm6131, %vm6132
        %v6134 = vsel %vm6133, %v6126, %v6130
        %v6135 = vand.u32 2147483647, %v6125
        %vm6136 = vcmp.eq.f32.partialorder %v6135, 8.507059e+37
        %v6137 = vand.u32 %v6125, 2147483648
        %v6138 = vor.u32 1.1754944e-38, %v6137
        %v6139 = vsel %vm6136, %v6138, %v6134
        %v6140 = vmul.f32 %v6115, %v6139
        %v6141 = vmin.f32 %v6140, 1.0
        %v6142 = vmax.f32 %v6141, -1.0
        %v6143 = vmul.f32 %v5457, %v5457
        %v6144 = vmin.f32 16.0, %v6143
        %v6145 = vmul.f32 %v6144, 2.1237322e-06
        %v6146 = vadd.f32 %v6145, 0.00028619796
        %v6147 = vmul.f32 %v6144, %v6146
        %v6148 = vadd.f32 %v6147, 0.0036580483
        %v6149 = vmul.f32 %v6144, %v6148
        %v6150 = vadd.f32 %v6149, 0.05243302
        %v6151 = vmul.f32 %v6144, %v6150
        %v6152 = vadd.f32 %v6151, 0.18741608
        %v6153 = vmul.f32 %v6144, %v6152
        %v6154 = vadd.f32 %v6153, 1.1283791
        %v6155 = vmul.f32 %v5457, %v6154
        %v6156 = vmul.f32 %v6144, 3.8918573e-05
        %v6157 = vadd.f32 %v6156, 0.001143296
        %v6158 = vmul.f32 %v6144, %v6157
        %v6159 = vadd.f32 %v6158, 0.014752088
        %v6160 = vmul.f32 %v6144, %v6159
        %v6161 = vadd.f32 %v6160, 0.112945676
        %v6162 = vmul.f32 %v6144, %v6161
        %v6163 = vadd.f32 %v6162, 0.4994258
        %v6164 = vmul.f32 %v6144, %v6163
        %v6165 = vadd.f32 %v6164, 1.0
        %v6166 = vrcp.pop %v6165
        %v6167 = vmul.f32 %v6165, %v6166
        %v6168 = vsub.f32 1.0, %v6167
        %v6169 = vmul.f32 %v6166, %v6168
        %v6170 = vadd.f32 %v6166, %v6169
        %vm6171 = vweird.f32 %v6165
        %vm6172 = vweird.f32 %v6166
        %vm6173 = vmor %vm6171, %vm6172
        %v6174 = vsel %vm6173, %v6166, %v6170
        %v6175 = vand.u32 2147483647, %v6165
        %vm6176 = vcmp.eq.f32.partialorder %v6175, 8.507059e+37
        %v6177 = vand.u32 %v6165, 2147483648
        %v6178 = vor.u32 1.1754944e-38, %v6177
        %v6179 = vsel %vm6176, %v6178, %v6174
        %v6180 = vmul.f32 %v6155, %v6179
        %v6181 = vmin.f32 %v6180, 1.0
        %v6182 = vmax.f32 %v6181, -1.0
        %v6183 = vmul.f32 %v5458, %v5458
        %v6184 = vmin.f32 16.0, %v6183
        %v6185 = vmul.f32 %v6184, 2.1237322e-06
        %v6186 = vadd.f32 %v6185, 0.00028619796
        %v6187 = vmul.f32 %v6184, %v6186
        %v6188 = vadd.f32 %v6187, 0.0036580483
        %v6189 = vmul.f32 %v6184, %v6188
        %v6190 = vadd.f32 %v6189, 0.05243302
        %v6191 = vmul.f32 %v6184, %v6190
        %v6192 = vadd.f32 %v6191, 0.18741608
        %v6193 = vmul.f32 %v6184, %v6192
        %v6194 = vadd.f32 %v6193, 1.1283791
        %v6195 = vmul.f32 %v5458, %v6194
        %v6196 = vmul.f32 %v6184, 3.8918573e-05
        %v6197 = vadd.f32 %v6196, 0.001143296
        %v6198 = vmul.f32 %v6184, %v6197
        %v6199 = vadd.f32 %v6198, 0.014752088
        %v6200 = vmul.f32 %v6184, %v6199
        %v6201 = vadd.f32 %v6200, 0.112945676
        %v6202 = vmul.f32 %v6184, %v6201
        %v6203 = vadd.f32 %v6202, 0.4994258
        %v6204 = vmul.f32 %v6184, %v6203
        %v6205 = vadd.f32 %v6204, 1.0
        %v6206 = vrcp.pop %v6205
        %v6207 = vmul.f32 %v6205, %v6206
        %v6208 = vsub.f32 1.0, %v6207
        %v6209 = vmul.f32 %v6206, %v6208
        %v6210 = vadd.f32 %v6206, %v6209
        %vm6211 = vweird.f32 %v6205
        %vm6212 = vweird.f32 %v6206
        %vm6213 = vmor %vm6211, %vm6212
        %v6214 = vsel %vm6213, %v6206, %v6210
        %v6215 = vand.u32 2147483647, %v6205
        %vm6216 = vcmp.eq.f32.partialorder %v6215, 8.507059e+37
        %v6217 = vand.u32 %v6205, 2147483648
        %v6218 = vor.u32 1.1754944e-38, %v6217
        %v6219 = vsel %vm6216, %v6218, %v6214
        %v6220 = vmul.f32 %v6195, %v6219
        %v6221 = vmin.f32 %v6220, 1.0
        %v6222 = vmax.f32 %v6221, -1.0
        %v6223 = vmul.f32 %v5459, %v5459
        %v6224 = vmin.f32 16.0, %v6223
        %v6225 = vmul.f32 %v6224, 2.1237322e-06
        %v6226 = vadd.f32 %v6225, 0.00028619796
        %v6227 = vmul.f32 %v6224, %v6226
        %v6228 = vadd.f32 %v6227, 0.0036580483
        %v6229 = vmul.f32 %v6224, %v6228
        %v6230 = vadd.f32 %v6229, 0.05243302
        %v6231 = vmul.f32 %v6224, %v6230
        %v6232 = vadd.f32 %v6231, 0.18741608
        %v6233 = vmul.f32 %v6224, %v6232
        %v6234 = vadd.f32 %v6233, 1.1283791
        %v6235 = vmul.f32 %v5459, %v6234
        %v6236 = vmul.f32 %v6224, 3.8918573e-05
        %v6237 = vadd.f32 %v6236, 0.001143296
        %v6238 = vmul.f32 %v6224, %v6237
        %v6239 = vadd.f32 %v6238, 0.014752088
        %v6240 = vmul.f32 %v6224, %v6239
        %v6241 = vadd.f32 %v6240, 0.112945676
        %v6242 = vmul.f32 %v6224, %v6241
        %v6243 = vadd.f32 %v6242, 0.4994258
        %v6244 = vmul.f32 %v6224, %v6243
        %v6245 = vadd.f32 %v6244, 1.0
        %v6246 = vrcp.pop %v6245
        %v6247 = vmul.f32 %v6245, %v6246
        %v6248 = vsub.f32 1.0, %v6247
        %v6249 = vmul.f32 %v6246, %v6248
        %v6250 = vadd.f32 %v6246, %v6249
        %vm6251 = vweird.f32 %v6245
        %vm6252 = vweird.f32 %v6246
        %vm6253 = vmor %vm6251, %vm6252
        %v6254 = vsel %vm6253, %v6246, %v6250
        %v6255 = vand.u32 2147483647, %v6245
        %vm6256 = vcmp.eq.f32.partialorder %v6255, 8.507059e+37
        %v6257 = vand.u32 %v6245, 2147483648
        %v6258 = vor.u32 1.1754944e-38, %v6257
        %v6259 = vsel %vm6256, %v6258, %v6254
        %v6260 = vmul.f32 %v6235, %v6259
        %v6261 = vmin.f32 %v6260, 1.0
        %v6262 = vmax.f32 %v6261, -1.0
        %v6263 = vmul.f32 %v5460, %v5460
        %v6264 = vmin.f32 16.0, %v6263
        %v6265 = vmul.f32 %v6264, 2.1237322e-06
        %v6266 = vadd.f32 %v6265, 0.00028619796
        %v6267 = vmul.f32 %v6264, %v6266
        %v6268 = vadd.f32 %v6267, 0.0036580483
        %v6269 = vmul.f32 %v6264, %v6268
        %v6270 = vadd.f32 %v6269, 0.05243302
        %v6271 = vmul.f32 %v6264, %v6270
        %v6272 = vadd.f32 %v6271, 0.18741608
        %v6273 = vmul.f32 %v6264, %v6272
        %v6274 = vadd.f32 %v6273, 1.1283791
        %v6275 = vmul.f32 %v5460, %v6274
        %v6276 = vmul.f32 %v6264, 3.8918573e-05
        %v6277 = vadd.f32 %v6276, 0.001143296
        %v6278 = vmul.f32 %v6264, %v6277
        %v6279 = vadd.f32 %v6278, 0.014752088
        %v6280 = vmul.f32 %v6264, %v6279
        %v6281 = vadd.f32 %v6280, 0.112945676
        %v6282 = vmul.f32 %v6264, %v6281
        %v6283 = vadd.f32 %v6282, 0.4994258
        %v6284 = vmul.f32 %v6264, %v6283
        %v6285 = vadd.f32 %v6284, 1.0
        %v6286 = vrcp.pop %v6285
        %v6287 = vmul.f32 %v6285, %v6286
        %v6288 = vsub.f32 1.0, %v6287
        %v6289 = vmul.f32 %v6286, %v6288
        %v6290 = vadd.f32 %v6286, %v6289
        %vm6291 = vweird.f32 %v6285
        %vm6292 = vweird.f32 %v6286
        %vm6293 = vmor %vm6291, %vm6292
        %v6294 = vsel %vm6293, %v6286, %v6290
        %v6295 = vand.u32 2147483647, %v6285
        %vm6296 = vcmp.eq.f32.partialorder %v6295, 8.507059e+37
        %v6297 = vand.u32 %v6285, 2147483648
        %v6298 = vor.u32 1.1754944e-38, %v6297
        %v6299 = vsel %vm6296, %v6298, %v6294
        %v6300 = vmul.f32 %v6275, %v6299
        %v6301 = vmin.f32 %v6300, 1.0
        %v6302 = vmax.f32 %v6301, -1.0
        %v6303 = vmul.f32 %v5461, %v5461
        %v6304 = vmin.f32 16.0, %v6303
        %v6305 = vmul.f32 %v6304, 2.1237322e-06
        %v6306 = vadd.f32 %v6305, 0.00028619796
        %v6307 = vmul.f32 %v6304, %v6306
        %v6308 = vadd.f32 %v6307, 0.0036580483
        %v6309 = vmul.f32 %v6304, %v6308
        %v6310 = vadd.f32 %v6309, 0.05243302
        %v6311 = vmul.f32 %v6304, %v6310
        %v6312 = vadd.f32 %v6311, 0.18741608
        %v6313 = vmul.f32 %v6304, %v6312
        %v6314 = vadd.f32 %v6313, 1.1283791
        %v6315 = vmul.f32 %v5461, %v6314
        %v6316 = vmul.f32 %v6304, 3.8918573e-05
        %v6317 = vadd.f32 %v6316, 0.001143296
        %v6318 = vmul.f32 %v6304, %v6317
        %v6319 = vadd.f32 %v6318, 0.014752088
        %v6320 = vmul.f32 %v6304, %v6319
        %v6321 = vadd.f32 %v6320, 0.112945676
        %v6322 = vmul.f32 %v6304, %v6321
        %v6323 = vadd.f32 %v6322, 0.4994258
        %v6324 = vmul.f32 %v6304, %v6323
        %v6325 = vadd.f32 %v6324, 1.0
        %v6326 = vrcp.pop %v6325
        %v6327 = vmul.f32 %v6325, %v6326
        %v6328 = vsub.f32 1.0, %v6327
        %v6329 = vmul.f32 %v6326, %v6328
        %v6330 = vadd.f32 %v6326, %v6329
        %vm6331 = vweird.f32 %v6325
        %vm6332 = vweird.f32 %v6326
        %vm6333 = vmor %vm6331, %vm6332
        %v6334 = vsel %vm6333, %v6326, %v6330
        %v6335 = vand.u32 2147483647, %v6325
        %vm6336 = vcmp.eq.f32.partialorder %v6335, 8.507059e+37
        %v6337 = vand.u32 %v6325, 2147483648
        %v6338 = vor.u32 1.1754944e-38, %v6337
        %v6339 = vsel %vm6336, %v6338, %v6334
        %v6340 = vmul.f32 %v6315, %v6339
        %v6341 = vmin.f32 %v6340, 1.0
        %v6342 = vmax.f32 %v6341, -1.0
        %v6343 = vmul.f32 %v5462, %v5462
        %v6344 = vmin.f32 16.0, %v6343
        %v6345 = vmul.f32 %v6344, 2.1237322e-06
        %v6346 = vadd.f32 %v6345, 0.00028619796
        %v6347 = vmul.f32 %v6344, %v6346
        %v6348 = vadd.f32 %v6347, 0.0036580483
        %v6349 = vmul.f32 %v6344, %v6348
        %v6350 = vadd.f32 %v6349, 0.05243302
        %v6351 = vmul.f32 %v6344, %v6350
        %v6352 = vadd.f32 %v6351, 0.18741608
        %v6353 = vmul.f32 %v6344, %v6352
        %v6354 = vadd.f32 %v6353, 1.1283791
        %v6355 = vmul.f32 %v5462, %v6354
        %v6356 = vmul.f32 %v6344, 3.8918573e-05
        %v6357 = vadd.f32 %v6356, 0.001143296
        %v6358 = vmul.f32 %v6344, %v6357
        %v6359 = vadd.f32 %v6358, 0.014752088
        %v6360 = vmul.f32 %v6344, %v6359
        %v6361 = vadd.f32 %v6360, 0.112945676
        %v6362 = vmul.f32 %v6344, %v6361
        %v6363 = vadd.f32 %v6362, 0.4994258
        %v6364 = vmul.f32 %v6344, %v6363
        %v6365 = vadd.f32 %v6364, 1.0
        %v6366 = vrcp.pop %v6365
        %v6367 = vmul.f32 %v6365, %v6366
        %v6368 = vsub.f32 1.0, %v6367
        %v6369 = vmul.f32 %v6366, %v6368
        %v6370 = vadd.f32 %v6366, %v6369
        %vm6371 = vweird.f32 %v6365
        %vm6372 = vweird.f32 %v6366
        %vm6373 = vmor %vm6371, %vm6372
        %v6374 = vsel %vm6373, %v6366, %v6370
        %v6375 = vand.u32 2147483647, %v6365
        %vm6376 = vcmp.eq.f32.partialorder %v6375, 8.507059e+37
        %v6377 = vand.u32 %v6365, 2147483648
        %v6378 = vor.u32 1.1754944e-38, %v6377
        %v6379 = vsel %vm6376, %v6378, %v6374
        %v6380 = vmul.f32 %v6355, %v6379
        %v6381 = vmin.f32 %v6380, 1.0
        %v6382 = vmax.f32 %v6381, -1.0
        %v6383 = vadd.f32 %v5502, 1.0
        %v6384 = vadd.f32 %v5542, 1.0
        %v6385 = vadd.f32 %v5582, 1.0
        %v6386 = vadd.f32 %v5622, 1.0
        %v6387 = vadd.f32 %v5662, 1.0
        %v6388 = vadd.f32 %v5702, 1.0
        %v6389 = vadd.f32 %v5742, 1.0
        %v6390 = vadd.f32 %v5782, 1.0
        %v6391 = vadd.f32 %v5822, 1.0
        %v6392 = vadd.f32 %v5862, 1.0
        %v6393 = vadd.f32 %v5902, 1.0
        %v6394 = vadd.f32 %v5942, 1.0
        %v6395 = vadd.f32 %v5982, 1.0
        %v6396 = vadd.f32 %v6022, 1.0
        %v6397 = vadd.f32 %v6062, 1.0
        %v6398 = vadd.f32 %v6102, 1.0
        %v6399 = vadd.f32 %v6142, 1.0
        %v6400 = vadd.f32 %v6182, 1.0
        %v6401 = vadd.f32 %v6222, 1.0
        %v6402 = vadd.f32 %v6262, 1.0
        %v6403 = vadd.f32 %v6302, 1.0
        %v6404 = vadd.f32 %v6342, 1.0
        %v6405 = vadd.f32 %v6382, 1.0
        %v6406 = vmul.f32 %v5417, %v6383
        %v6407 = vmul.f32 %v5418, %v6384
        %v6408 = vmul.f32 %v5419, %v6385
        %v6409 = vmul.f32 %v5420, %v6386
        %v6410 = vmul.f32 %v5421, %v6387
        %v6411 = vmul.f32 %v5422, %v6388
        %v6412 = vmul.f32 %v5423, %v6389
        %v6413 = vmul.f32 %v5424, %v6390
        %v6414 = vmul.f32 %v5425, %v6391
        %v6415 = vmul.f32 %v5426, %v6392
        %v6416 = vmul.f32 %v5427, %v6393
        %v6417 = vmul.f32 %v5428, %v6394
        %v6418 = vmul.f32 %v5429, %v6395
        %v6419 = vmul.f32 %v5430, %v6396
        %v6420 = vmul.f32 %v5431, %v6397
        %v6421 = vmul.f32 %v5432, %v6398
        %v6422 = vmul.f32 %v5433, %v6399
        %v6423 = vmul.f32 %v5434, %v6400
        %v6424 = vmul.f32 %v5435, %v6401
        %v6425 = vmul.f32 %v5436, %v6402
        %v6426 = vmul.f32 %v5437, %v6403
        %v6427 = vmul.f32 %v5438, %v6404
        %v6428 = vmul.f32 %v5439, %v6405
        %v6429 = vld [vmem:[%s5] sm:$0xff]
        %v6430 = vld [vmem:[%s5 + $0x8] sm:$0xff]
        %v6431 = vld [vmem:[%s5 + $0x10] sm:$0xff]
        %v6432 = vld [vmem:[%s5 + $0x18] sm:$0xff]
        %v6433 = vld [vmem:[%s5 + $0x20] sm:$0xff]
        %v6434 = vld [vmem:[%s5 + $0x28] sm:$0xff]
        %v6435 = vld [vmem:[%s5 + $0x30] sm:$0xff]
        %v6436 = vld [vmem:[%s5 + $0x38] sm:$0xff]
        %v6437 = vld [vmem:[%s5 + $0x40] sm:$0xff]
        %v6438 = vld [vmem:[%s5 + $0x48] sm:$0xff]
        %v6439 = vld [vmem:[%s5 + $0x50] sm:$0xff]
        %v6440 = vld [vmem:[%s5 + $0x58] sm:$0xff]
        %v6441 = vld [vmem:[%s5 + $0x60] sm:$0xff]
        %v6442 = vld [vmem:[%s5 + $0x68] sm:$0xff]
        %v6443 = vld [vmem:[%s5 + $0x70] sm:$0xff]
        %v6444 = vld [vmem:[%s5 + $0x78] sm:$0xff]
        %v6445 = vld [vmem:[%s5 + $0x80] sm:$0xff]
        %v6446 = vld [vmem:[%s5 + $0x88] sm:$0xff]
        %v6447 = vld [vmem:[%s5 + $0x90] sm:$0xff]
        %v6448 = vld [vmem:[%s5 + $0x98] sm:$0xff]
        %v6449 = vld [vmem:[%s5 + $0xa0] sm:$0xff]
        %v6450 = vld [vmem:[%s5 + $0xa8] sm:$0xff]
        %v6451 = vld [vmem:[%s5 + $0xb0] sm:$0xf]
        %v6452 = vld [vmem:[#allocation2] sm:$0x1]
        %6454 = vset.pattern.permute.xlu0 0
        %6455 = vperm.xlu0 %6454, %v6452
        %v6456 = vpop.permute.xlu0 %6455
        %v6458 = vperm.slane %v6456, 0
        %6459 = vxpose.xlu0.b32.start [1/16] %v6429, 128
        %6460 = vxpose.xlu0.b32.cont [2/16] %v6430, 128
        %6461 = vxpose.xlu0.b32.cont [3/16] %v6431, 128
        %6462 = vxpose.xlu0.b32.cont [4/16] %v6432, 128
        %6463 = vxpose.xlu0.b32.cont [5/16] %v6433, 128
        %6464 = vxpose.xlu0.b32.cont [6/16] %v6434, 128
        %6465 = vxpose.xlu0.b32.cont [7/16] %v6435, 128
        %6466 = vxpose.xlu0.b32.cont [8/16] %v6436, 128
        %6467 = vxpose.xlu0.b32.cont [9/16] %v6437, 128
        %6468 = vxpose.xlu0.b32.cont [10/16] %v6438, 128
        %6469 = vxpose.xlu0.b32.cont [11/16] %v6439, 128
        %6470 = vxpose.xlu0.b32.cont [12/16] %v6440, 128
        %6471 = vxpose.xlu0.b32.cont [13/16] %v6441, 128
        %6472 = vxpose.xlu0.b32.cont [14/16] %v6442, 128
        %6473 = vxpose.xlu0.b32.cont [15/16] %v6443, 128
        %6474 = vxpose.xlu0.b32.end [16/16] %v6444, 128
        %v6475 = vpop.trf.xlu0
        %v6476 = vpop.trf.xlu0
        %v6477 = vpop.trf.xlu0
        %v6478 = vpop.trf.xlu0
        %v6479 = vpop.trf.xlu0
        %v6480 = vpop.trf.xlu0
        %v6481 = vpop.trf.xlu0
        %v6482 = vpop.trf.xlu0
        %v6483 = vpop.trf.xlu0
        %v6484 = vpop.trf.xlu0
        %v6485 = vpop.trf.xlu0
        %v6486 = vpop.trf.xlu0
        %v6487 = vpop.trf.xlu0
        %v6488 = vpop.trf.xlu0
        %v6489 = vpop.trf.xlu0
        %v6490 = vpop.trf.xlu0
        %6491 = vxpose.xlu0.b32.start [1/16] %v6445, 128
        %6492 = vxpose.xlu0.b32.cont [2/16] %v6446, 128
        %6493 = vxpose.xlu0.b32.cont [3/16] %v6447, 128
        %6494 = vxpose.xlu0.b32.cont [4/16] %v6448, 128
        %6495 = vxpose.xlu0.b32.cont [5/16] %v6449, 128
        %6496 = vxpose.xlu0.b32.cont [6/16] %v6450, 128
        %6497 = vxpose.xlu0.b32.cont [7/16] %v6451, 128
        %6498 = vxpose.xlu0.b32.cont [8/16] 0.0, 128
        %6499 = vxpose.xlu0.b32.cont [9/16] 0.0, 128
        %6500 = vxpose.xlu0.b32.cont [10/16] 0.0, 128
        %6501 = vxpose.xlu0.b32.cont [11/16] 0.0, 128
        %6502 = vxpose.xlu0.b32.cont [12/16] 0.0, 128
        %6503 = vxpose.xlu0.b32.cont [13/16] 0.0, 128
        %6504 = vxpose.xlu0.b32.cont [14/16] 0.0, 128
        %6505 = vxpose.xlu0.b32.cont [15/16] 0.0, 128
        %6506 = vxpose.xlu0.b32.end [16/16] 0.0, 128
        %v6507 = vpop.trf.xlu0
        %v6508 = vpop.trf.xlu0
        %v6509 = vpop.trf.xlu0
        %v6510 = vpop.trf.xlu0
        %v6511 = vpop.trf.xlu0
        %v6512 = vpop.trf.xlu0
        %v6513 = vpop.trf.xlu0
        %v6514 = vpop.trf.xlu0
        %v6515 = vpop.trf.xlu0
        %v6516 = vpop.trf.xlu0
        %v6517 = vpop.trf.xlu0
        %v6518 = vpop.trf.xlu0
        %v6519 = vpop.trf.xlu0
        %v6520 = vpop.trf.xlu0
        %v6521 = vpop.trf.xlu0
        %v6522 = vpop.trf.xlu0
        %v6524 = vsel %vm845, %v6507, 0
        %v6527 = vsel %vm915, %v6428, 0
        %6529 = vmatpush.msra.mxu0 %v6421
        %6530 = vmatpush.msra.mxu0 %v6420
        %6531 = vmatpush.msra.mxu0 %v6419
        %6532 = vmatpush.msra.mxu0 %v6418
        %6533 = vmatpush.msra.mxu0 %v6417
        %6534 = vmatpush.msra.mxu0 %v6416
        %6535 = vmatpush.msra.mxu0 %v6415
        %6536 = vmatpush.msra.mxu0 %v6414
        %6537 = vmatpush.msra.mxu0 %v6413
        %6538 = vmatpush.msra.mxu0 %v6412
        %6539 = vmatpush.msra.mxu0 %v6411
        %6540 = vmatpush.msra.mxu0 %v6410
        %6541 = vmatpush.msra.mxu0 %v6409
        %6542 = vmatpush.msra.mxu0 %v6408
        %6543 = vmatpush.msra.mxu0 %v6407
        %6544 = vmatpush.msra.mxu0 %v6406
        %6545 = vmatmul.f32.gmra.mxu0 %v6475
        %v6546 = vpop.f32.mrf.mxu0
        %v6547 = vadd.f32 %v6458, %v6546
        %6548 = vdwg.mxu0
        %6549 = vmatpush.msra.mxu0 0.0
        %6550 = vmatpush.msra.mxu0 0.0
        %6551 = vmatpush.msra.mxu0 0.0
        %6552 = vmatpush.msra.mxu0 0.0
        %6553 = vmatpush.msra.mxu0 0.0
        %6554 = vmatpush.msra.mxu0 0.0
        %6555 = vmatpush.msra.mxu0 0.0
        %6556 = vmatpush.msra.mxu0 0.0
        %6557 = vmatpush.msra.mxu0 0.0
        %6558 = vmatpush.msra.mxu0 %v6527
        %6559 = vmatpush.msra.mxu0 %v6427
        %6560 = vmatpush.msra.mxu0 %v6426
        %6561 = vmatpush.msra.mxu0 %v6425
        %6562 = vmatpush.msra.mxu0 %v6424
        %6563 = vmatpush.msra.mxu0 %v6423
        %6564 = vmatpush.msra.mxu0 %v6422
        %6565 = vmatmul.f32.gmra.mxu0 %v6524
        %v6566 = vpop.f32.mrf.mxu0
        %v6567 = vadd.f32 %v6547, %v6566
        %6568 = vdwg.mxu0
        %6569 = vst [vmem:[%s273] sm:$0x1] %v6567
        %s6570 = sand.u32 %s183, 1
        %s6571 = scalar_lea.sflag [#allocation4], %s6570
        %s6572 = sand.u32 %s183, 1
        %s6573 = scalar_lea.vmem [#allocation3], %s6572
        // Predicated region
        $region49: #{tpu_custom_call.1} parent=47 // pred_check
          %p6574 = pneg %p193
        $region50: #{tpu_custom_call.1} parent=47 // pred_check_branch
          %6576 = sbr.rel (%p6574) target = $region52
        $region51: #{tpu_custom_call.1} parent=47 // pred_region
          %6578 = vsyncadd %s6571, 0
          %s6579 = scalar_lea.hbm %s7, %s23
          %s6581 = sshll.u32 %s6573, 4
          %s6582 = int_to_ptr.vmem [resolvable:$true] %s6581
          %s6583 = sshll.u32 %s6579, 4
          %s6584 = int_to_ptr.hbm [resolvable:$true] %s6583
          %6586 = dma.vmem_to_hbm [thread:$0]  %s6582, 16, %s6584, %s6571
        $region52: #{tpu_custom_call.1} parent=47 // pred_fallthru
          _
      $region48: #{tpu_custom_call.1} parent=5 // pred_fallthru
        _
      %p6587 = scmp.le.s32.totalorder 2, %s18
      // Predicated region
      $region53: #{tpu_custom_call.1} parent=5 // pred_check
        %p6588 = pneg %p6587
      $region54: #{tpu_custom_call.1} parent=5 // pred_check_branch
        %6590 = sbr.rel (%p6588) target = $region56
      $region55: #{tpu_custom_call.1} parent=5 // pred_region
        %s6591 = ssub.s32 %s18, 2
        // Predicated region
        $region57: #{tpu_custom_call.1} parent=55 // pred_check
          %p6592 = pneg %p199
        $region58: #{tpu_custom_call.1} parent=55 // pred_check_branch
          %6594 = sbr.rel (%p6592) target = $region60
        $region59: #{tpu_custom_call.1} parent=55 // pred_region
          %s6595 = sand.u32 %s184, 1
          %s6596 = scalar_lea.sflag [#allocation4], %s6595
          %s6597 = sand.u32 %s184, 1
          %s6598 = scalar_lea.vmem [#allocation3], %s6597
          %6600 = dma.done %s6596, 16
        $region60: #{tpu_custom_call.1} parent=55 // pred_fallthru
          _
      $region56: #{tpu_custom_call.1} parent=5 // pred_fallthru
        _
    $region6: #{tpu_custom_call.1} parent=1 // loop_footer
      %s22 = sadd.s32 1, %s18
    $region7: #{tpu_custom_call.1} parent=1 // loop_footer_branch
      %17 = sbr.rel target = $region3
    $region8: #{tpu_custom_call.1} parent=1 // loop_exit
      _
    %6601 = vsyncpa [#allocation4], 1
    %s6602 = scalar_lea.sflag [#allocation4], 1
    %6603 = vsyncpa %s6602, 1

</llo_original>
